<compile_context>
chip_gen: v7x
topology: tpu7x:2x2x1
jax: 0.10.0
libtpu: 0.0.40
codegen_flags: <defaults>
</compile_context>

<pallas_src>
import numpy as np

import jax
import jax.numpy as jnp
from jax.experimental import pallas as pl
from jax.experimental.pallas import tpu as pltpu


# ----------------------------------------------------------------------------
# Static geometry (small demo sizes; codec channel widths are synthetic).
# ----------------------------------------------------------------------------
H = W = 16                 # spatial size
HP, WP = H + 2, W + 2      # zero-padded spatial extent (1-pixel halo)
NOUT = H * WP              # 288: wide-row output grid (16 rows x 18 cols, 2 junk cols/row)
NPAD = 384                 # per-image lane block (multiple of 128, >= HP*WP = 324)
LANE_TAIL = 128            # zero guard lanes after the last image (max tap over-read = 38)
CMAX = 8                   # channel slot width (max of cin / hidden / latent)
NTAPS = 9
KDIM = NTAPS * CMAX        # 72: packed im2col contraction dim

NLAYERS = 4
LAYER_RELU = (True, False, True, False)    # enc1, enc2, dec1, dec2
LAYER_ROUND = (False, True, False, False)  # hard quantization fused after enc2

# 1.0 at real pixel lanes (q = y*WP + x, y < H, x < W) of one image block,
# 0.0 at junk columns (x >= W), the bottom rows (q >= NOUT) and the pad tail.
_Q = np.arange(NPAD)
_IMG_MASK = ((_Q < NOUT) & ((_Q % WP) < W)).astype(np.float32)


# ----------------------------------------------------------------------------
# Fused forward kernel: one grid step == one lane-batched block of B images.
# ----------------------------------------------------------------------------
def _codec_fwd_kernel(x_ref, w_ref, b_ref, m_ref, o_ref, pad_ref, col_ref):
    """x_ref  : (CMAX, L)             zero/channel-padded input block, L = B*NPAD
       w_ref  : (NLAYERS, CMAX, KDIM) packed weights, [l, co, tap*CMAX + ci]
       b_ref  : (NLAYERS, CMAX, 1)    packed biases
       m_ref  : (1, L)                1.0 at real pixel lanes, 0.0 at junk/halo lanes
       o_ref  : (CMAX, L)             lane-dense output block
       pad_ref: VMEM (CMAX, L+128)    padded activation buffer (per-image halos stay 0)
       col_ref: VMEM (KDIM, L)        packed im2col matrix, rebuilt per layer
    """
    lanes = x_ref.shape[1]                               # L = B * NPAD (static)

    # Full-tile unmasked load of the pre-padded batch block; only the small
    # halo-guard tail needs zeroing (the last image's junk taps read into it).
    pad_ref[:, 0:lanes] = x_ref[...]
    pad_ref[:, lanes:] = jnp.zeros((CMAX, LANE_TAIL), jnp.float32)

    mask = m_ref[...]                                    # hoisted once, reused by all handoffs
    acc = None
    for l in range(NLAYERS):
        # im2col: nine lane-shifted windows of the flat padded buffer.  Output
        # position p of image b reads padded lane b*NPAD + p + dy*WP + dx, and
        # both layouts use the same per-image stride NPAD, so each tap is ONE
        # contiguous (CMAX, L) copy covering the whole batch block (junk lanes
        # pick up neighbouring-image data but are masked before any reuse).
        # NOTE: dx=1,2 windows could be derived from the dy row with pltpu.roll
        # to cut misaligned loads 3x; plain slices kept for lowering robustness.
        for dy in range(3):
            for dx in range(3):
                t = dy * 3 + dx
                off = dy * WP + dx
                col_ref[t * CMAX:(t + 1) * CMAX, :] = pad_ref[:, off:off + lanes]

        # One MXU matmul per conv layer, lane-dense (CMAX, L) accumulator.
        acc = jnp.dot(w_ref[l], col_ref[...], preferred_element_type=jnp.float32)
        acc = acc + b_ref[l]
        if LAYER_RELU[l]:
            acc = jnp.maximum(acc, 0.0)
        if LAYER_ROUND[l]:
            acc = jnp.round(acc)                         # quantization fused into enc2 epilogue

        if l + 1 < NLAYERS:
            # Hand the activation back to the padded layout for the next layer:
            # pixel (y, x) of image b lands at padded lane b*NPAD + (y+1)*WP +
            # (x+1) == its acc lane + (WP + 1), uniformly for every image, so
            # the handoff is also ONE lane-shifted copy.  Masking zeroes junk
            # columns / rows so they land as the (own or next image's) zero halo.
            pad_ref[:, WP + 1:WP + 1 + lanes] = acc * mask

    o_ref[...] = acc.astype(o_ref.dtype)


# ----------------------------------------------------------------------------
# Host-side parameter packing (one-time; hoisted out of the per-call path).
# ----------------------------------------------------------------------------
def _pack_weight(w):
    """(3, 3, cin, cout) -> (CMAX, KDIM) with [co, tap*CMAX + ci] = w[dy, dx, ci, co].
    Unused channel slots are zero-padded (keeps junk channel rows exactly 0)."""
    _, _, cin, cout = w.shape
    wt = jnp.transpose(w, (3, 0, 1, 2)).reshape(cout, NTAPS, cin)
    wt = jnp.pad(wt, ((0, CMAX - cout), (0, 0), (0, CMAX - cin)))
    return wt.reshape(CMAX, KDIM)


def _pack_bias(b):
    return jnp.pad(b, (0, CMAX - b.shape[0])).reshape(CMAX, 1)


def pack_codec_params(params):
    """One-time packing of the codec weights into MXU-friendly slabs."""
    w_all = jnp.stack([_pack_weight(params["enc1_w"]), _pack_weight(params["enc2_w"]),
                       _pack_weight(params["dec1_w"]), _pack_weight(params["dec2_w"])])
    b_all = jnp.stack([_pack_bias(params["enc1_b"]), _pack_bias(params["enc2_b"]),
                       _pack_bias(params["dec1_b"]), _pack_bias(params["dec2_b"])])
    return w_all, b_all          # (4, CMAX, KDIM), (4, CMAX, 1)


def _choose_images_per_step(n, max_images=32):
    """Batch several images per grid step (amortizes per-step overhead, reuses
    the pushed MXU weights across B*NPAD lanes) while keeping >= 2 grid steps
    when possible so both v7x TensorCores get work.  B=32 keeps in-kernel VMEM
    well under the default scoped limit on every chip (~5.5 MiB total)."""
    if n <= 1:
        return 1
    return max(1, min(max_images, n // 2))


def compressor_predict(w_all, b_all, x_nchw, images_per_step=None):
    """Equivalent of CompressorModel.forward(x) == codec.predict(x). NCHW in/out.
    `w_all`, `b_all` come from pack_codec_params (hoisted one-time packing)."""
    n, cin, h, w = x_nchw.shape
    assert (h, w) == (H, W) and cin <= CMAX

    B = images_per_step or _choose_images_per_step(n)
    G = -(-n // B)               # grid steps
    n_pad = G * B
    L = B * NPAD                 # lanes per grid step (multiple of 128)

    # Channel-pad to CMAX, batch-pad to G*B, add the 1-pixel spatial halo,
    # flatten each image to one NPAD lane block, then fold B images per grid
    # step onto the lane axis: block[g, c, b*NPAD + q] = image[g*B + b, c, q].
    xp = jnp.pad(x_nchw, ((0, n_pad - n), (0, CMAX - cin), (1, 1), (1, 1)))
    xf = jnp.pad(xp.reshape(n_pad, CMAX, HP * WP),
                 ((0, 0), (0, 0), (0, NPAD - HP * WP)))
    xf = xf.reshape(G, B, CMAX, NPAD).transpose(0, 2, 1, 3).reshape(G, CMAX, L)

    # Compile-time constant mask for the whole batch block.
    mask = jnp.asarray(np.tile(_IMG_MASK, B).reshape(1, L))

    flops = 2 * L * KDIM * CMAX * NLAYERS * G
    bytes_accessed = 4 * (xf.size + w_all.size + b_all.size + mask.size + G * CMAX * L)

    out = pl.pallas_call(
        _codec_fwd_kernel,
        out_shape=jax.ShapeDtypeStruct((G, CMAX, L), x_nchw.dtype),
        grid=(G,),
        in_specs=[
            pl.BlockSpec((None, CMAX, L), lambda i: (i, 0, 0)),
            pl.BlockSpec((NLAYERS, CMAX, KDIM), lambda i: (0, 0, 0)),
            pl.BlockSpec((NLAYERS, CMAX, 1), lambda i: (0, 0, 0)),
            pl.BlockSpec((1, L), lambda i: (0, 0)),
        ],
        out_specs=pl.BlockSpec((None, CMAX, L), lambda i: (i, 0, 0)),
        scratch_shapes=[
            pltpu.VMEM((CMAX, L + LANE_TAIL), jnp.float32),  # padded activation buffer
            pltpu.VMEM((KDIM, L), jnp.float32),              # packed im2col matrix
        ],
        compiler_params=pltpu.CompilerParams(dimension_semantics=("parallel",)),
        cost_estimate=pl.CostEstimate(flops=flops, transcendentals=0,
                                      bytes_accessed=bytes_accessed),
    )(xf, w_all, b_all, mask)

    # Unfold the lane batch, drop padded channel slots and junk columns (NCHW out).
    out = out.reshape(G, CMAX, B, NPAD).transpose(0, 2, 1, 3).reshape(n_pad, CMAX, NPAD)
    out = out[:n, :cin, :NOUT].reshape(n, cin, H, WP)[..., :W]
    return out


# ----------------------------------------------------------------------------
# Parameter init (deterministic, He-style scaling).
# ----------------------------------------------------------------------------
def init_params(key, cin=4, hidden=8, latent=8):
    def conv_init(k, ci, co):
        fan_in = 9 * ci
        w = jax.random.normal(k, (3, 3, ci, co), jnp.float32) * (2.0 / fan_in) ** 0.5
        b = jnp.zeros((co,), jnp.float32)
        return w, b

    k1, k2, k3, k4 = jax.random.split(key, 4)
    e1w, e1b = conv_init(k1, cin, hidden)
    e2w, e2b = conv_init(k2, hidden, latent)
    d1w, d1b = conv_init(k3, latent, hidden)
    d2w, d2b = conv_init(k4, hidden, cin)
    return {
        "enc1_w": e1w, "enc1_b": e1b,
        "enc2_w": e2w, "enc2_b": e2b,
        "dec1_w": d1w, "dec1_b": d1b,
        "dec2_w": d2w, "dec2_b": d2b,
    }


if __name__ == "__main__":
    key = jax.random.PRNGKey(0)
    pkey, xkey = jax.random.split(key)

    params = init_params(pkey)
    w_all, b_all = pack_codec_params(params)          # hoisted one-time packing

    # Small NCHW input (PyTorch convention): batch=8, C=4, 16x16.
    # -> 4 images folded per grid step, 2 grid steps (keeps both v7x cores busy).
    x = jax.random.normal(xkey, (8, 4, 16, 16), jnp.float32)

    predict = jax.jit(compressor_predict)
    out = jax.block_until_ready(predict(w_all, b_all, x))

    assert out.shape == (8, 4, 16, 16), out.shape
    assert out.dtype == jnp.float32
    assert bool(jnp.all(jnp.isfinite(out)))
    print("KERNEL_OK")
</pallas_src>

<mosaic_0001>
module attributes {stable_mosaic.version = 11 : i64} {
  func.func @_codec_fwd_kernel(%arg0: i32, %arg1: memref<1x8x1536xf32, #tpu.memory_space<vmem>>, %arg2: memref<4x8x72xf32, #tpu.memory_space<vmem>>, %arg3: memref<4x8x1xf32, #tpu.memory_space<vmem>>, %arg4: memref<1x1536xf32, #tpu.memory_space<vmem>>, %arg5: memref<1x8x1536xf32, #tpu.memory_space<vmem>>, %arg6: memref<8x1664xf32, #tpu.memory_space<vmem>>, %arg7: memref<72x1536xf32, #tpu.memory_space<vmem>>) attributes {dimension_semantics = [#tpu.dimension_semantics<parallel>], iteration_bounds = array<i64: 2>, scalar_prefetch = 0 : i64, scratch_operands = 2 : i64, tpu.core_type = #tpu.core_type<tc>, window_params = [{transform_indices = @transform_0, window_bounds = array<i64: 1, 8, 1536>}, {pipeline_mode = #tpu.pipeline_mode<synchronous>, transform_indices = @transform_1, window_bounds = array<i64: 4, 8, 72>}, {pipeline_mode = #tpu.pipeline_mode<synchronous>, transform_indices = @transform_2, window_bounds = array<i64: 4, 8, 1>}, {pipeline_mode = #tpu.pipeline_mode<synchronous>, transform_indices = @transform_3, window_bounds = array<i64: 1, 1536>}, {transform_indices = @transform_4, window_bounds = array<i64: 1, 8, 1536>}]} {
    %c0 = arith.constant 0 : index
    %c0_0 = arith.constant 0 : index
    %c0_1 = arith.constant 0 : index
    %0 = vector.load %arg1[%c0, %c0_0, %c0_1] : memref<1x8x1536xf32, #tpu.memory_space<vmem>>, vector<1x8x1536xf32>
    %1 = vector.shape_cast %0 : vector<1x8x1536xf32> to vector<8x1536xf32>
    %c0_2 = arith.constant 0 : index
    %c0_3 = arith.constant 0 : index
    %2 = vector.load %arg6[%c0_2, %c0_3] : memref<8x1664xf32, #tpu.memory_space<vmem>>, vector<8x1536xf32>
    tpu.vector_store %arg6[%c0_2, %c0_3], %1 {strides = array<i32>} : memref<8x1664xf32, #tpu.memory_space<vmem>>, vector<8x1536xf32>,
    %cst = arith.constant 0.000000e+00 : f32
    %3 = vector.broadcast %cst : f32 to vector<8x128xf32>
    %c0_4 = arith.constant 0 : index
    %c1536 = arith.constant 1536 : index
    %4 = vector.load %arg6[%c0_4, %c1536] : memref<8x1664xf32, #tpu.memory_space<vmem>>, vector<8x128xf32>
    tpu.vector_store %arg6[%c0_4, %c1536], %3 {strides = array<i32>} : memref<8x1664xf32, #tpu.memory_space<vmem>>, vector<8x128xf32>,
    %c0_5 = arith.constant 0 : index
    %c0_6 = arith.constant 0 : index
    %5 = vector.load %arg4[%c0_5, %c0_6] : memref<1x1536xf32, #tpu.memory_space<vmem>>, vector<1x1536xf32>
    %c0_7 = arith.constant 0 : index
    %c0_8 = arith.constant 0 : index
    %6 = vector.load %arg6[%c0_7, %c0_8] : memref<8x1664xf32, #tpu.memory_space<vmem>>, vector<8x1536xf32>
    %c0_9 = arith.constant 0 : index
    %c0_10 = arith.constant 0 : index
    %7 = vector.load %arg7[%c0_9, %c0_10] : memref<72x1536xf32, #tpu.memory_space<vmem>>, vector<8x1536xf32>
    tpu.vector_store %arg7[%c0_9, %c0_10], %6 {strides = array<i32>} : memref<72x1536xf32, #tpu.memory_space<vmem>>, vector<8x1536xf32>,
    %c0_11 = arith.constant 0 : index
    %c1 = arith.constant 1 : index
    %8 = vector.load %arg6[%c0_11, %c1] : memref<8x1664xf32, #tpu.memory_space<vmem>>, vector<8x1536xf32>
    %c8 = arith.constant 8 : index
    %c0_12 = arith.constant 0 : index
    %9 = vector.load %arg7[%c8, %c0_12] : memref<72x1536xf32, #tpu.memory_space<vmem>>, vector<8x1536xf32>
    tpu.vector_store %arg7[%c8, %c0_12], %8 {strides = array<i32>} : memref<72x1536xf32, #tpu.memory_space<vmem>>, vector<8x1536xf32>,
    %c0_13 = arith.constant 0 : index
    %c2 = arith.constant 2 : index
    %10 = vector.load %arg6[%c0_13, %c2] : memref<8x1664xf32, #tpu.memory_space<vmem>>, vector<8x1536xf32>
    %c16 = arith.constant 16 : index
    %c0_14 = arith.constant 0 : index
    %11 = vector.load %arg7[%c16, %c0_14] : memref<72x1536xf32, #tpu.memory_space<vmem>>, vector<8x1536xf32>
    tpu.vector_store %arg7[%c16, %c0_14], %10 {strides = array<i32>} : memref<72x1536xf32, #tpu.memory_space<vmem>>, vector<8x1536xf32>,
    %c0_15 = arith.constant 0 : index
    %c18 = arith.constant 18 : index
    %12 = vector.load %arg6[%c0_15, %c18] : memref<8x1664xf32, #tpu.memory_space<vmem>>, vector<8x1536xf32>
    %c24 = arith.constant 24 : index
    %c0_16 = arith.constant 0 : index
    %13 = vector.load %arg7[%c24, %c0_16] : memref<72x1536xf32, #tpu.memory_space<vmem>>, vector<8x1536xf32>
    tpu.vector_store %arg7[%c24, %c0_16], %12 {strides = array<i32>} : memref<72x1536xf32, #tpu.memory_space<vmem>>, vector<8x1536xf32>,
    %c0_17 = arith.constant 0 : index
    %c19 = arith.constant 19 : index
    %14 = vector.load %arg6[%c0_17, %c19] : memref<8x1664xf32, #tpu.memory_space<vmem>>, vector<8x1536xf32>
    %c32 = arith.constant 32 : index
    %c0_18 = arith.constant 0 : index
    %15 = vector.load %arg7[%c32, %c0_18] : memref<72x1536xf32, #tpu.memory_space<vmem>>, vector<8x1536xf32>
    tpu.vector_store %arg7[%c32, %c0_18], %14 {strides = array<i32>} : memref<72x1536xf32, #tpu.memory_space<vmem>>, vector<8x1536xf32>,
    %c0_19 = arith.constant 0 : index
    %c20 = arith.constant 20 : index
    %16 = vector.load %arg6[%c0_19, %c20] : memref<8x1664xf32, #tpu.memory_space<vmem>>, vector<8x1536xf32>
    %c40 = arith.constant 40 : index
    %c0_20 = arith.constant 0 : index
    %17 = vector.load %arg7[%c40, %c0_20] : memref<72x1536xf32, #tpu.memory_space<vmem>>, vector<8x1536xf32>
    tpu.vector_store %arg7[%c40, %c0_20], %16 {strides = array<i32>} : memref<72x1536xf32, #tpu.memory_space<vmem>>, vector<8x1536xf32>,
    %c0_21 = arith.constant 0 : index
    %c36 = arith.constant 36 : index
    %18 = vector.load %arg6[%c0_21, %c36] : memref<8x1664xf32, #tpu.memory_space<vmem>>, vector<8x1536xf32>
    %c48 = arith.constant 48 : index
    %c0_22 = arith.constant 0 : index
    %19 = vector.load %arg7[%c48, %c0_22] : memref<72x1536xf32, #tpu.memory_space<vmem>>, vector<8x1536xf32>
    tpu.vector_store %arg7[%c48, %c0_22], %18 {strides = array<i32>} : memref<72x1536xf32, #tpu.memory_space<vmem>>, vector<8x1536xf32>,
    %c0_23 = arith.constant 0 : index
    %c37 = arith.constant 37 : index
    %20 = vector.load %arg6[%c0_23, %c37] : memref<8x1664xf32, #tpu.memory_space<vmem>>, vector<8x1536xf32>
    %c56 = arith.constant 56 : index
    %c0_24 = arith.constant 0 : index
    %21 = vector.load %arg7[%c56, %c0_24] : memref<72x1536xf32, #tpu.memory_space<vmem>>, vector<8x1536xf32>
    tpu.vector_store %arg7[%c56, %c0_24], %20 {strides = array<i32>} : memref<72x1536xf32, #tpu.memory_space<vmem>>, vector<8x1536xf32>,
    %c0_25 = arith.constant 0 : index
    %c38 = arith.constant 38 : index
    %22 = vector.load %arg6[%c0_25, %c38] : memref<8x1664xf32, #tpu.memory_space<vmem>>, vector<8x1536xf32>
    %c64 = arith.constant 64 : index
    %c0_26 = arith.constant 0 : index
    %23 = vector.load %arg7[%c64, %c0_26] : memref<72x1536xf32, #tpu.memory_space<vmem>>, vector<8x1536xf32>
    tpu.vector_store %arg7[%c64, %c0_26], %22 {strides = array<i32>} : memref<72x1536xf32, #tpu.memory_space<vmem>>, vector<8x1536xf32>,
    %c0_27 = arith.constant 0 : index
    %c0_28 = arith.constant 0 : index
    %c0_29 = arith.constant 0 : index
    %24 = vector.load %arg2[%c0_27, %c0_28, %c0_29] : memref<4x8x72xf32, #tpu.memory_space<vmem>>, vector<1x8x72xf32>
    %25 = vector.shape_cast %24 : vector<1x8x72xf32> to vector<8x72xf32>
    %c0_30 = arith.constant 0 : index
    %c0_31 = arith.constant 0 : index
    %26 = vector.load %arg7[%c0_30, %c0_31] : memref<72x1536xf32, #tpu.memory_space<vmem>>, vector<72x1536xf32>
    %cst_32 = arith.constant dense<0.000000e+00> : vector<8x1536xf32>
    %27 = tpu.matmul %25, %26, %cst_32 {dimension_numbers = #tpu.dot_dimension_numbers<[1], [0], [0], [1], [0, 0, 1, 1], [], []>} : vector<8x72xf32>, vector<72x1536xf32>, vector<8x1536xf32> -> vector<8x1536xf32>
    %c0_33 = arith.constant 0 : index
    %c0_34 = arith.constant 0 : index
    %c0_35 = arith.constant 0 : index
    %28 = vector.load %arg3[%c0_33, %c0_34, %c0_35] : memref<4x8x1xf32, #tpu.memory_space<vmem>>, vector<1x8x1xf32>
    %29 = vector.shape_cast %28 : vector<1x8x1xf32> to vector<8x1xf32>
    %30 = vector.broadcast %29 : vector<8x1xf32> to vector<8x1536xf32>
    %31 = arith.addf %27, %30 : vector<8x1536xf32>
    %cst_36 = arith.constant 0.000000e+00 : f32
    %32 = vector.broadcast %cst_36 : f32 to vector<8x1536xf32>
    %33 = arith.maximumf %31, %32 : vector<8x1536xf32>
    %34 = vector.broadcast %5 : vector<1x1536xf32> to vector<8x1536xf32>
    %35 = arith.mulf %33, %34 : vector<8x1536xf32>
    %c0_37 = arith.constant 0 : index
    %c19_38 = arith.constant 19 : index
    %36 = vector.load %arg6[%c0_37, %c19_38] : memref<8x1664xf32, #tpu.memory_space<vmem>>, vector<8x1536xf32>
    tpu.vector_store %arg6[%c0_37, %c19_38], %35 {strides = array<i32>} : memref<8x1664xf32, #tpu.memory_space<vmem>>, vector<8x1536xf32>,
    %c0_39 = arith.constant 0 : index
    %c0_40 = arith.constant 0 : index
    %37 = vector.load %arg6[%c0_39, %c0_40] : memref<8x1664xf32, #tpu.memory_space<vmem>>, vector<8x1536xf32>
    %c0_41 = arith.constant 0 : index
    %c0_42 = arith.constant 0 : index
    %38 = vector.load %arg7[%c0_41, %c0_42] : memref<72x1536xf32, #tpu.memory_space<vmem>>, vector<8x1536xf32>
    tpu.vector_store %arg7[%c0_41, %c0_42], %37 {strides = array<i32>} : memref<72x1536xf32, #tpu.memory_space<vmem>>, vector<8x1536xf32>,
    %c0_43 = arith.constant 0 : index
    %c1_44 = arith.constant 1 : index
    %39 = vector.load %arg6[%c0_43, %c1_44] : memref<8x1664xf32, #tpu.memory_space<vmem>>, vector<8x1536xf32>
    %c8_45 = arith.constant 8 : index
    %c0_46 = arith.constant 0 : index
    %40 = vector.load %arg7[%c8_45, %c0_46] : memref<72x1536xf32, #tpu.memory_space<vmem>>, vector<8x1536xf32>
    tpu.vector_store %arg7[%c8_45, %c0_46], %39 {strides = array<i32>} : memref<72x1536xf32, #tpu.memory_space<vmem>>, vector<8x1536xf32>,
    %c0_47 = arith.constant 0 : index
    %c2_48 = arith.constant 2 : index
    %41 = vector.load %arg6[%c0_47, %c2_48] : memref<8x1664xf32, #tpu.memory_space<vmem>>, vector<8x1536xf32>
    %c16_49 = arith.constant 16 : index
    %c0_50 = arith.constant 0 : index
    %42 = vector.load %arg7[%c16_49, %c0_50] : memref<72x1536xf32, #tpu.memory_space<vmem>>, vector<8x1536xf32>
    tpu.vector_store %arg7[%c16_49, %c0_50], %41 {strides = array<i32>} : memref<72x1536xf32, #tpu.memory_space<vmem>>, vector<8x1536xf32>,
    %c0_51 = arith.constant 0 : index
    %c18_52 = arith.constant 18 : index
    %43 = vector.load %arg6[%c0_51, %c18_52] : memref<8x1664xf32, #tpu.memory_space<vmem>>, vector<8x1536xf32>
    %c24_53 = arith.constant 24 : index
    %c0_54 = arith.constant 0 : index
    %44 = vector.load %arg7[%c24_53, %c0_54] : memref<72x1536xf32, #tpu.memory_space<vmem>>, vector<8x1536xf32>
    tpu.vector_store %arg7[%c24_53, %c0_54], %43 {strides = array<i32>} : memref<72x1536xf32, #tpu.memory_space<vmem>>, vector<8x1536xf32>,
    %c0_55 = arith.constant 0 : index
    %c19_56 = arith.constant 19 : index
    %45 = vector.load %arg6[%c0_55, %c19_56] : memref<8x1664xf32, #tpu.memory_space<vmem>>, vector<8x1536xf32>
    %c32_57 = arith.constant 32 : index
    %c0_58 = arith.constant 0 : index
    %46 = vector.load %arg7[%c32_57, %c0_58] : memref<72x1536xf32, #tpu.memory_space<vmem>>, vector<8x1536xf32>
    tpu.vector_store %arg7[%c32_57, %c0_58], %45 {strides = array<i32>} : memref<72x1536xf32, #tpu.memory_space<vmem>>, vector<8x1536xf32>,
    %c0_59 = arith.constant 0 : index
    %c20_60 = arith.constant 20 : index
    %47 = vector.load %arg6[%c0_59, %c20_60] : memref<8x1664xf32, #tpu.memory_space<vmem>>, vector<8x1536xf32>
    %c40_61 = arith.constant 40 : index
    %c0_62 = arith.constant 0 : index
    %48 = vector.load %arg7[%c40_61, %c0_62] : memref<72x1536xf32, #tpu.memory_space<vmem>>, vector<8x1536xf32>
    tpu.vector_store %arg7[%c40_61, %c0_62], %47 {strides = array<i32>} : memref<72x1536xf32, #tpu.memory_space<vmem>>, vector<8x1536xf32>,
    %c0_63 = arith.constant 0 : index
    %c36_64 = arith.constant 36 : index
    %49 = vector.load %arg6[%c0_63, %c36_64] : memref<8x1664xf32, #tpu.memory_space<vmem>>, vector<8x1536xf32>
    %c48_65 = arith.constant 48 : index
    %c0_66 = arith.constant 0 : index
    %50 = vector.load %arg7[%c48_65, %c0_66] : memref<72x1536xf32, #tpu.memory_space<vmem>>, vector<8x1536xf32>
    tpu.vector_store %arg7[%c48_65, %c0_66], %49 {strides = array<i32>} : memref<72x1536xf32, #tpu.memory_space<vmem>>, vector<8x1536xf32>,
    %c0_67 = arith.constant 0 : index
    %c37_68 = arith.constant 37 : index
    %51 = vector.load %arg6[%c0_67, %c37_68] : memref<8x1664xf32, #tpu.memory_space<vmem>>, vector<8x1536xf32>
    %c56_69 = arith.constant 56 : index
    %c0_70 = arith.constant 0 : index
    %52 = vector.load %arg7[%c56_69, %c0_70] : memref<72x1536xf32, #tpu.memory_space<vmem>>, vector<8x1536xf32>
    tpu.vector_store %arg7[%c56_69, %c0_70], %51 {strides = array<i32>} : memref<72x1536xf32, #tpu.memory_space<vmem>>, vector<8x1536xf32>,
    %c0_71 = arith.constant 0 : index
    %c38_72 = arith.constant 38 : index
    %53 = vector.load %arg6[%c0_71, %c38_72] : memref<8x1664xf32, #tpu.memory_space<vmem>>, vector<8x1536xf32>
    %c64_73 = arith.constant 64 : index
    %c0_74 = arith.constant 0 : index
    %54 = vector.load %arg7[%c64_73, %c0_74] : memref<72x1536xf32, #tpu.memory_space<vmem>>, vector<8x1536xf32>
    tpu.vector_store %arg7[%c64_73, %c0_74], %53 {strides = array<i32>} : memref<72x1536xf32, #tpu.memory_space<vmem>>, vector<8x1536xf32>,
    %c1_75 = arith.constant 1 : index
    %c0_76 = arith.constant 0 : index
    %c0_77 = arith.constant 0 : index
    %55 = vector.load %arg2[%c1_75, %c0_76, %c0_77] : memref<4x8x72xf32, #tpu.memory_space<vmem>>, vector<1x8x72xf32>
    %56 = vector.shape_cast %55 : vector<1x8x72xf32> to vector<8x72xf32>
    %c0_78 = arith.constant 0 : index
    %c0_79 = arith.constant 0 : index
    %57 = vector.load %arg7[%c0_78, %c0_79] : memref<72x1536xf32, #tpu.memory_space<vmem>>, vector<72x1536xf32>
    %cst_80 = arith.constant dense<0.000000e+00> : vector<8x1536xf32>
    %58 = tpu.matmul %56, %57, %cst_80 {dimension_numbers = #tpu.dot_dimension_numbers<[1], [0], [0], [1], [0, 0, 1, 1], [], []>} : vector<8x72xf32>, vector<72x1536xf32>, vector<8x1536xf32> -> vector<8x1536xf32>
    %c1_81 = arith.constant 1 : index
    %c0_82 = arith.constant 0 : index
    %c0_83 = arith.constant 0 : index
    %59 = vector.load %arg3[%c1_81, %c0_82, %c0_83] : memref<4x8x1xf32, #tpu.memory_space<vmem>>, vector<1x8x1xf32>
    %60 = vector.shape_cast %59 : vector<1x8x1xf32> to vector<8x1xf32>
    %61 = vector.broadcast %60 : vector<8x1xf32> to vector<8x1536xf32>
    %62 = arith.addf %58, %61 : vector<8x1536xf32>
    %63 = math.roundeven %62 : vector<8x1536xf32>
    %64 = vector.broadcast %5 : vector<1x1536xf32> to vector<8x1536xf32>
    %65 = arith.mulf %63, %64 : vector<8x1536xf32>
    %c0_84 = arith.constant 0 : index
    %c19_85 = arith.constant 19 : index
    %66 = vector.load %arg6[%c0_84, %c19_85] : memref<8x1664xf32, #tpu.memory_space<vmem>>, vector<8x1536xf32>
    tpu.vector_store %arg6[%c0_84, %c19_85], %65 {strides = array<i32>} : memref<8x1664xf32, #tpu.memory_space<vmem>>, vector<8x1536xf32>,
    %c0_86 = arith.constant 0 : index
    %c0_87 = arith.constant 0 : index
    %67 = vector.load %arg6[%c0_86, %c0_87] : memref<8x1664xf32, #tpu.memory_space<vmem>>, vector<8x1536xf32>
    %c0_88 = arith.constant 0 : index
    %c0_89 = arith.constant 0 : index
    %68 = vector.load %arg7[%c0_88, %c0_89] : memref<72x1536xf32, #tpu.memory_space<vmem>>, vector<8x1536xf32>
    tpu.vector_store %arg7[%c0_88, %c0_89], %67 {strides = array<i32>} : memref<72x1536xf32, #tpu.memory_space<vmem>>, vector<8x1536xf32>,
    %c0_90 = arith.constant 0 : index
    %c1_91 = arith.constant 1 : index
    %69 = vector.load %arg6[%c0_90, %c1_91] : memref<8x1664xf32, #tpu.memory_space<vmem>>, vector<8x1536xf32>
    %c8_92 = arith.constant 8 : index
    %c0_93 = arith.constant 0 : index
    %70 = vector.load %arg7[%c8_92, %c0_93] : memref<72x1536xf32, #tpu.memory_space<vmem>>, vector<8x1536xf32>
    tpu.vector_store %arg7[%c8_92, %c0_93], %69 {strides = array<i32>} : memref<72x1536xf32, #tpu.memory_space<vmem>>, vector<8x1536xf32>,
    %c0_94 = arith.constant 0 : index
    %c2_95 = arith.constant 2 : index
    %71 = vector.load %arg6[%c0_94, %c2_95] : memref<8x1664xf32, #tpu.memory_space<vmem>>, vector<8x1536xf32>
    %c16_96 = arith.constant 16 : index
    %c0_97 = arith.constant 0 : index
    %72 = vector.load %arg7[%c16_96, %c0_97] : memref<72x1536xf32, #tpu.memory_space<vmem>>, vector<8x1536xf32>
    tpu.vector_store %arg7[%c16_96, %c0_97], %71 {strides = array<i32>} : memref<72x1536xf32, #tpu.memory_space<vmem>>, vector<8x1536xf32>,
    %c0_98 = arith.constant 0 : index
    %c18_99 = arith.constant 18 : index
    %73 = vector.load %arg6[%c0_98, %c18_99] : memref<8x1664xf32, #tpu.memory_space<vmem>>, vector<8x1536xf32>
    %c24_100 = arith.constant 24 : index
    %c0_101 = arith.constant 0 : index
    %74 = vector.load %arg7[%c24_100, %c0_101] : memref<72x1536xf32, #tpu.memory_space<vmem>>, vector<8x1536xf32>
    tpu.vector_store %arg7[%c24_100, %c0_101], %73 {strides = array<i32>} : memref<72x1536xf32, #tpu.memory_space<vmem>>, vector<8x1536xf32>,
    %c0_102 = arith.constant 0 : index
    %c19_103 = arith.constant 19 : index
    %75 = vector.load %arg6[%c0_102, %c19_103] : memref<8x1664xf32, #tpu.memory_space<vmem>>, vector<8x1536xf32>
    %c32_104 = arith.constant 32 : index
    %c0_105 = arith.constant 0 : index
    %76 = vector.load %arg7[%c32_104, %c0_105] : memref<72x1536xf32, #tpu.memory_space<vmem>>, vector<8x1536xf32>
    tpu.vector_store %arg7[%c32_104, %c0_105], %75 {strides = array<i32>} : memref<72x1536xf32, #tpu.memory_space<vmem>>, vector<8x1536xf32>,
    %c0_106 = arith.constant 0 : index
    %c20_107 = arith.constant 20 : index
    %77 = vector.load %arg6[%c0_106, %c20_107] : memref<8x1664xf32, #tpu.memory_space<vmem>>, vector<8x1536xf32>
    %c40_108 = arith.constant 40 : index
    %c0_109 = arith.constant 0 : index
    %78 = vector.load %arg7[%c40_108, %c0_109] : memref<72x1536xf32, #tpu.memory_space<vmem>>, vector<8x1536xf32>
    tpu.vector_store %arg7[%c40_108, %c0_109], %77 {strides = array<i32>} : memref<72x1536xf32, #tpu.memory_space<vmem>>, vector<8x1536xf32>,
    %c0_110 = arith.constant 0 : index
    %c36_111 = arith.constant 36 : index
    %79 = vector.load %arg6[%c0_110, %c36_111] : memref<8x1664xf32, #tpu.memory_space<vmem>>, vector<8x1536xf32>
    %c48_112 = arith.constant 48 : index
    %c0_113 = arith.constant 0 : index
    %80 = vector.load %arg7[%c48_112, %c0_113] : memref<72x1536xf32, #tpu.memory_space<vmem>>, vector<8x1536xf32>
    tpu.vector_store %arg7[%c48_112, %c0_113], %79 {strides = array<i32>} : memref<72x1536xf32, #tpu.memory_space<vmem>>, vector<8x1536xf32>,
    %c0_114 = arith.constant 0 : index
    %c37_115 = arith.constant 37 : index
    %81 = vector.load %arg6[%c0_114, %c37_115] : memref<8x1664xf32, #tpu.memory_space<vmem>>, vector<8x1536xf32>
    %c56_116 = arith.constant 56 : index
    %c0_117 = arith.constant 0 : index
    %82 = vector.load %arg7[%c56_116, %c0_117] : memref<72x1536xf32, #tpu.memory_space<vmem>>, vector<8x1536xf32>
    tpu.vector_store %arg7[%c56_116, %c0_117], %81 {strides = array<i32>} : memref<72x1536xf32, #tpu.memory_space<vmem>>, vector<8x1536xf32>,
    %c0_118 = arith.constant 0 : index
    %c38_119 = arith.constant 38 : index
    %83 = vector.load %arg6[%c0_118, %c38_119] : memref<8x1664xf32, #tpu.memory_space<vmem>>, vector<8x1536xf32>
    %c64_120 = arith.constant 64 : index
    %c0_121 = arith.constant 0 : index
    %84 = vector.load %arg7[%c64_120, %c0_121] : memref<72x1536xf32, #tpu.memory_space<vmem>>, vector<8x1536xf32>
    tpu.vector_store %arg7[%c64_120, %c0_121], %83 {strides = array<i32>} : memref<72x1536xf32, #tpu.memory_space<vmem>>, vector<8x1536xf32>,
    %c2_122 = arith.constant 2 : index
    %c0_123 = arith.constant 0 : index
    %c0_124 = arith.constant 0 : index
    %85 = vector.load %arg2[%c2_122, %c0_123, %c0_124] : memref<4x8x72xf32, #tpu.memory_space<vmem>>, vector<1x8x72xf32>
    %86 = vector.shape_cast %85 : vector<1x8x72xf32> to vector<8x72xf32>
    %c0_125 = arith.constant 0 : index
    %c0_126 = arith.constant 0 : index
    %87 = vector.load %arg7[%c0_125, %c0_126] : memref<72x1536xf32, #tpu.memory_space<vmem>>, vector<72x1536xf32>
    %cst_127 = arith.constant dense<0.000000e+00> : vector<8x1536xf32>
    %88 = tpu.matmul %86, %87, %cst_127 {dimension_numbers = #tpu.dot_dimension_numbers<[1], [0], [0], [1], [0, 0, 1, 1], [], []>} : vector<8x72xf32>, vector<72x1536xf32>, vector<8x1536xf32> -> vector<8x1536xf32>
    %c2_128 = arith.constant 2 : index
    %c0_129 = arith.constant 0 : index
    %c0_130 = arith.constant 0 : index
    %89 = vector.load %arg3[%c2_128, %c0_129, %c0_130] : memref<4x8x1xf32, #tpu.memory_space<vmem>>, vector<1x8x1xf32>
    %90 = vector.shape_cast %89 : vector<1x8x1xf32> to vector<8x1xf32>
    %91 = vector.broadcast %90 : vector<8x1xf32> to vector<8x1536xf32>
    %92 = arith.addf %88, %91 : vector<8x1536xf32>
    %cst_131 = arith.constant 0.000000e+00 : f32
    %93 = vector.broadcast %cst_131 : f32 to vector<8x1536xf32>
    %94 = arith.maximumf %92, %93 : vector<8x1536xf32>
    %95 = vector.broadcast %5 : vector<1x1536xf32> to vector<8x1536xf32>
    %96 = arith.mulf %94, %95 : vector<8x1536xf32>
    %c0_132 = arith.constant 0 : index
    %c19_133 = arith.constant 19 : index
    %97 = vector.load %arg6[%c0_132, %c19_133] : memref<8x1664xf32, #tpu.memory_space<vmem>>, vector<8x1536xf32>
    tpu.vector_store %arg6[%c0_132, %c19_133], %96 {strides = array<i32>} : memref<8x1664xf32, #tpu.memory_space<vmem>>, vector<8x1536xf32>,
    %c0_134 = arith.constant 0 : index
    %c0_135 = arith.constant 0 : index
    %98 = vector.load %arg6[%c0_134, %c0_135] : memref<8x1664xf32, #tpu.memory_space<vmem>>, vector<8x1536xf32>
    %c0_136 = arith.constant 0 : index
    %c0_137 = arith.constant 0 : index
    %99 = vector.load %arg7[%c0_136, %c0_137] : memref<72x1536xf32, #tpu.memory_space<vmem>>, vector<8x1536xf32>
    tpu.vector_store %arg7[%c0_136, %c0_137], %98 {strides = array<i32>} : memref<72x1536xf32, #tpu.memory_space<vmem>>, vector<8x1536xf32>,
    %c0_138 = arith.constant 0 : index
    %c1_139 = arith.constant 1 : index
    %100 = vector.load %arg6[%c0_138, %c1_139] : memref<8x1664xf32, #tpu.memory_space<vmem>>, vector<8x1536xf32>
    %c8_140 = arith.constant 8 : index
    %c0_141 = arith.constant 0 : index
    %101 = vector.load %arg7[%c8_140, %c0_141] : memref<72x1536xf32, #tpu.memory_space<vmem>>, vector<8x1536xf32>
    tpu.vector_store %arg7[%c8_140, %c0_141], %100 {strides = array<i32>} : memref<72x1536xf32, #tpu.memory_space<vmem>>, vector<8x1536xf32>,
    %c0_142 = arith.constant 0 : index
    %c2_143 = arith.constant 2 : index
    %102 = vector.load %arg6[%c0_142, %c2_143] : memref<8x1664xf32, #tpu.memory_space<vmem>>, vector<8x1536xf32>
    %c16_144 = arith.constant 16 : index
    %c0_145 = arith.constant 0 : index
    %103 = vector.load %arg7[%c16_144, %c0_145] : memref<72x1536xf32, #tpu.memory_space<vmem>>, vector<8x1536xf32>
    tpu.vector_store %arg7[%c16_144, %c0_145], %102 {strides = array<i32>} : memref<72x1536xf32, #tpu.memory_space<vmem>>, vector<8x1536xf32>,
    %c0_146 = arith.constant 0 : index
    %c18_147 = arith.constant 18 : index
    %104 = vector.load %arg6[%c0_146, %c18_147] : memref<8x1664xf32, #tpu.memory_space<vmem>>, vector<8x1536xf32>
    %c24_148 = arith.constant 24 : index
    %c0_149 = arith.constant 0 : index
    %105 = vector.load %arg7[%c24_148, %c0_149] : memref<72x1536xf32, #tpu.memory_space<vmem>>, vector<8x1536xf32>
    tpu.vector_store %arg7[%c24_148, %c0_149], %104 {strides = array<i32>} : memref<72x1536xf32, #tpu.memory_space<vmem>>, vector<8x1536xf32>,
    %c0_150 = arith.constant 0 : index
    %c19_151 = arith.constant 19 : index
    %106 = vector.load %arg6[%c0_150, %c19_151] : memref<8x1664xf32, #tpu.memory_space<vmem>>, vector<8x1536xf32>
    %c32_152 = arith.constant 32 : index
    %c0_153 = arith.constant 0 : index
    %107 = vector.load %arg7[%c32_152, %c0_153] : memref<72x1536xf32, #tpu.memory_space<vmem>>, vector<8x1536xf32>
    tpu.vector_store %arg7[%c32_152, %c0_153], %106 {strides = array<i32>} : memref<72x1536xf32, #tpu.memory_space<vmem>>, vector<8x1536xf32>,
    %c0_154 = arith.constant 0 : index
    %c20_155 = arith.constant 20 : index
    %108 = vector.load %arg6[%c0_154, %c20_155] : memref<8x1664xf32, #tpu.memory_space<vmem>>, vector<8x1536xf32>
    %c40_156 = arith.constant 40 : index
    %c0_157 = arith.constant 0 : index
    %109 = vector.load %arg7[%c40_156, %c0_157] : memref<72x1536xf32, #tpu.memory_space<vmem>>, vector<8x1536xf32>
    tpu.vector_store %arg7[%c40_156, %c0_157], %108 {strides = array<i32>} : memref<72x1536xf32, #tpu.memory_space<vmem>>, vector<8x1536xf32>,
    %c0_158 = arith.constant 0 : index
    %c36_159 = arith.constant 36 : index
    %110 = vector.load %arg6[%c0_158, %c36_159] : memref<8x1664xf32, #tpu.memory_space<vmem>>, vector<8x1536xf32>
    %c48_160 = arith.constant 48 : index
    %c0_161 = arith.constant 0 : index
    %111 = vector.load %arg7[%c48_160, %c0_161] : memref<72x1536xf32, #tpu.memory_space<vmem>>, vector<8x1536xf32>
    tpu.vector_store %arg7[%c48_160, %c0_161], %110 {strides = array<i32>} : memref<72x1536xf32, #tpu.memory_space<vmem>>, vector<8x1536xf32>,
    %c0_162 = arith.constant 0 : index
    %c37_163 = arith.constant 37 : index
    %112 = vector.load %arg6[%c0_162, %c37_163] : memref<8x1664xf32, #tpu.memory_space<vmem>>, vector<8x1536xf32>
    %c56_164 = arith.constant 56 : index
    %c0_165 = arith.constant 0 : index
    %113 = vector.load %arg7[%c56_164, %c0_165] : memref<72x1536xf32, #tpu.memory_space<vmem>>, vector<8x1536xf32>
    tpu.vector_store %arg7[%c56_164, %c0_165], %112 {strides = array<i32>} : memref<72x1536xf32, #tpu.memory_space<vmem>>, vector<8x1536xf32>,
    %c0_166 = arith.constant 0 : index
    %c38_167 = arith.constant 38 : index
    %114 = vector.load %arg6[%c0_166, %c38_167] : memref<8x1664xf32, #tpu.memory_space<vmem>>, vector<8x1536xf32>
    %c64_168 = arith.constant 64 : index
    %c0_169 = arith.constant 0 : index
    %115 = vector.load %arg7[%c64_168, %c0_169] : memref<72x1536xf32, #tpu.memory_space<vmem>>, vector<8x1536xf32>
    tpu.vector_store %arg7[%c64_168, %c0_169], %114 {strides = array<i32>} : memref<72x1536xf32, #tpu.memory_space<vmem>>, vector<8x1536xf32>,
    %c3 = arith.constant 3 : index
    %c0_170 = arith.constant 0 : index
    %c0_171 = arith.constant 0 : index
    %116 = vector.load %arg2[%c3, %c0_170, %c0_171] : memref<4x8x72xf32, #tpu.memory_space<vmem>>, vector<1x8x72xf32>
    %117 = vector.shape_cast %116 : vector<1x8x72xf32> to vector<8x72xf32>
    %c0_172 = arith.constant 0 : index
    %c0_173 = arith.constant 0 : index
    %118 = vector.load %arg7[%c0_172, %c0_173] : memref<72x1536xf32, #tpu.memory_space<vmem>>, vector<72x1536xf32>
    %cst_174 = arith.constant dense<0.000000e+00> : vector<8x1536xf32>
    %119 = tpu.matmul %117, %118, %cst_174 {dimension_numbers = #tpu.dot_dimension_numbers<[1], [0], [0], [1], [0, 0, 1, 1], [], []>} : vector<8x72xf32>, vector<72x1536xf32>, vector<8x1536xf32> -> vector<8x1536xf32>
    %c3_175 = arith.constant 3 : index
    %c0_176 = arith.constant 0 : index
    %c0_177 = arith.constant 0 : index
    %120 = vector.load %arg3[%c3_175, %c0_176, %c0_177] : memref<4x8x1xf32, #tpu.memory_space<vmem>>, vector<1x8x1xf32>
    %121 = vector.shape_cast %120 : vector<1x8x1xf32> to vector<8x1xf32>
    %122 = vector.broadcast %121 : vector<8x1xf32> to vector<8x1536xf32>
    %123 = arith.addf %119, %122 : vector<8x1536xf32>
    %c0_178 = arith.constant 0 : index
    %c0_179 = arith.constant 0 : index
    %c0_180 = arith.constant 0 : index
    %124 = vector.load %arg5[%c0_178, %c0_179, %c0_180] : memref<1x8x1536xf32, #tpu.memory_space<vmem>>, vector<1x8x1536xf32>
    %125 = vector.shape_cast %124 : vector<1x8x1536xf32> to vector<8x1536xf32>
    %126 = vector.shape_cast %123 : vector<8x1536xf32> to vector<1x8x1536xf32>
    tpu.vector_store %arg5[%c0_178, %c0_179, %c0_180], %126 {strides = array<i32>} : memref<1x8x1536xf32, #tpu.memory_space<vmem>>, vector<1x8x1536xf32>,
    return
  }
  func.func @transform_0(%arg0: i32) -> (i32, i32, i32) {
    %c0_i32 = arith.constant 0 : i32
    %c0_i32_0 = arith.constant 0 : i32
    %c0_i32_1 = arith.constant 0 : i32
    return %arg0, %c0_i32, %c0_i32_0 : i32, i32, i32
  }
  func.func @transform_1(%arg0: i32) -> (i32, i32, i32) {
    %c0_i32 = arith.constant 0 : i32
    %c0_i32_0 = arith.constant 0 : i32
    %c0_i32_1 = arith.constant 0 : i32
    %c0_i32_2 = arith.constant 0 : i32
    return %c0_i32, %c0_i32_0, %c0_i32_1 : i32, i32, i32
  }
  func.func @transform_2(%arg0: i32) -> (i32, i32, i32) {
    %c0_i32 = arith.constant 0 : i32
    %c0_i32_0 = arith.constant 0 : i32
    %c0_i32_1 = arith.constant 0 : i32
    %c0_i32_2 = arith.constant 0 : i32
    return %c0_i32, %c0_i32_0, %c0_i32_1 : i32, i32, i32
  }
  func.func @transform_3(%arg0: i32) -> (i32, i32) {
    %c0_i32 = arith.constant 0 : i32
    %c0_i32_0 = arith.constant 0 : i32
    %c0_i32_1 = arith.constant 0 : i32
    return %c0_i32, %c0_i32_0 : i32, i32
  }
  func.func @transform_4(%arg0: i32) -> (i32, i32, i32) {
    %c0_i32 = arith.constant 0 : i32
    %c0_i32_0 = arith.constant 0 : i32
    %c0_i32_1 = arith.constant 0 : i32
    return %arg0, %c0_i32, %c0_i32_0 : i32, i32, i32
  }
}

</mosaic_0001>

<llo_original>
// kernel: compressor_predict.1
$region0: #{compressor_predict.1}
  #allocation0 [shape = 'u32[]', space=smem, size = 0x4, offset = 0x4, fixed_abs, tag = 'smem constant byte address 0x4 - core index']
  #allocation1 [shape = 'u32[144,128]{1,0:T(1,128)}', space=vmem, size = 0x12000, scoped, tag = 'internal scratch']
  #allocation2 [shape = 'f32[8,1664]{1,0:T(8,128)}', space=vmem, size = 0xd000, scoped, tag = 'scratch operand']
  #allocation3 [shape = 'f32[72,1536]{1,0:T(8,128)}', space=vmem, size = 0x6c000, scoped, tag = 'scratch operand']
  %s0 = inlined_call_operand.vmem [shape: f32[2,8,1536], index: 0, kind: input, shape index: {}]
  %s1 = inlined_call_operand.vmem [shape: f32[4,8,72], index: 1, kind: input, shape index: {}]
  %s2 = inlined_call_operand.vmem [shape: f32[4,8,1], index: 2, kind: input, shape index: {}]
  %s3 = inlined_call_operand.vmem [shape: f32[1,1536], index: 3, kind: input, shape index: {}]
  %s4 = inlined_call_operand.vmem [shape: f32[2,8,1536], index: 4, kind: output, shape index: {}]
  %s5 = sld [smem:[#allocation0]]
  $region49: #{compressor_predict.1} parent=0
    _
  %s7 = ssub.s32 1, %s5
  %s8 = scalar_select 0, %s7, %s5
  loop: start=0, step=1, limit=4
  $region2: #{compressor_predict.1} parent=0 // loop_pre_header
    _
  $region3: #{compressor_predict.1} parent=0 // loop_header
    %s10 = sphi 0, %s14
    %p11 = scmp.ge.s32.totalorder %s10, 4
    %s20 = sphi 0, %s22
    %s23 = sphi 0, %s20
    %s24 = sphi 0, %s23
    %s40 = sphi 0, %s24
    %s44 = sphi 0, %s44
    %s46 = sphi 0, %s44
    %s47 = sphi 0, %s46
    %s61 = sphi 0, %s47
    %s65 = sphi 0, %s65
    %s67 = sphi 0, %s65
    %s68 = sphi 0, %s67
    %s82 = sphi 0, %s68
    %s86 = sphi 0, %s86
    %s88 = sphi 0, %s86
    %s89 = sphi 0, %s88
    %s103 = sphi 0, %s89
    %s109 = sphi 0, %s111
    %s112 = sphi 0, %s109
    %s113 = sphi 0, %s112
    %s129 = sphi 0, %s113
  $region4: #{compressor_predict.1} parent=0 // loop_header_branch
    %13 = sbr.rel (%p11) target = $region8
  $region5: #{compressor_predict.1} parent=0 // loop_body
    %s15 = ssub.s32 %s10, 1
    %s16 = ssub.s32 %s10, 2
    %s17 = sadd.s32 %s10, 1
    %s18 = ssub.s32 %s10, %s17
    %p19 = scmp.eq.s32.totalorder %s18, 0
    %s21 = sadd.s32 %s20, 1
    %s22 = scalar_select %p19, %s20, %s21
    %p25 = pneg %p19
    %p26 = scmp.eq.s32.totalorder %s10, 1
    %p27 = por %p25, %p26
    %p28 = scmp.ne.s32.totalorder %s20, %s23
    %p29 = scmp.eq.s32.totalorder %s10, 0
    %p30 = por %p28, %p29
    %p31 = scmp.ne.s32.totalorder %s20, %s23
    %p32 = scmp.eq.s32.totalorder %s15, 1
    %p33 = por %p31, %p32
    %p34 = scmp.ne.s32.totalorder %s23, %s24
    %p35 = scmp.eq.s32.totalorder %s15, 0
    %p36 = por %p34, %p35
    %p37 = scmp.ne.s32.totalorder %s23, %s24
    %p38 = scmp.eq.s32.totalorder %s16, 1
    %p39 = por %p37, %p38
    %p41 = scmp.ne.s32.totalorder %s24, %s40
    %p42 = scmp.eq.s32.totalorder %s16, 0
    %p43 = por %p41, %p42
    %s45 = sadd.s32 %s44, 1
    %p48 = scmp.eq.s32.totalorder %s10, 1
    %p49 = scmp.ne.s32.totalorder %s44, %s46
    %p50 = scmp.eq.s32.totalorder %s10, 0
    %p51 = por %p49, %p50
    %p52 = scmp.ne.s32.totalorder %s44, %s46
    %p53 = scmp.eq.s32.totalorder %s15, 1
    %p54 = por %p52, %p53
    %p55 = scmp.ne.s32.totalorder %s46, %s47
    %p56 = scmp.eq.s32.totalorder %s15, 0
    %p57 = por %p55, %p56
    %p58 = scmp.ne.s32.totalorder %s46, %s47
    %p59 = scmp.eq.s32.totalorder %s16, 1
    %p60 = por %p58, %p59
    %p62 = scmp.ne.s32.totalorder %s47, %s61
    %p63 = scmp.eq.s32.totalorder %s16, 0
    %p64 = por %p62, %p63
    %s66 = sadd.s32 %s65, 1
    %p69 = scmp.eq.s32.totalorder %s10, 1
    %p70 = scmp.ne.s32.totalorder %s65, %s67
    %p71 = scmp.eq.s32.totalorder %s10, 0
    %p72 = por %p70, %p71
    %p73 = scmp.ne.s32.totalorder %s65, %s67
    %p74 = scmp.eq.s32.totalorder %s15, 1
    %p75 = por %p73, %p74
    %p76 = scmp.ne.s32.totalorder %s67, %s68
    %p77 = scmp.eq.s32.totalorder %s15, 0
    %p78 = por %p76, %p77
    %p79 = scmp.ne.s32.totalorder %s67, %s68
    %p80 = scmp.eq.s32.totalorder %s16, 1
    %p81 = por %p79, %p80
    %p83 = scmp.ne.s32.totalorder %s68, %s82
    %p84 = scmp.eq.s32.totalorder %s16, 0
    %p85 = por %p83, %p84
    %s87 = sadd.s32 %s86, 1
    %p90 = scmp.eq.s32.totalorder %s10, 1
    %p91 = scmp.ne.s32.totalorder %s86, %s88
    %p92 = scmp.eq.s32.totalorder %s10, 0
    %p93 = por %p91, %p92
    %p94 = scmp.ne.s32.totalorder %s86, %s88
    %p95 = scmp.eq.s32.totalorder %s15, 1
    %p96 = por %p94, %p95
    %p97 = scmp.ne.s32.totalorder %s88, %s89
    %p98 = scmp.eq.s32.totalorder %s15, 0
    %p99 = por %p97, %p98
    %p100 = scmp.ne.s32.totalorder %s88, %s89
    %p101 = scmp.eq.s32.totalorder %s16, 1
    %p102 = por %p100, %p101
    %p104 = scmp.ne.s32.totalorder %s89, %s103
    %p105 = scmp.eq.s32.totalorder %s16, 0
    %p106 = por %p104, %p105
    %s107 = ssub.s32 %s10, %s17
    %p108 = scmp.eq.s32.totalorder %s107, 0
    %s110 = sadd.s32 %s109, 1
    %s111 = scalar_select %p108, %s109, %s110
    %p114 = pneg %p108
    %p115 = scmp.eq.s32.totalorder %s10, 1
    %p116 = por %p114, %p115
    %p117 = scmp.ne.s32.totalorder %s109, %s112
    %p118 = scmp.eq.s32.totalorder %s10, 0
    %p119 = por %p117, %p118
    %p120 = scmp.ne.s32.totalorder %s109, %s112
    %p121 = scmp.eq.s32.totalorder %s15, 1
    %p122 = por %p120, %p121
    %p123 = scmp.ne.s32.totalorder %s112, %s113
    %p124 = scmp.eq.s32.totalorder %s15, 0
    %p125 = por %p123, %p124
    %p126 = scmp.ne.s32.totalorder %s112, %s113
    %p127 = scmp.eq.s32.totalorder %s16, 1
    %p128 = por %p126, %p127
    %p130 = scmp.ne.s32.totalorder %s113, %s129
    %p131 = scmp.eq.s32.totalorder %s16, 0
    %p132 = por %p130, %p131
    %p133 = scmp.le.s32.totalorder 1, %s10
    %p134 = scmp.lt.s32.totalorder %s10, 3
    %p135 = pnand %p133, %p134
    %p136 = pneg %p135
    // Predicated region
    $region9: #{compressor_predict.1} parent=5 // pred_check
      _
    $region10: #{compressor_predict.1} parent=5 // pred_check_branch
      %138 = sbr.rel (%p135) target = $region12
    $region11: #{compressor_predict.1} parent=5 // pred_region
      %s139 = ssub.s32 %s10, 1
      // Predicated region
      $region13: #{compressor_predict.1} parent=11 // pred_check
        %p140 = pneg %p57
      $region14: #{compressor_predict.1} parent=11 // pred_check_branch
        %142 = sbr.rel (%p140) target = $region16
      $region15: #{compressor_predict.1} parent=11 // pred_region
        _
      $region16: #{compressor_predict.1} parent=11 // pred_fallthru
        _
      // Predicated region
      $region17: #{compressor_predict.1} parent=11 // pred_check
        %p143 = pneg %p78
      $region18: #{compressor_predict.1} parent=11 // pred_check_branch
        %145 = sbr.rel (%p143) target = $region20
      $region19: #{compressor_predict.1} parent=11 // pred_region
        _
      $region20: #{compressor_predict.1} parent=11 // pred_fallthru
        _
      // Predicated region
      $region21: #{compressor_predict.1} parent=11 // pred_check
        %p146 = pneg %p99
      $region22: #{compressor_predict.1} parent=11 // pred_check_branch
        %148 = sbr.rel (%p146) target = $region24
      $region23: #{compressor_predict.1} parent=11 // pred_region
        _
      $region24: #{compressor_predict.1} parent=11 // pred_fallthru
        _
    $region12: #{compressor_predict.1} parent=5 // pred_fallthru
      _
    %p149 = scmp.lt.s32.totalorder %s10, 2
    // Predicated region
    $region25: #{compressor_predict.1} parent=5 // pred_check
      %p150 = pneg %p149
    $region26: #{compressor_predict.1} parent=5 // pred_check_branch
      %152 = sbr.rel (%p150) target = $region28
    $region27: #{compressor_predict.1} parent=5 // pred_region
      // Predicated region
      $region29: #{compressor_predict.1} parent=27 // pred_check
        %p153 = pneg %p30
      $region30: #{compressor_predict.1} parent=27 // pred_check_branch
        %155 = sbr.rel (%p153) target = $region32
      $region31: #{compressor_predict.1} parent=27 // pred_region
        %p156 = scmp.lt.s32.totalorder %s10, 1
        %s157 = scalar_select %p156, %s10, 1
        %s158 = smul.addr %s157, 12
        %s159 = smul.addr %s158, 8
        %s160 = scalar_lea.vmem %s0, %s159
      $region32: #{compressor_predict.1} parent=27 // pred_fallthru
        _
    $region28: #{compressor_predict.1} parent=5 // pred_fallthru
      _
    %p161 = scmp.le.s32.totalorder 1, %s10
    %p162 = scmp.lt.s32.totalorder %s10, 3
    %p163 = pnand %p161, %p162
    %p164 = pneg %p163
    // Predicated region
    $region33: #{compressor_predict.1} parent=5 // pred_check
      _
    $region34: #{compressor_predict.1} parent=5 // pred_check_branch
      %166 = sbr.rel (%p163) target = $region36
    $region35: #{compressor_predict.1} parent=5 // pred_region
      %s167 = ssub.s32 %s10, 1
      %p168 = scmp.lt.s32.totalorder %s15, 1
      %s169 = scalar_select %p168, %s15, 1
      %s170 = smul.addr %s169, 12
      %s171 = smul.addr %s170, 8
      %s172 = scalar_lea.vmem %s0, %s171
      %p173 = pneg %p36
      %p174 = pneg %p33
      %p175 = pneg %p57
      %p176 = pneg %p54
      %p177 = pneg %p78
      %p178 = pneg %p75
      %p179 = pneg %p99
      %p180 = pneg %p96
      %p181 = pneg %p125
      %p182 = pneg %p122
      %p183 = scmp.lt.s32.totalorder %s15, 1
      %s184 = scalar_select %p183, %s15, 1
      %s185 = smul.addr %s184, 12
      %s186 = smul.addr %s185, 8
      %s187 = scalar_lea.vmem %s4, %s186
      %p188 = scmp.lt.s32.totalorder %s15, 1
      %s189 = scalar_select %p188, %s15, 1
      %s190 = smul.addr %s189, 12
      %s191 = smul.addr %s190, 8
      %s192 = scalar_lea.vmem %s0, %s191
      %p193 = scmp.lt.s32.totalorder %s15, 1
      %s194 = scalar_select %p193, %s15, 1
      %s195 = smul.addr %s194, 12
      %s196 = smul.addr %s195, 8
      %s197 = scalar_lea.vmem %s4, %s196
      %v198 = vld [vmem:[%s192] sm:$0xff]
      %v199 = vld [vmem:[%s192 + $0x8] sm:$0xff]
      %v200 = vld [vmem:[%s192 + $0x10] sm:$0xff]
      %v201 = vld [vmem:[%s192 + $0x18] sm:$0xff]
      %v202 = vld [vmem:[%s192 + $0x20] sm:$0xff]
      %v203 = vld [vmem:[%s192 + $0x28] sm:$0xff]
      %v204 = vld [vmem:[%s192 + $0x30] sm:$0xff]
      %v205 = vld [vmem:[%s192 + $0x38] sm:$0xff]
      %v206 = vld [vmem:[%s192 + $0x40] sm:$0xff]
      %v207 = vld [vmem:[%s192 + $0x48] sm:$0xff]
      %v208 = vld [vmem:[%s192 + $0x50] sm:$0xff]
      %v209 = vld [vmem:[%s192 + $0x58] sm:$0xff]
      %210 = vst [vmem:[#allocation2] sm:$0xff] %v198
      %211 = vst [vmem:[#allocation2 + $0x8] sm:$0xff] %v199
      %212 = vst [vmem:[#allocation2 + $0x10] sm:$0xff] %v200
      %213 = vst [vmem:[#allocation2 + $0x18] sm:$0xff] %v201
      %214 = vst [vmem:[#allocation2 + $0x20] sm:$0xff] %v202
      %215 = vst [vmem:[#allocation2 + $0x28] sm:$0xff] %v203
      %216 = vst [vmem:[#allocation2 + $0x30] sm:$0xff] %v204
      %217 = vst [vmem:[#allocation2 + $0x38] sm:$0xff] %v205
      %218 = vst [vmem:[#allocation2 + $0x40] sm:$0xff] %v206
      %219 = vst [vmem:[#allocation2 + $0x48] sm:$0xff] %v207
      %220 = vst [vmem:[#allocation2 + $0x50] sm:$0xff] %v208
      %221 = vst [vmem:[#allocation2 + $0x58] sm:$0xff] %v209
      %222 = vst [vmem:[#allocation2 + $0x60] sm:$0xff] 0.0
      %v223 = vld [vmem:[%s3] sm:$0xff]
      %v224 = vld [vmem:[%s3 + $0x8] sm:$0xf]
      %v225 = vld [vmem:[#allocation2] sm:$0xff]
      %v226 = vld [vmem:[#allocation2 + $0x8] sm:$0xff]
      %v227 = vld [vmem:[#allocation2 + $0x10] sm:$0xff]
      %v228 = vld [vmem:[#allocation2 + $0x18] sm:$0xff]
      %v229 = vld [vmem:[#allocation2 + $0x20] sm:$0xff]
      %v230 = vld [vmem:[#allocation2 + $0x28] sm:$0xff]
      %v231 = vld [vmem:[#allocation2 + $0x30] sm:$0xff]
      %v232 = vld [vmem:[#allocation2 + $0x38] sm:$0xff]
      %v233 = vld [vmem:[#allocation2 + $0x40] sm:$0xff]
      %v234 = vld [vmem:[#allocation2 + $0x48] sm:$0xff]
      %v235 = vld [vmem:[#allocation2 + $0x50] sm:$0xff]
      %v236 = vld [vmem:[#allocation2 + $0x58] sm:$0xff]
      %237 = vst [vmem:[#allocation3] sm:$0xff] %v225
      %238 = vst [vmem:[#allocation3 + $0x8] sm:$0xff] %v226
      %239 = vst [vmem:[#allocation3 + $0x10] sm:$0xff] %v227
      %240 = vst [vmem:[#allocation3 + $0x18] sm:$0xff] %v228
      %241 = vst [vmem:[#allocation3 + $0x20] sm:$0xff] %v229
      %242 = vst [vmem:[#allocation3 + $0x28] sm:$0xff] %v230
      %243 = vst [vmem:[#allocation3 + $0x30] sm:$0xff] %v231
      %244 = vst [vmem:[#allocation3 + $0x38] sm:$0xff] %v232
      %245 = vst [vmem:[#allocation3 + $0x40] sm:$0xff] %v233
      %246 = vst [vmem:[#allocation3 + $0x48] sm:$0xff] %v234
      %247 = vst [vmem:[#allocation3 + $0x50] sm:$0xff] %v235
      %248 = vst [vmem:[#allocation3 + $0x58] sm:$0xff] %v236
      %v249 = vld [vmem:[#allocation2] sm:$0xff]
      %v250 = vld [vmem:[#allocation2 + $0x8] sm:$0xff]
      %v251 = vld [vmem:[#allocation2 + $0x10] sm:$0xff]
      %v252 = vld [vmem:[#allocation2 + $0x18] sm:$0xff]
      %v253 = vld [vmem:[#allocation2 + $0x20] sm:$0xff]
      %v254 = vld [vmem:[#allocation2 + $0x28] sm:$0xff]
      %v255 = vld [vmem:[#allocation2 + $0x30] sm:$0xff]
      %v256 = vld [vmem:[#allocation2 + $0x38] sm:$0xff]
      %v257 = vld [vmem:[#allocation2 + $0x40] sm:$0xff]
      %v258 = vld [vmem:[#allocation2 + $0x48] sm:$0xff]
      %v259 = vld [vmem:[#allocation2 + $0x50] sm:$0xff]
      %v260 = vld [vmem:[#allocation2 + $0x58] sm:$0xff]
      %v261 = vld [vmem:[#allocation2 + $0x60] sm:$0xff]
      %275 = vrot.lane.b32.xlu0 %v249, 127
      %v276 = vpop.permute.xlu0 %275
      %277 = vrot.lane.b32.xlu0 %v250, 127
      %v278 = vpop.permute.xlu0 %277
      %279 = vrot.lane.b32.xlu0 %v251, 127
      %v280 = vpop.permute.xlu0 %279
      %281 = vrot.lane.b32.xlu0 %v252, 127
      %v282 = vpop.permute.xlu0 %281
      %283 = vrot.lane.b32.xlu0 %v253, 127
      %v284 = vpop.permute.xlu0 %283
      %285 = vrot.lane.b32.xlu0 %v254, 127
      %v286 = vpop.permute.xlu0 %285
      %287 = vrot.lane.b32.xlu0 %v255, 127
      %v288 = vpop.permute.xlu0 %287
      %289 = vrot.lane.b32.xlu0 %v256, 127
      %v290 = vpop.permute.xlu0 %289
      %291 = vrot.lane.b32.xlu0 %v257, 127
      %v292 = vpop.permute.xlu0 %291
      %293 = vrot.lane.b32.xlu0 %v258, 127
      %v294 = vpop.permute.xlu0 %293
      %295 = vrot.lane.b32.xlu0 %v259, 127
      %v296 = vpop.permute.xlu0 %295
      %297 = vrot.lane.b32.xlu0 %v260, 127
      %v298 = vpop.permute.xlu0 %297
      %299 = vrot.lane.b32.xlu0 %v261, 127
      %v300 = vpop.permute.xlu0 %299
      %vm301 = vcmask 1039360
      %v302 = vsel %vm301, %v276, %v278
      %v303 = vsel %vm301, %v278, %v280
      %v304 = vsel %vm301, %v280, %v282
      %v305 = vsel %vm301, %v282, %v284
      %v306 = vsel %vm301, %v284, %v286
      %v307 = vsel %vm301, %v286, %v288
      %v308 = vsel %vm301, %v288, %v290
      %v309 = vsel %vm301, %v290, %v292
      %v310 = vsel %vm301, %v292, %v294
      %v311 = vsel %vm301, %v294, %v296
      %v312 = vsel %vm301, %v296, %v298
      %v313 = vsel %vm301, %v298, %v300
      %326 = vst [vmem:[#allocation3 + $0x60] sm:$0xff] %v302
      %327 = vst [vmem:[#allocation3 + $0x68] sm:$0xff] %v303
      %328 = vst [vmem:[#allocation3 + $0x70] sm:$0xff] %v304
      %329 = vst [vmem:[#allocation3 + $0x78] sm:$0xff] %v305
      %330 = vst [vmem:[#allocation3 + $0x80] sm:$0xff] %v306
      %331 = vst [vmem:[#allocation3 + $0x88] sm:$0xff] %v307
      %332 = vst [vmem:[#allocation3 + $0x90] sm:$0xff] %v308
      %333 = vst [vmem:[#allocation3 + $0x98] sm:$0xff] %v309
      %334 = vst [vmem:[#allocation3 + $0xa0] sm:$0xff] %v310
      %335 = vst [vmem:[#allocation3 + $0xa8] sm:$0xff] %v311
      %336 = vst [vmem:[#allocation3 + $0xb0] sm:$0xff] %v312
      %337 = vst [vmem:[#allocation3 + $0xb8] sm:$0xff] %v313
      %v338 = vld [vmem:[#allocation2] sm:$0xff]
      %v339 = vld [vmem:[#allocation2 + $0x8] sm:$0xff]
      %v340 = vld [vmem:[#allocation2 + $0x10] sm:$0xff]
      %v341 = vld [vmem:[#allocation2 + $0x18] sm:$0xff]
      %v342 = vld [vmem:[#allocation2 + $0x20] sm:$0xff]
      %v343 = vld [vmem:[#allocation2 + $0x28] sm:$0xff]
      %v344 = vld [vmem:[#allocation2 + $0x30] sm:$0xff]
      %v345 = vld [vmem:[#allocation2 + $0x38] sm:$0xff]
      %v346 = vld [vmem:[#allocation2 + $0x40] sm:$0xff]
      %v347 = vld [vmem:[#allocation2 + $0x48] sm:$0xff]
      %v348 = vld [vmem:[#allocation2 + $0x50] sm:$0xff]
      %v349 = vld [vmem:[#allocation2 + $0x58] sm:$0xff]
      %v350 = vld [vmem:[#allocation2 + $0x60] sm:$0xff]
      %364 = vrot.lane.b32.xlu0 %v338, 126
      %v365 = vpop.permute.xlu0 %364
      %366 = vrot.lane.b32.xlu0 %v339, 126
      %v367 = vpop.permute.xlu0 %366
      %368 = vrot.lane.b32.xlu0 %v340, 126
      %v369 = vpop.permute.xlu0 %368
      %370 = vrot.lane.b32.xlu0 %v341, 126
      %v371 = vpop.permute.xlu0 %370
      %372 = vrot.lane.b32.xlu0 %v342, 126
      %v373 = vpop.permute.xlu0 %372
      %374 = vrot.lane.b32.xlu0 %v343, 126
      %v375 = vpop.permute.xlu0 %374
      %376 = vrot.lane.b32.xlu0 %v344, 126
      %v377 = vpop.permute.xlu0 %376
      %378 = vrot.lane.b32.xlu0 %v345, 126
      %v379 = vpop.permute.xlu0 %378
      %380 = vrot.lane.b32.xlu0 %v346, 126
      %v381 = vpop.permute.xlu0 %380
      %382 = vrot.lane.b32.xlu0 %v347, 126
      %v383 = vpop.permute.xlu0 %382
      %384 = vrot.lane.b32.xlu0 %v348, 126
      %v385 = vpop.permute.xlu0 %384
      %386 = vrot.lane.b32.xlu0 %v349, 126
      %v387 = vpop.permute.xlu0 %386
      %388 = vrot.lane.b32.xlu0 %v350, 126
      %v389 = vpop.permute.xlu0 %388
      %vm390 = vcmask 1031168
      %v391 = vsel %vm390, %v365, %v367
      %v392 = vsel %vm390, %v367, %v369
      %v393 = vsel %vm390, %v369, %v371
      %v394 = vsel %vm390, %v371, %v373
      %v395 = vsel %vm390, %v373, %v375
      %v396 = vsel %vm390, %v375, %v377
      %v397 = vsel %vm390, %v377, %v379
      %v398 = vsel %vm390, %v379, %v381
      %v399 = vsel %vm390, %v381, %v383
      %v400 = vsel %vm390, %v383, %v385
      %v401 = vsel %vm390, %v385, %v387
      %v402 = vsel %vm390, %v387, %v389
      %415 = vst [vmem:[#allocation3 + $0xc0] sm:$0xff] %v391
      %416 = vst [vmem:[#allocation3 + $0xc8] sm:$0xff] %v392
      %417 = vst [vmem:[#allocation3 + $0xd0] sm:$0xff] %v393
      %418 = vst [vmem:[#allocation3 + $0xd8] sm:$0xff] %v394
      %419 = vst [vmem:[#allocation3 + $0xe0] sm:$0xff] %v395
      %420 = vst [vmem:[#allocation3 + $0xe8] sm:$0xff] %v396
      %421 = vst [vmem:[#allocation3 + $0xf0] sm:$0xff] %v397
      %422 = vst [vmem:[#allocation3 + $0xf8] sm:$0xff] %v398
      %423 = vst [vmem:[#allocation3 + $0x100] sm:$0xff] %v399
      %424 = vst [vmem:[#allocation3 + $0x108] sm:$0xff] %v400
      %425 = vst [vmem:[#allocation3 + $0x110] sm:$0xff] %v401
      %426 = vst [vmem:[#allocation3 + $0x118] sm:$0xff] %v402
      %v427 = vld [vmem:[#allocation2] sm:$0xff]
      %v428 = vld [vmem:[#allocation2 + $0x8] sm:$0xff]
      %v429 = vld [vmem:[#allocation2 + $0x10] sm:$0xff]
      %v430 = vld [vmem:[#allocation2 + $0x18] sm:$0xff]
      %v431 = vld [vmem:[#allocation2 + $0x20] sm:$0xff]
      %v432 = vld [vmem:[#allocation2 + $0x28] sm:$0xff]
      %v433 = vld [vmem:[#allocation2 + $0x30] sm:$0xff]
      %v434 = vld [vmem:[#allocation2 + $0x38] sm:$0xff]
      %v435 = vld [vmem:[#allocation2 + $0x40] sm:$0xff]
      %v436 = vld [vmem:[#allocation2 + $0x48] sm:$0xff]
      %v437 = vld [vmem:[#allocation2 + $0x50] sm:$0xff]
      %v438 = vld [vmem:[#allocation2 + $0x58] sm:$0xff]
      %v439 = vld [vmem:[#allocation2 + $0x60] sm:$0xff]
      %453 = vrot.lane.b32.xlu0 %v427, 110
      %v454 = vpop.permute.xlu0 %453
      %455 = vrot.lane.b32.xlu0 %v428, 110
      %v456 = vpop.permute.xlu0 %455
      %457 = vrot.lane.b32.xlu0 %v429, 110
      %v458 = vpop.permute.xlu0 %457
      %459 = vrot.lane.b32.xlu0 %v430, 110
      %v460 = vpop.permute.xlu0 %459
      %461 = vrot.lane.b32.xlu0 %v431, 110
      %v462 = vpop.permute.xlu0 %461
      %463 = vrot.lane.b32.xlu0 %v432, 110
      %v464 = vpop.permute.xlu0 %463
      %465 = vrot.lane.b32.xlu0 %v433, 110
      %v466 = vpop.permute.xlu0 %465
      %467 = vrot.lane.b32.xlu0 %v434, 110
      %v468 = vpop.permute.xlu0 %467
      %469 = vrot.lane.b32.xlu0 %v435, 110
      %v470 = vpop.permute.xlu0 %469
      %471 = vrot.lane.b32.xlu0 %v436, 110
      %v472 = vpop.permute.xlu0 %471
      %473 = vrot.lane.b32.xlu0 %v437, 110
      %v474 = vpop.permute.xlu0 %473
      %475 = vrot.lane.b32.xlu0 %v438, 110
      %v476 = vpop.permute.xlu0 %475
      %477 = vrot.lane.b32.xlu0 %v439, 110
      %v478 = vpop.permute.xlu0 %477
      %vm479 = vcmask 900096
      %v480 = vsel %vm479, %v454, %v456
      %v481 = vsel %vm479, %v456, %v458
      %v482 = vsel %vm479, %v458, %v460
      %v483 = vsel %vm479, %v460, %v462
      %v484 = vsel %vm479, %v462, %v464
      %v485 = vsel %vm479, %v464, %v466
      %v486 = vsel %vm479, %v466, %v468
      %v487 = vsel %vm479, %v468, %v470
      %v488 = vsel %vm479, %v470, %v472
      %v489 = vsel %vm479, %v472, %v474
      %v490 = vsel %vm479, %v474, %v476
      %v491 = vsel %vm479, %v476, %v478
      %504 = vst [vmem:[#allocation3 + $0x120] sm:$0xff] %v480
      %505 = vst [vmem:[#allocation3 + $0x128] sm:$0xff] %v481
      %506 = vst [vmem:[#allocation3 + $0x130] sm:$0xff] %v482
      %507 = vst [vmem:[#allocation3 + $0x138] sm:$0xff] %v483
      %508 = vst [vmem:[#allocation3 + $0x140] sm:$0xff] %v484
      %509 = vst [vmem:[#allocation3 + $0x148] sm:$0xff] %v485
      %510 = vst [vmem:[#allocation3 + $0x150] sm:$0xff] %v486
      %511 = vst [vmem:[#allocation3 + $0x158] sm:$0xff] %v487
      %512 = vst [vmem:[#allocation3 + $0x160] sm:$0xff] %v488
      %513 = vst [vmem:[#allocation3 + $0x168] sm:$0xff] %v489
      %514 = vst [vmem:[#allocation3 + $0x170] sm:$0xff] %v490
      %515 = vst [vmem:[#allocation3 + $0x178] sm:$0xff] %v491
      %v516 = vld [vmem:[#allocation2] sm:$0xff]
      %v517 = vld [vmem:[#allocation2 + $0x8] sm:$0xff]
      %v518 = vld [vmem:[#allocation2 + $0x10] sm:$0xff]
      %v519 = vld [vmem:[#allocation2 + $0x18] sm:$0xff]
      %v520 = vld [vmem:[#allocation2 + $0x20] sm:$0xff]
      %v521 = vld [vmem:[#allocation2 + $0x28] sm:$0xff]
      %v522 = vld [vmem:[#allocation2 + $0x30] sm:$0xff]
      %v523 = vld [vmem:[#allocation2 + $0x38] sm:$0xff]
      %v524 = vld [vmem:[#allocation2 + $0x40] sm:$0xff]
      %v525 = vld [vmem:[#allocation2 + $0x48] sm:$0xff]
      %v526 = vld [vmem:[#allocation2 + $0x50] sm:$0xff]
      %v527 = vld [vmem:[#allocation2 + $0x58] sm:$0xff]
      %v528 = vld [vmem:[#allocation2 + $0x60] sm:$0xff]
      %542 = vrot.lane.b32.xlu0 %v516, 109
      %v543 = vpop.permute.xlu0 %542
      %544 = vrot.lane.b32.xlu0 %v517, 109
      %v545 = vpop.permute.xlu0 %544
      %546 = vrot.lane.b32.xlu0 %v518, 109
      %v547 = vpop.permute.xlu0 %546
      %548 = vrot.lane.b32.xlu0 %v519, 109
      %v549 = vpop.permute.xlu0 %548
      %550 = vrot.lane.b32.xlu0 %v520, 109
      %v551 = vpop.permute.xlu0 %550
      %552 = vrot.lane.b32.xlu0 %v521, 109
      %v553 = vpop.permute.xlu0 %552
      %554 = vrot.lane.b32.xlu0 %v522, 109
      %v555 = vpop.permute.xlu0 %554
      %556 = vrot.lane.b32.xlu0 %v523, 109
      %v557 = vpop.permute.xlu0 %556
      %558 = vrot.lane.b32.xlu0 %v524, 109
      %v559 = vpop.permute.xlu0 %558
      %560 = vrot.lane.b32.xlu0 %v525, 109
      %v561 = vpop.permute.xlu0 %560
      %562 = vrot.lane.b32.xlu0 %v526, 109
      %v563 = vpop.permute.xlu0 %562
      %564 = vrot.lane.b32.xlu0 %v527, 109
      %v565 = vpop.permute.xlu0 %564
      %566 = vrot.lane.b32.xlu0 %v528, 109
      %v567 = vpop.permute.xlu0 %566
      %vm568 = vcmask 891904
      %v569 = vsel %vm568, %v543, %v545
      %v570 = vsel %vm568, %v545, %v547
      %v571 = vsel %vm568, %v547, %v549
      %v572 = vsel %vm568, %v549, %v551
      %v573 = vsel %vm568, %v551, %v553
      %v574 = vsel %vm568, %v553, %v555
      %v575 = vsel %vm568, %v555, %v557
      %v576 = vsel %vm568, %v557, %v559
      %v577 = vsel %vm568, %v559, %v561
      %v578 = vsel %vm568, %v561, %v563
      %v579 = vsel %vm568, %v563, %v565
      %v580 = vsel %vm568, %v565, %v567
      %593 = vst [vmem:[#allocation3 + $0x180] sm:$0xff] %v569
      %594 = vst [vmem:[#allocation3 + $0x188] sm:$0xff] %v570
      %595 = vst [vmem:[#allocation3 + $0x190] sm:$0xff] %v571
      %596 = vst [vmem:[#allocation3 + $0x198] sm:$0xff] %v572
      %597 = vst [vmem:[#allocation3 + $0x1a0] sm:$0xff] %v573
      %598 = vst [vmem:[#allocation3 + $0x1a8] sm:$0xff] %v574
      %599 = vst [vmem:[#allocation3 + $0x1b0] sm:$0xff] %v575
      %600 = vst [vmem:[#allocation3 + $0x1b8] sm:$0xff] %v576
      %601 = vst [vmem:[#allocation3 + $0x1c0] sm:$0xff] %v577
      %602 = vst [vmem:[#allocation3 + $0x1c8] sm:$0xff] %v578
      %603 = vst [vmem:[#allocation3 + $0x1d0] sm:$0xff] %v579
      %604 = vst [vmem:[#allocation3 + $0x1d8] sm:$0xff] %v580
      %v605 = vld [vmem:[#allocation2] sm:$0xff]
      %v606 = vld [vmem:[#allocation2 + $0x8] sm:$0xff]
      %v607 = vld [vmem:[#allocation2 + $0x10] sm:$0xff]
      %v608 = vld [vmem:[#allocation2 + $0x18] sm:$0xff]
      %v609 = vld [vmem:[#allocation2 + $0x20] sm:$0xff]
      %v610 = vld [vmem:[#allocation2 + $0x28] sm:$0xff]
      %v611 = vld [vmem:[#allocation2 + $0x30] sm:$0xff]
      %v612 = vld [vmem:[#allocation2 + $0x38] sm:$0xff]
      %v613 = vld [vmem:[#allocation2 + $0x40] sm:$0xff]
      %v614 = vld [vmem:[#allocation2 + $0x48] sm:$0xff]
      %v615 = vld [vmem:[#allocation2 + $0x50] sm:$0xff]
      %v616 = vld [vmem:[#allocation2 + $0x58] sm:$0xff]
      %v617 = vld [vmem:[#allocation2 + $0x60] sm:$0xff]
      %631 = vrot.lane.b32.xlu0 %v605, 108
      %v632 = vpop.permute.xlu0 %631
      %633 = vrot.lane.b32.xlu0 %v606, 108
      %v634 = vpop.permute.xlu0 %633
      %635 = vrot.lane.b32.xlu0 %v607, 108
      %v636 = vpop.permute.xlu0 %635
      %637 = vrot.lane.b32.xlu0 %v608, 108
      %v638 = vpop.permute.xlu0 %637
      %639 = vrot.lane.b32.xlu0 %v609, 108
      %v640 = vpop.permute.xlu0 %639
      %641 = vrot.lane.b32.xlu0 %v610, 108
      %v642 = vpop.permute.xlu0 %641
      %643 = vrot.lane.b32.xlu0 %v611, 108
      %v644 = vpop.permute.xlu0 %643
      %645 = vrot.lane.b32.xlu0 %v612, 108
      %v646 = vpop.permute.xlu0 %645
      %647 = vrot.lane.b32.xlu0 %v613, 108
      %v648 = vpop.permute.xlu0 %647
      %649 = vrot.lane.b32.xlu0 %v614, 108
      %v650 = vpop.permute.xlu0 %649
      %651 = vrot.lane.b32.xlu0 %v615, 108
      %v652 = vpop.permute.xlu0 %651
      %653 = vrot.lane.b32.xlu0 %v616, 108
      %v654 = vpop.permute.xlu0 %653
      %655 = vrot.lane.b32.xlu0 %v617, 108
      %v656 = vpop.permute.xlu0 %655
      %vm657 = vcmask 883712
      %v658 = vsel %vm657, %v632, %v634
      %v659 = vsel %vm657, %v634, %v636
      %v660 = vsel %vm657, %v636, %v638
      %v661 = vsel %vm657, %v638, %v640
      %v662 = vsel %vm657, %v640, %v642
      %v663 = vsel %vm657, %v642, %v644
      %v664 = vsel %vm657, %v644, %v646
      %v665 = vsel %vm657, %v646, %v648
      %v666 = vsel %vm657, %v648, %v650
      %v667 = vsel %vm657, %v650, %v652
      %v668 = vsel %vm657, %v652, %v654
      %v669 = vsel %vm657, %v654, %v656
      %682 = vst [vmem:[#allocation3 + $0x1e0] sm:$0xff] %v658
      %683 = vst [vmem:[#allocation3 + $0x1e8] sm:$0xff] %v659
      %684 = vst [vmem:[#allocation3 + $0x1f0] sm:$0xff] %v660
      %685 = vst [vmem:[#allocation3 + $0x1f8] sm:$0xff] %v661
      %686 = vst [vmem:[#allocation3 + $0x200] sm:$0xff] %v662
      %687 = vst [vmem:[#allocation3 + $0x208] sm:$0xff] %v663
      %688 = vst [vmem:[#allocation3 + $0x210] sm:$0xff] %v664
      %689 = vst [vmem:[#allocation3 + $0x218] sm:$0xff] %v665
      %690 = vst [vmem:[#allocation3 + $0x220] sm:$0xff] %v666
      %691 = vst [vmem:[#allocation3 + $0x228] sm:$0xff] %v667
      %692 = vst [vmem:[#allocation3 + $0x230] sm:$0xff] %v668
      %693 = vst [vmem:[#allocation3 + $0x238] sm:$0xff] %v669
      %v694 = vld [vmem:[#allocation2] sm:$0xff]
      %v695 = vld [vmem:[#allocation2 + $0x8] sm:$0xff]
      %v696 = vld [vmem:[#allocation2 + $0x10] sm:$0xff]
      %v697 = vld [vmem:[#allocation2 + $0x18] sm:$0xff]
      %v698 = vld [vmem:[#allocation2 + $0x20] sm:$0xff]
      %v699 = vld [vmem:[#allocation2 + $0x28] sm:$0xff]
      %v700 = vld [vmem:[#allocation2 + $0x30] sm:$0xff]
      %v701 = vld [vmem:[#allocation2 + $0x38] sm:$0xff]
      %v702 = vld [vmem:[#allocation2 + $0x40] sm:$0xff]
      %v703 = vld [vmem:[#allocation2 + $0x48] sm:$0xff]
      %v704 = vld [vmem:[#allocation2 + $0x50] sm:$0xff]
      %v705 = vld [vmem:[#allocation2 + $0x58] sm:$0xff]
      %v706 = vld [vmem:[#allocation2 + $0x60] sm:$0xff]
      %720 = vrot.lane.b32.xlu0 %v694, 92
      %v721 = vpop.permute.xlu0 %720
      %722 = vrot.lane.b32.xlu0 %v695, 92
      %v723 = vpop.permute.xlu0 %722
      %724 = vrot.lane.b32.xlu0 %v696, 92
      %v725 = vpop.permute.xlu0 %724
      %726 = vrot.lane.b32.xlu0 %v697, 92
      %v727 = vpop.permute.xlu0 %726
      %728 = vrot.lane.b32.xlu0 %v698, 92
      %v729 = vpop.permute.xlu0 %728
      %730 = vrot.lane.b32.xlu0 %v699, 92
      %v731 = vpop.permute.xlu0 %730
      %732 = vrot.lane.b32.xlu0 %v700, 92
      %v733 = vpop.permute.xlu0 %732
      %734 = vrot.lane.b32.xlu0 %v701, 92
      %v735 = vpop.permute.xlu0 %734
      %736 = vrot.lane.b32.xlu0 %v702, 92
      %v737 = vpop.permute.xlu0 %736
      %738 = vrot.lane.b32.xlu0 %v703, 92
      %v739 = vpop.permute.xlu0 %738
      %740 = vrot.lane.b32.xlu0 %v704, 92
      %v741 = vpop.permute.xlu0 %740
      %742 = vrot.lane.b32.xlu0 %v705, 92
      %v743 = vpop.permute.xlu0 %742
      %744 = vrot.lane.b32.xlu0 %v706, 92
      %v745 = vpop.permute.xlu0 %744
      %vm746 = vcmask 752640
      %v747 = vsel %vm746, %v721, %v723
      %v748 = vsel %vm746, %v723, %v725
      %v749 = vsel %vm746, %v725, %v727
      %v750 = vsel %vm746, %v727, %v729
      %v751 = vsel %vm746, %v729, %v731
      %v752 = vsel %vm746, %v731, %v733
      %v753 = vsel %vm746, %v733, %v735
      %v754 = vsel %vm746, %v735, %v737
      %v755 = vsel %vm746, %v737, %v739
      %v756 = vsel %vm746, %v739, %v741
      %v757 = vsel %vm746, %v741, %v743
      %v758 = vsel %vm746, %v743, %v745
      %771 = vst [vmem:[#allocation3 + $0x240] sm:$0xff] %v747
      %772 = vst [vmem:[#allocation3 + $0x248] sm:$0xff] %v748
      %773 = vst [vmem:[#allocation3 + $0x250] sm:$0xff] %v749
      %774 = vst [vmem:[#allocation3 + $0x258] sm:$0xff] %v750
      %775 = vst [vmem:[#allocation3 + $0x260] sm:$0xff] %v751
      %776 = vst [vmem:[#allocation3 + $0x268] sm:$0xff] %v752
      %777 = vst [vmem:[#allocation3 + $0x270] sm:$0xff] %v753
      %778 = vst [vmem:[#allocation3 + $0x278] sm:$0xff] %v754
      %779 = vst [vmem:[#allocation3 + $0x280] sm:$0xff] %v755
      %780 = vst [vmem:[#allocation3 + $0x288] sm:$0xff] %v756
      %781 = vst [vmem:[#allocation3 + $0x290] sm:$0xff] %v757
      %782 = vst [vmem:[#allocation3 + $0x298] sm:$0xff] %v758
      %v783 = vld [vmem:[#allocation2] sm:$0xff]
      %v784 = vld [vmem:[#allocation2 + $0x8] sm:$0xff]
      %v785 = vld [vmem:[#allocation2 + $0x10] sm:$0xff]
      %v786 = vld [vmem:[#allocation2 + $0x18] sm:$0xff]
      %v787 = vld [vmem:[#allocation2 + $0x20] sm:$0xff]
      %v788 = vld [vmem:[#allocation2 + $0x28] sm:$0xff]
      %v789 = vld [vmem:[#allocation2 + $0x30] sm:$0xff]
      %v790 = vld [vmem:[#allocation2 + $0x38] sm:$0xff]
      %v791 = vld [vmem:[#allocation2 + $0x40] sm:$0xff]
      %v792 = vld [vmem:[#allocation2 + $0x48] sm:$0xff]
      %v793 = vld [vmem:[#allocation2 + $0x50] sm:$0xff]
      %v794 = vld [vmem:[#allocation2 + $0x58] sm:$0xff]
      %v795 = vld [vmem:[#allocation2 + $0x60] sm:$0xff]
      %809 = vrot.lane.b32.xlu0 %v783, 91
      %v810 = vpop.permute.xlu0 %809
      %811 = vrot.lane.b32.xlu0 %v784, 91
      %v812 = vpop.permute.xlu0 %811
      %813 = vrot.lane.b32.xlu0 %v785, 91
      %v814 = vpop.permute.xlu0 %813
      %815 = vrot.lane.b32.xlu0 %v786, 91
      %v816 = vpop.permute.xlu0 %815
      %817 = vrot.lane.b32.xlu0 %v787, 91
      %v818 = vpop.permute.xlu0 %817
      %819 = vrot.lane.b32.xlu0 %v788, 91
      %v820 = vpop.permute.xlu0 %819
      %821 = vrot.lane.b32.xlu0 %v789, 91
      %v822 = vpop.permute.xlu0 %821
      %823 = vrot.lane.b32.xlu0 %v790, 91
      %v824 = vpop.permute.xlu0 %823
      %825 = vrot.lane.b32.xlu0 %v791, 91
      %v826 = vpop.permute.xlu0 %825
      %827 = vrot.lane.b32.xlu0 %v792, 91
      %v828 = vpop.permute.xlu0 %827
      %829 = vrot.lane.b32.xlu0 %v793, 91
      %v830 = vpop.permute.xlu0 %829
      %831 = vrot.lane.b32.xlu0 %v794, 91
      %v832 = vpop.permute.xlu0 %831
      %833 = vrot.lane.b32.xlu0 %v795, 91
      %v834 = vpop.permute.xlu0 %833
      %vm835 = vcmask 744448
      %v836 = vsel %vm835, %v810, %v812
      %v837 = vsel %vm835, %v812, %v814
      %v838 = vsel %vm835, %v814, %v816
      %v839 = vsel %vm835, %v816, %v818
      %v840 = vsel %vm835, %v818, %v820
      %v841 = vsel %vm835, %v820, %v822
      %v842 = vsel %vm835, %v822, %v824
      %v843 = vsel %vm835, %v824, %v826
      %v844 = vsel %vm835, %v826, %v828
      %v845 = vsel %vm835, %v828, %v830
      %v846 = vsel %vm835, %v830, %v832
      %v847 = vsel %vm835, %v832, %v834
      %860 = vst [vmem:[#allocation3 + $0x2a0] sm:$0xff] %v836
      %861 = vst [vmem:[#allocation3 + $0x2a8] sm:$0xff] %v837
      %862 = vst [vmem:[#allocation3 + $0x2b0] sm:$0xff] %v838
      %863 = vst [vmem:[#allocation3 + $0x2b8] sm:$0xff] %v839
      %864 = vst [vmem:[#allocation3 + $0x2c0] sm:$0xff] %v840
      %865 = vst [vmem:[#allocation3 + $0x2c8] sm:$0xff] %v841
      %866 = vst [vmem:[#allocation3 + $0x2d0] sm:$0xff] %v842
      %867 = vst [vmem:[#allocation3 + $0x2d8] sm:$0xff] %v843
      %868 = vst [vmem:[#allocation3 + $0x2e0] sm:$0xff] %v844
      %869 = vst [vmem:[#allocation3 + $0x2e8] sm:$0xff] %v845
      %870 = vst [vmem:[#allocation3 + $0x2f0] sm:$0xff] %v846
      %871 = vst [vmem:[#allocation3 + $0x2f8] sm:$0xff] %v847
      %v872 = vld [vmem:[#allocation2] sm:$0xff]
      %v873 = vld [vmem:[#allocation2 + $0x8] sm:$0xff]
      %v874 = vld [vmem:[#allocation2 + $0x10] sm:$0xff]
      %v875 = vld [vmem:[#allocation2 + $0x18] sm:$0xff]
      %v876 = vld [vmem:[#allocation2 + $0x20] sm:$0xff]
      %v877 = vld [vmem:[#allocation2 + $0x28] sm:$0xff]
      %v878 = vld [vmem:[#allocation2 + $0x30] sm:$0xff]
      %v879 = vld [vmem:[#allocation2 + $0x38] sm:$0xff]
      %v880 = vld [vmem:[#allocation2 + $0x40] sm:$0xff]
      %v881 = vld [vmem:[#allocation2 + $0x48] sm:$0xff]
      %v882 = vld [vmem:[#allocation2 + $0x50] sm:$0xff]
      %v883 = vld [vmem:[#allocation2 + $0x58] sm:$0xff]
      %v884 = vld [vmem:[#allocation2 + $0x60] sm:$0xff]
      %898 = vrot.lane.b32.xlu0 %v872, 90
      %v899 = vpop.permute.xlu0 %898
      %900 = vrot.lane.b32.xlu0 %v873, 90
      %v901 = vpop.permute.xlu0 %900
      %902 = vrot.lane.b32.xlu0 %v874, 90
      %v903 = vpop.permute.xlu0 %902
      %904 = vrot.lane.b32.xlu0 %v875, 90
      %v905 = vpop.permute.xlu0 %904
      %906 = vrot.lane.b32.xlu0 %v876, 90
      %v907 = vpop.permute.xlu0 %906
      %908 = vrot.lane.b32.xlu0 %v877, 90
      %v909 = vpop.permute.xlu0 %908
      %910 = vrot.lane.b32.xlu0 %v878, 90
      %v911 = vpop.permute.xlu0 %910
      %912 = vrot.lane.b32.xlu0 %v879, 90
      %v913 = vpop.permute.xlu0 %912
      %914 = vrot.lane.b32.xlu0 %v880, 90
      %v915 = vpop.permute.xlu0 %914
      %916 = vrot.lane.b32.xlu0 %v881, 90
      %v917 = vpop.permute.xlu0 %916
      %918 = vrot.lane.b32.xlu0 %v882, 90
      %v919 = vpop.permute.xlu0 %918
      %920 = vrot.lane.b32.xlu0 %v883, 90
      %v921 = vpop.permute.xlu0 %920
      %922 = vrot.lane.b32.xlu0 %v884, 90
      %v923 = vpop.permute.xlu0 %922
      %vm924 = vcmask 736256
      %v925 = vsel %vm924, %v899, %v901
      %v926 = vsel %vm924, %v901, %v903
      %v927 = vsel %vm924, %v903, %v905
      %v928 = vsel %vm924, %v905, %v907
      %v929 = vsel %vm924, %v907, %v909
      %v930 = vsel %vm924, %v909, %v911
      %v931 = vsel %vm924, %v911, %v913
      %v932 = vsel %vm924, %v913, %v915
      %v933 = vsel %vm924, %v915, %v917
      %v934 = vsel %vm924, %v917, %v919
      %v935 = vsel %vm924, %v919, %v921
      %v936 = vsel %vm924, %v921, %v923
      %949 = vst [vmem:[#allocation3 + $0x300] sm:$0xff] %v925
      %950 = vst [vmem:[#allocation3 + $0x308] sm:$0xff] %v926
      %951 = vst [vmem:[#allocation3 + $0x310] sm:$0xff] %v927
      %952 = vst [vmem:[#allocation3 + $0x318] sm:$0xff] %v928
      %953 = vst [vmem:[#allocation3 + $0x320] sm:$0xff] %v929
      %954 = vst [vmem:[#allocation3 + $0x328] sm:$0xff] %v930
      %955 = vst [vmem:[#allocation3 + $0x330] sm:$0xff] %v931
      %956 = vst [vmem:[#allocation3 + $0x338] sm:$0xff] %v932
      %957 = vst [vmem:[#allocation3 + $0x340] sm:$0xff] %v933
      %958 = vst [vmem:[#allocation3 + $0x348] sm:$0xff] %v934
      %959 = vst [vmem:[#allocation3 + $0x350] sm:$0xff] %v935
      %960 = vst [vmem:[#allocation3 + $0x358] sm:$0xff] %v936
      %v961 = vld [vmem:[%s1] sm:$0xff]
      %v962 = vld [vmem:[#allocation3] sm:$0xff]
      %v963 = vld [vmem:[#allocation3 + $0x8] sm:$0xff]
      %v964 = vld [vmem:[#allocation3 + $0x10] sm:$0xff]
      %v965 = vld [vmem:[#allocation3 + $0x18] sm:$0xff]
      %v966 = vld [vmem:[#allocation3 + $0x20] sm:$0xff]
      %v967 = vld [vmem:[#allocation3 + $0x28] sm:$0xff]
      %v968 = vld [vmem:[#allocation3 + $0x30] sm:$0xff]
      %v969 = vld [vmem:[#allocation3 + $0x38] sm:$0xff]
      %v970 = vld [vmem:[#allocation3 + $0x40] sm:$0xff]
      %v971 = vld [vmem:[#allocation3 + $0x48] sm:$0xff]
      %v972 = vld [vmem:[#allocation3 + $0x50] sm:$0xff]
      %v973 = vld [vmem:[#allocation3 + $0x58] sm:$0xff]
      %v974 = vld [vmem:[#allocation3 + $0x60] sm:$0xff]
      %v975 = vld [vmem:[#allocation3 + $0x68] sm:$0xff]
      %v976 = vld [vmem:[#allocation3 + $0x70] sm:$0xff]
      %v977 = vld [vmem:[#allocation3 + $0x78] sm:$0xff]
      %v978 = vld [vmem:[#allocation3 + $0x80] sm:$0xff]
      %v979 = vld [vmem:[#allocation3 + $0x88] sm:$0xff]
      %v980 = vld [vmem:[#allocation3 + $0x90] sm:$0xff]
      %v981 = vld [vmem:[#allocation3 + $0x98] sm:$0xff]
      %v982 = vld [vmem:[#allocation3 + $0xa0] sm:$0xff]
      %v983 = vld [vmem:[#allocation3 + $0xa8] sm:$0xff]
      %v984 = vld [vmem:[#allocation3 + $0xb0] sm:$0xff]
      %v985 = vld [vmem:[#allocation3 + $0xb8] sm:$0xff]
      %v986 = vld [vmem:[#allocation3 + $0xc0] sm:$0xff]
      %v987 = vld [vmem:[#allocation3 + $0xc8] sm:$0xff]
      %v988 = vld [vmem:[#allocation3 + $0xd0] sm:$0xff]
      %v989 = vld [vmem:[#allocation3 + $0xd8] sm:$0xff]
      %v990 = vld [vmem:[#allocation3 + $0xe0] sm:$0xff]
      %v991 = vld [vmem:[#allocation3 + $0xe8] sm:$0xff]
      %v992 = vld [vmem:[#allocation3 + $0xf0] sm:$0xff]
      %v993 = vld [vmem:[#allocation3 + $0xf8] sm:$0xff]
      %v994 = vld [vmem:[#allocation3 + $0x100] sm:$0xff]
      %v995 = vld [vmem:[#allocation3 + $0x108] sm:$0xff]
      %v996 = vld [vmem:[#allocation3 + $0x110] sm:$0xff]
      %v997 = vld [vmem:[#allocation3 + $0x118] sm:$0xff]
      %v998 = vld [vmem:[#allocation3 + $0x120] sm:$0xff]
      %v999 = vld [vmem:[#allocation3 + $0x128] sm:$0xff]
      %v1000 = vld [vmem:[#allocation3 + $0x130] sm:$0xff]
      %v1001 = vld [vmem:[#allocation3 + $0x138] sm:$0xff]
      %v1002 = vld [vmem:[#allocation3 + $0x140] sm:$0xff]
      %v1003 = vld [vmem:[#allocation3 + $0x148] sm:$0xff]
      %v1004 = vld [vmem:[#allocation3 + $0x150] sm:$0xff]
      %v1005 = vld [vmem:[#allocation3 + $0x158] sm:$0xff]
      %v1006 = vld [vmem:[#allocation3 + $0x160] sm:$0xff]
      %v1007 = vld [vmem:[#allocation3 + $0x168] sm:$0xff]
      %v1008 = vld [vmem:[#allocation3 + $0x170] sm:$0xff]
      %v1009 = vld [vmem:[#allocation3 + $0x178] sm:$0xff]
      %v1010 = vld [vmem:[#allocation3 + $0x180] sm:$0xff]
      %v1011 = vld [vmem:[#allocation3 + $0x188] sm:$0xff]
      %v1012 = vld [vmem:[#allocation3 + $0x190] sm:$0xff]
      %v1013 = vld [vmem:[#allocation3 + $0x198] sm:$0xff]
      %v1014 = vld [vmem:[#allocation3 + $0x1a0] sm:$0xff]
      %v1015 = vld [vmem:[#allocation3 + $0x1a8] sm:$0xff]
      %v1016 = vld [vmem:[#allocation3 + $0x1b0] sm:$0xff]
      %v1017 = vld [vmem:[#allocation3 + $0x1b8] sm:$0xff]
      %v1018 = vld [vmem:[#allocation3 + $0x1c0] sm:$0xff]
      %v1019 = vld [vmem:[#allocation3 + $0x1c8] sm:$0xff]
      %v1020 = vld [vmem:[#allocation3 + $0x1d0] sm:$0xff]
      %v1021 = vld [vmem:[#allocation3 + $0x1d8] sm:$0xff]
      %v1022 = vld [vmem:[#allocation3 + $0x1e0] sm:$0xff]
      %v1023 = vld [vmem:[#allocation3 + $0x1e8] sm:$0xff]
      %v1024 = vld [vmem:[#allocation3 + $0x1f0] sm:$0xff]
      %v1025 = vld [vmem:[#allocation3 + $0x1f8] sm:$0xff]
      %v1026 = vld [vmem:[#allocation3 + $0x200] sm:$0xff]
      %v1027 = vld [vmem:[#allocation3 + $0x208] sm:$0xff]
      %v1028 = vld [vmem:[#allocation3 + $0x210] sm:$0xff]
      %v1029 = vld [vmem:[#allocation3 + $0x218] sm:$0xff]
      %v1030 = vld [vmem:[#allocation3 + $0x220] sm:$0xff]
      %v1031 = vld [vmem:[#allocation3 + $0x228] sm:$0xff]
      %v1032 = vld [vmem:[#allocation3 + $0x230] sm:$0xff]
      %v1033 = vld [vmem:[#allocation3 + $0x238] sm:$0xff]
      %v1034 = vld [vmem:[#allocation3 + $0x240] sm:$0xff]
      %v1035 = vld [vmem:[#allocation3 + $0x248] sm:$0xff]
      %v1036 = vld [vmem:[#allocation3 + $0x250] sm:$0xff]
      %v1037 = vld [vmem:[#allocation3 + $0x258] sm:$0xff]
      %v1038 = vld [vmem:[#allocation3 + $0x260] sm:$0xff]
      %v1039 = vld [vmem:[#allocation3 + $0x268] sm:$0xff]
      %v1040 = vld [vmem:[#allocation3 + $0x270] sm:$0xff]
      %v1041 = vld [vmem:[#allocation3 + $0x278] sm:$0xff]
      %v1042 = vld [vmem:[#allocation3 + $0x280] sm:$0xff]
      %v1043 = vld [vmem:[#allocation3 + $0x288] sm:$0xff]
      %v1044 = vld [vmem:[#allocation3 + $0x290] sm:$0xff]
      %v1045 = vld [vmem:[#allocation3 + $0x298] sm:$0xff]
      %v1046 = vld [vmem:[#allocation3 + $0x2a0] sm:$0xff]
      %v1047 = vld [vmem:[#allocation3 + $0x2a8] sm:$0xff]
      %v1048 = vld [vmem:[#allocation3 + $0x2b0] sm:$0xff]
      %v1049 = vld [vmem:[#allocation3 + $0x2b8] sm:$0xff]
      %v1050 = vld [vmem:[#allocation3 + $0x2c0] sm:$0xff]
      %v1051 = vld [vmem:[#allocation3 + $0x2c8] sm:$0xff]
      %v1052 = vld [vmem:[#allocation3 + $0x2d0] sm:$0xff]
      %v1053 = vld [vmem:[#allocation3 + $0x2d8] sm:$0xff]
      %v1054 = vld [vmem:[#allocation3 + $0x2e0] sm:$0xff]
      %v1055 = vld [vmem:[#allocation3 + $0x2e8] sm:$0xff]
      %v1056 = vld [vmem:[#allocation3 + $0x2f0] sm:$0xff]
      %v1057 = vld [vmem:[#allocation3 + $0x2f8] sm:$0xff]
      %v1058 = vld [vmem:[#allocation3 + $0x300] sm:$0xff]
      %v1059 = vld [vmem:[#allocation3 + $0x308] sm:$0xff]
      %v1060 = vld [vmem:[#allocation3 + $0x310] sm:$0xff]
      %v1061 = vld [vmem:[#allocation3 + $0x318] sm:$0xff]
      %v1062 = vld [vmem:[#allocation3 + $0x320] sm:$0xff]
      %v1063 = vld [vmem:[#allocation3 + $0x328] sm:$0xff]
      %v1064 = vld [vmem:[#allocation3 + $0x330] sm:$0xff]
      %v1065 = vld [vmem:[#allocation3 + $0x338] sm:$0xff]
      %v1066 = vld [vmem:[#allocation3 + $0x340] sm:$0xff]
      %v1067 = vld [vmem:[#allocation3 + $0x348] sm:$0xff]
      %v1068 = vld [vmem:[#allocation3 + $0x350] sm:$0xff]
      %v1069 = vld [vmem:[#allocation3 + $0x358] sm:$0xff]
      %v1070 = vld [vmem:[%s2] sm:$0xff]
      %1072 = vset.pattern.permute.xlu0 0
      %1073 = vperm.xlu0 %1072, %v1070
      %v1074 = vpop.permute.xlu0 %1073
      %vm1076 = vcmask 588800
      %v1078 = vsel %vm1076, %v961, 0
      %1080 = vmatprep.subr.mxu0 %v963
      %1081 = vmatpush1.msra.mxu0 %v962
      %1082 = vmatprep.subr.mxu0 %v975
      %1083 = vmatpush1.msra.mxu0 %v974
      %1084 = vmatprep.subr.mxu0 %v987
      %1085 = vmatpush1.msra.mxu0 %v986
      %1086 = vmatprep.subr.mxu0 %v999
      %1087 = vmatpush1.msra.mxu0 %v998
      %1088 = vmatprep.subr.mxu0 %v1011
      %1089 = vmatpush1.msra.mxu0 %v1010
      %1090 = vmatprep.subr.mxu0 %v1023
      %1091 = vmatpush1.msra.mxu0 %v1022
      %1092 = vmatprep.subr.mxu0 %v1035
      %1093 = vmatpush1.msra.mxu0 %v1034
      %1094 = vmatprep.subr.mxu0 %v1047
      %1095 = vmatpush1.msra.mxu0 %v1046
      %1096 = vmatprep.subr.mxu0 %v1059
      %1097 = vmatpush1.msra.mxu0 %v1058
      %1098 = vmatprep.subr.mxu0 0.0
      %1099 = vmatpush1.msra.mxu0 0.0
      %1100 = vmatprep.subr.mxu0 0.0
      %1101 = vmatpush1.msra.mxu0 0.0
      %1102 = vmatprep.subr.mxu0 0.0
      %1103 = vmatpush1.msra.mxu0 0.0
      %1104 = vmatprep.subr.mxu0 0.0
      %1105 = vmatpush1.msra.mxu0 0.0
      %1106 = vmatprep.subr.mxu0 0.0
      %1107 = vmatpush1.msra.mxu0 0.0
      %1108 = vmatprep.subr.mxu0 0.0
      %1109 = vmatpush1.msra.mxu0 0.0
      %1110 = vmatprep.subr.mxu0 0.0
      %1111 = vmatpush1.msra.mxu0 0.0
      %1112 = vmatprep.subr.mxu0 0.0
      %1113 = vmatpush1.msra.mxu0 0.0
      %1114 = vmatprep.subr.mxu0 0.0
      %1115 = vmatpush1.msra.mxu0 0.0
      %1116 = vmatprep.subr.mxu0 0.0
      %1117 = vmatpush1.msra.mxu0 0.0
      %1118 = vmatprep.subr.mxu0 0.0
      %1119 = vmatpush1.msra.mxu0 0.0
      %1120 = vmatprep.subr.mxu0 0.0
      %1121 = vmatpush1.msra.mxu0 0.0
      %1122 = vmatprep.subr.mxu0 0.0
      %1123 = vmatpush1.msra.mxu0 0.0
      %1124 = vmatprep.subr.mxu0 0.0
      %1125 = vmatpush1.msra.mxu0 0.0
      %1126 = vmatprep.subr.mxu0 0.0
      %1127 = vmatpush1.msra.mxu0 0.0
      %1128 = vmatprep.subr.mxu0 0.0
      %1129 = vmatpush1.msra.mxu0 0.0
      %1130 = vmatprep.subr.mxu0 0.0
      %1131 = vmatpush1.msra.mxu0 0.0
      %1132 = vmatprep.subr.mxu0 0.0
      %1133 = vmatpush1.msra.mxu0 0.0
      %1134 = vmatprep.subr.mxu0 0.0
      %1135 = vmatpush1.msra.mxu0 0.0
      %1136 = vmatprep.subr.mxu0 0.0
      %1137 = vmatpush1.msra.mxu0 0.0
      %1138 = vmatprep.subr.mxu0 0.0
      %1139 = vmatpush1.msra.mxu0 0.0
      %1140 = vmatprep.subr.mxu0 0.0
      %1141 = vmatpush1.msra.mxu0 0.0
      %1142 = vmatprep.subr.mxu0 0.0
      %1143 = vmatpush1.msra.mxu0 0.0
      %1144 = vmatprep.mubr.f32.mxu0 0.0
      %1145 = vmatmul.mubr.f32.gmra.mrb[0].mxu0 %v1078
      %v1146 = vpop.f32.mrb[0].mxu0
      %v1147 = vadd.f32 %v1074, %v1146
      %v1148 = vpop.f32.mrb[0].mxu0
      %v1149 = vadd.f32 %v1074, %v1148
      %1150 = vdwg.mxu0
      %1151 = vmatprep.subr.mxu0 %v965
      %1152 = vmatpush1.msra.mxu0 %v964
      %1153 = vmatprep.subr.mxu0 %v977
      %1154 = vmatpush1.msra.mxu0 %v976
      %1155 = vmatprep.subr.mxu0 %v989
      %1156 = vmatpush1.msra.mxu0 %v988
      %1157 = vmatprep.subr.mxu0 %v1001
      %1158 = vmatpush1.msra.mxu0 %v1000
      %1159 = vmatprep.subr.mxu0 %v1013
      %1160 = vmatpush1.msra.mxu0 %v1012
      %1161 = vmatprep.subr.mxu0 %v1025
      %1162 = vmatpush1.msra.mxu0 %v1024
      %1163 = vmatprep.subr.mxu0 %v1037
      %1164 = vmatpush1.msra.mxu0 %v1036
      %1165 = vmatprep.subr.mxu0 %v1049
      %1166 = vmatpush1.msra.mxu0 %v1048
      %1167 = vmatprep.subr.mxu0 %v1061
      %1168 = vmatpush1.msra.mxu0 %v1060
      %1169 = vmatprep.subr.mxu0 0.0
      %1170 = vmatpush1.msra.mxu0 0.0
      %1171 = vmatprep.subr.mxu0 0.0
      %1172 = vmatpush1.msra.mxu0 0.0
      %1173 = vmatprep.subr.mxu0 0.0
      %1174 = vmatpush1.msra.mxu0 0.0
      %1175 = vmatprep.subr.mxu0 0.0
      %1176 = vmatpush1.msra.mxu0 0.0
      %1177 = vmatprep.subr.mxu0 0.0
      %1178 = vmatpush1.msra.mxu0 0.0
      %1179 = vmatprep.subr.mxu0 0.0
      %1180 = vmatpush1.msra.mxu0 0.0
      %1181 = vmatprep.subr.mxu0 0.0
      %1182 = vmatpush1.msra.mxu0 0.0
      %1183 = vmatprep.subr.mxu0 0.0
      %1184 = vmatpush1.msra.mxu0 0.0
      %1185 = vmatprep.subr.mxu0 0.0
      %1186 = vmatpush1.msra.mxu0 0.0
      %1187 = vmatprep.subr.mxu0 0.0
      %1188 = vmatpush1.msra.mxu0 0.0
      %1189 = vmatprep.subr.mxu0 0.0
      %1190 = vmatpush1.msra.mxu0 0.0
      %1191 = vmatprep.subr.mxu0 0.0
      %1192 = vmatpush1.msra.mxu0 0.0
      %1193 = vmatprep.subr.mxu0 0.0
      %1194 = vmatpush1.msra.mxu0 0.0
      %1195 = vmatprep.subr.mxu0 0.0
      %1196 = vmatpush1.msra.mxu0 0.0
      %1197 = vmatprep.subr.mxu0 0.0
      %1198 = vmatpush1.msra.mxu0 0.0
      %1199 = vmatprep.subr.mxu0 0.0
      %1200 = vmatpush1.msra.mxu0 0.0
      %1201 = vmatprep.subr.mxu0 0.0
      %1202 = vmatpush1.msra.mxu0 0.0
      %1203 = vmatprep.subr.mxu0 0.0
      %1204 = vmatpush1.msra.mxu0 0.0
      %1205 = vmatprep.subr.mxu0 0.0
      %1206 = vmatpush1.msra.mxu0 0.0
      %1207 = vmatprep.subr.mxu0 0.0
      %1208 = vmatpush1.msra.mxu0 0.0
      %1209 = vmatprep.subr.mxu0 0.0
      %1210 = vmatpush1.msra.mxu0 0.0
      %1211 = vmatprep.subr.mxu0 0.0
      %1212 = vmatpush1.msra.mxu0 0.0
      %1213 = vmatprep.subr.mxu0 0.0
      %1214 = vmatpush1.msra.mxu0 0.0
      %1215 = vmatprep.mubr.f32.mxu0 0.0
      %1216 = vmatmul.mubr.f32.gmra.mrb[0].mxu0 %v1078
      %v1217 = vpop.f32.mrb[0].mxu0
      %v1218 = vadd.f32 %v1074, %v1217
      %v1219 = vpop.f32.mrb[0].mxu0
      %v1220 = vadd.f32 %v1074, %v1219
      %1221 = vdwg.mxu0
      %1222 = vmatprep.subr.mxu0 %v967
      %1223 = vmatpush1.msra.mxu0 %v966
      %1224 = vmatprep.subr.mxu0 %v979
      %1225 = vmatpush1.msra.mxu0 %v978
      %1226 = vmatprep.subr.mxu0 %v991
      %1227 = vmatpush1.msra.mxu0 %v990
      %1228 = vmatprep.subr.mxu0 %v1003
      %1229 = vmatpush1.msra.mxu0 %v1002
      %1230 = vmatprep.subr.mxu0 %v1015
      %1231 = vmatpush1.msra.mxu0 %v1014
      %1232 = vmatprep.subr.mxu0 %v1027
      %1233 = vmatpush1.msra.mxu0 %v1026
      %1234 = vmatprep.subr.mxu0 %v1039
      %1235 = vmatpush1.msra.mxu0 %v1038
      %1236 = vmatprep.subr.mxu0 %v1051
      %1237 = vmatpush1.msra.mxu0 %v1050
      %1238 = vmatprep.subr.mxu0 %v1063
      %1239 = vmatpush1.msra.mxu0 %v1062
      %1240 = vmatprep.subr.mxu0 0.0
      %1241 = vmatpush1.msra.mxu0 0.0
      %1242 = vmatprep.subr.mxu0 0.0
      %1243 = vmatpush1.msra.mxu0 0.0
      %1244 = vmatprep.subr.mxu0 0.0
      %1245 = vmatpush1.msra.mxu0 0.0
      %1246 = vmatprep.subr.mxu0 0.0
      %1247 = vmatpush1.msra.mxu0 0.0
      %1248 = vmatprep.subr.mxu0 0.0
      %1249 = vmatpush1.msra.mxu0 0.0
      %1250 = vmatprep.subr.mxu0 0.0
      %1251 = vmatpush1.msra.mxu0 0.0
      %1252 = vmatprep.subr.mxu0 0.0
      %1253 = vmatpush1.msra.mxu0 0.0
      %1254 = vmatprep.subr.mxu0 0.0
      %1255 = vmatpush1.msra.mxu0 0.0
      %1256 = vmatprep.subr.mxu0 0.0
      %1257 = vmatpush1.msra.mxu0 0.0
      %1258 = vmatprep.subr.mxu0 0.0
      %1259 = vmatpush1.msra.mxu0 0.0
      %1260 = vmatprep.subr.mxu0 0.0
      %1261 = vmatpush1.msra.mxu0 0.0
      %1262 = vmatprep.subr.mxu0 0.0
      %1263 = vmatpush1.msra.mxu0 0.0
      %1264 = vmatprep.subr.mxu0 0.0
      %1265 = vmatpush1.msra.mxu0 0.0
      %1266 = vmatprep.subr.mxu0 0.0
      %1267 = vmatpush1.msra.mxu0 0.0
      %1268 = vmatprep.subr.mxu0 0.0
      %1269 = vmatpush1.msra.mxu0 0.0
      %1270 = vmatprep.subr.mxu0 0.0
      %1271 = vmatpush1.msra.mxu0 0.0
      %1272 = vmatprep.subr.mxu0 0.0
      %1273 = vmatpush1.msra.mxu0 0.0
      %1274 = vmatprep.subr.mxu0 0.0
      %1275 = vmatpush1.msra.mxu0 0.0
      %1276 = vmatprep.subr.mxu0 0.0
      %1277 = vmatpush1.msra.mxu0 0.0
      %1278 = vmatprep.subr.mxu0 0.0
      %1279 = vmatpush1.msra.mxu0 0.0
      %1280 = vmatprep.subr.mxu0 0.0
      %1281 = vmatpush1.msra.mxu0 0.0
      %1282 = vmatprep.subr.mxu0 0.0
      %1283 = vmatpush1.msra.mxu0 0.0
      %1284 = vmatprep.subr.mxu0 0.0
      %1285 = vmatpush1.msra.mxu0 0.0
      %1286 = vmatprep.mubr.f32.mxu0 0.0
      %1287 = vmatmul.mubr.f32.gmra.mrb[0].mxu0 %v1078
      %v1288 = vpop.f32.mrb[0].mxu0
      %v1289 = vadd.f32 %v1074, %v1288
      %v1290 = vpop.f32.mrb[0].mxu0
      %v1291 = vadd.f32 %v1074, %v1290
      %1292 = vdwg.mxu0
      %1293 = vmatprep.subr.mxu0 %v969
      %1294 = vmatpush1.msra.mxu0 %v968
      %1295 = vmatprep.subr.mxu0 %v981
      %1296 = vmatpush1.msra.mxu0 %v980
      %1297 = vmatprep.subr.mxu0 %v993
      %1298 = vmatpush1.msra.mxu0 %v992
      %1299 = vmatprep.subr.mxu0 %v1005
      %1300 = vmatpush1.msra.mxu0 %v1004
      %1301 = vmatprep.subr.mxu0 %v1017
      %1302 = vmatpush1.msra.mxu0 %v1016
      %1303 = vmatprep.subr.mxu0 %v1029
      %1304 = vmatpush1.msra.mxu0 %v1028
      %1305 = vmatprep.subr.mxu0 %v1041
      %1306 = vmatpush1.msra.mxu0 %v1040
      %1307 = vmatprep.subr.mxu0 %v1053
      %1308 = vmatpush1.msra.mxu0 %v1052
      %1309 = vmatprep.subr.mxu0 %v1065
      %1310 = vmatpush1.msra.mxu0 %v1064
      %1311 = vmatprep.subr.mxu0 0.0
      %1312 = vmatpush1.msra.mxu0 0.0
      %1313 = vmatprep.subr.mxu0 0.0
      %1314 = vmatpush1.msra.mxu0 0.0
      %1315 = vmatprep.subr.mxu0 0.0
      %1316 = vmatpush1.msra.mxu0 0.0
      %1317 = vmatprep.subr.mxu0 0.0
      %1318 = vmatpush1.msra.mxu0 0.0
      %1319 = vmatprep.subr.mxu0 0.0
      %1320 = vmatpush1.msra.mxu0 0.0
      %1321 = vmatprep.subr.mxu0 0.0
      %1322 = vmatpush1.msra.mxu0 0.0
      %1323 = vmatprep.subr.mxu0 0.0
      %1324 = vmatpush1.msra.mxu0 0.0
      %1325 = vmatprep.subr.mxu0 0.0
      %1326 = vmatpush1.msra.mxu0 0.0
      %1327 = vmatprep.subr.mxu0 0.0
      %1328 = vmatpush1.msra.mxu0 0.0
      %1329 = vmatprep.subr.mxu0 0.0
      %1330 = vmatpush1.msra.mxu0 0.0
      %1331 = vmatprep.subr.mxu0 0.0
      %1332 = vmatpush1.msra.mxu0 0.0
      %1333 = vmatprep.subr.mxu0 0.0
      %1334 = vmatpush1.msra.mxu0 0.0
      %1335 = vmatprep.subr.mxu0 0.0
      %1336 = vmatpush1.msra.mxu0 0.0
      %1337 = vmatprep.subr.mxu0 0.0
      %1338 = vmatpush1.msra.mxu0 0.0
      %1339 = vmatprep.subr.mxu0 0.0
      %1340 = vmatpush1.msra.mxu0 0.0
      %1341 = vmatprep.subr.mxu0 0.0
      %1342 = vmatpush1.msra.mxu0 0.0
      %1343 = vmatprep.subr.mxu0 0.0
      %1344 = vmatpush1.msra.mxu0 0.0
      %1345 = vmatprep.subr.mxu0 0.0
      %1346 = vmatpush1.msra.mxu0 0.0
      %1347 = vmatprep.subr.mxu0 0.0
      %1348 = vmatpush1.msra.mxu0 0.0
      %1349 = vmatprep.subr.mxu0 0.0
      %1350 = vmatpush1.msra.mxu0 0.0
      %1351 = vmatprep.subr.mxu0 0.0
      %1352 = vmatpush1.msra.mxu0 0.0
      %1353 = vmatprep.subr.mxu0 0.0
      %1354 = vmatpush1.msra.mxu0 0.0
      %1355 = vmatprep.subr.mxu0 0.0
      %1356 = vmatpush1.msra.mxu0 0.0
      %1357 = vmatprep.mubr.f32.mxu0 0.0
      %1358 = vmatmul.mubr.f32.gmra.mrb[0].mxu0 %v1078
      %v1359 = vpop.f32.mrb[0].mxu0
      %v1360 = vadd.f32 %v1074, %v1359
      %v1361 = vpop.f32.mrb[0].mxu0
      %v1362 = vadd.f32 %v1074, %v1361
      %1363 = vdwg.mxu0
      %1364 = vmatprep.subr.mxu0 %v971
      %1365 = vmatpush1.msra.mxu0 %v970
      %1366 = vmatprep.subr.mxu0 %v983
      %1367 = vmatpush1.msra.mxu0 %v982
      %1368 = vmatprep.subr.mxu0 %v995
      %1369 = vmatpush1.msra.mxu0 %v994
      %1370 = vmatprep.subr.mxu0 %v1007
      %1371 = vmatpush1.msra.mxu0 %v1006
      %1372 = vmatprep.subr.mxu0 %v1019
      %1373 = vmatpush1.msra.mxu0 %v1018
      %1374 = vmatprep.subr.mxu0 %v1031
      %1375 = vmatpush1.msra.mxu0 %v1030
      %1376 = vmatprep.subr.mxu0 %v1043
      %1377 = vmatpush1.msra.mxu0 %v1042
      %1378 = vmatprep.subr.mxu0 %v1055
      %1379 = vmatpush1.msra.mxu0 %v1054
      %1380 = vmatprep.subr.mxu0 %v1067
      %1381 = vmatpush1.msra.mxu0 %v1066
      %1382 = vmatprep.subr.mxu0 0.0
      %1383 = vmatpush1.msra.mxu0 0.0
      %1384 = vmatprep.subr.mxu0 0.0
      %1385 = vmatpush1.msra.mxu0 0.0
      %1386 = vmatprep.subr.mxu0 0.0
      %1387 = vmatpush1.msra.mxu0 0.0
      %1388 = vmatprep.subr.mxu0 0.0
      %1389 = vmatpush1.msra.mxu0 0.0
      %1390 = vmatprep.subr.mxu0 0.0
      %1391 = vmatpush1.msra.mxu0 0.0
      %1392 = vmatprep.subr.mxu0 0.0
      %1393 = vmatpush1.msra.mxu0 0.0
      %1394 = vmatprep.subr.mxu0 0.0
      %1395 = vmatpush1.msra.mxu0 0.0
      %1396 = vmatprep.subr.mxu0 0.0
      %1397 = vmatpush1.msra.mxu0 0.0
      %1398 = vmatprep.subr.mxu0 0.0
      %1399 = vmatpush1.msra.mxu0 0.0
      %1400 = vmatprep.subr.mxu0 0.0
      %1401 = vmatpush1.msra.mxu0 0.0
      %1402 = vmatprep.subr.mxu0 0.0
      %1403 = vmatpush1.msra.mxu0 0.0
      %1404 = vmatprep.subr.mxu0 0.0
      %1405 = vmatpush1.msra.mxu0 0.0
      %1406 = vmatprep.subr.mxu0 0.0
      %1407 = vmatpush1.msra.mxu0 0.0
      %1408 = vmatprep.subr.mxu0 0.0
      %1409 = vmatpush1.msra.mxu0 0.0
      %1410 = vmatprep.subr.mxu0 0.0
      %1411 = vmatpush1.msra.mxu0 0.0
      %1412 = vmatprep.subr.mxu0 0.0
      %1413 = vmatpush1.msra.mxu0 0.0
      %1414 = vmatprep.subr.mxu0 0.0
      %1415 = vmatpush1.msra.mxu0 0.0
      %1416 = vmatprep.subr.mxu0 0.0
      %1417 = vmatpush1.msra.mxu0 0.0
      %1418 = vmatprep.subr.mxu0 0.0
      %1419 = vmatpush1.msra.mxu0 0.0
      %1420 = vmatprep.subr.mxu0 0.0
      %1421 = vmatpush1.msra.mxu0 0.0
      %1422 = vmatprep.subr.mxu0 0.0
      %1423 = vmatpush1.msra.mxu0 0.0
      %1424 = vmatprep.subr.mxu0 0.0
      %1425 = vmatpush1.msra.mxu0 0.0
      %1426 = vmatprep.subr.mxu0 0.0
      %1427 = vmatpush1.msra.mxu0 0.0
      %1428 = vmatprep.mubr.f32.mxu0 0.0
      %1429 = vmatmul.mubr.f32.gmra.mrb[0].mxu0 %v1078
      %v1430 = vpop.f32.mrb[0].mxu0
      %v1431 = vadd.f32 %v1074, %v1430
      %v1432 = vpop.f32.mrb[0].mxu0
      %v1433 = vadd.f32 %v1074, %v1432
      %1434 = vdwg.mxu0
      %1435 = vmatprep.subr.mxu0 %v973
      %1436 = vmatpush1.msra.mxu0 %v972
      %1437 = vmatprep.subr.mxu0 %v985
      %1438 = vmatpush1.msra.mxu0 %v984
      %1439 = vmatprep.subr.mxu0 %v997
      %1440 = vmatpush1.msra.mxu0 %v996
      %1441 = vmatprep.subr.mxu0 %v1009
      %1442 = vmatpush1.msra.mxu0 %v1008
      %1443 = vmatprep.subr.mxu0 %v1021
      %1444 = vmatpush1.msra.mxu0 %v1020
      %1445 = vmatprep.subr.mxu0 %v1033
      %1446 = vmatpush1.msra.mxu0 %v1032
      %1447 = vmatprep.subr.mxu0 %v1045
      %1448 = vmatpush1.msra.mxu0 %v1044
      %1449 = vmatprep.subr.mxu0 %v1057
      %1450 = vmatpush1.msra.mxu0 %v1056
      %1451 = vmatprep.subr.mxu0 %v1069
      %1452 = vmatpush1.msra.mxu0 %v1068
      %1453 = vmatprep.subr.mxu0 0.0
      %1454 = vmatpush1.msra.mxu0 0.0
      %1455 = vmatprep.subr.mxu0 0.0
      %1456 = vmatpush1.msra.mxu0 0.0
      %1457 = vmatprep.subr.mxu0 0.0
      %1458 = vmatpush1.msra.mxu0 0.0
      %1459 = vmatprep.subr.mxu0 0.0
      %1460 = vmatpush1.msra.mxu0 0.0
      %1461 = vmatprep.subr.mxu0 0.0
      %1462 = vmatpush1.msra.mxu0 0.0
      %1463 = vmatprep.subr.mxu0 0.0
      %1464 = vmatpush1.msra.mxu0 0.0
      %1465 = vmatprep.subr.mxu0 0.0
      %1466 = vmatpush1.msra.mxu0 0.0
      %1467 = vmatprep.subr.mxu0 0.0
      %1468 = vmatpush1.msra.mxu0 0.0
      %1469 = vmatprep.subr.mxu0 0.0
      %1470 = vmatpush1.msra.mxu0 0.0
      %1471 = vmatprep.subr.mxu0 0.0
      %1472 = vmatpush1.msra.mxu0 0.0
      %1473 = vmatprep.subr.mxu0 0.0
      %1474 = vmatpush1.msra.mxu0 0.0
      %1475 = vmatprep.subr.mxu0 0.0
      %1476 = vmatpush1.msra.mxu0 0.0
      %1477 = vmatprep.subr.mxu0 0.0
      %1478 = vmatpush1.msra.mxu0 0.0
      %1479 = vmatprep.subr.mxu0 0.0
      %1480 = vmatpush1.msra.mxu0 0.0
      %1481 = vmatprep.subr.mxu0 0.0
      %1482 = vmatpush1.msra.mxu0 0.0
      %1483 = vmatprep.subr.mxu0 0.0
      %1484 = vmatpush1.msra.mxu0 0.0
      %1485 = vmatprep.subr.mxu0 0.0
      %1486 = vmatpush1.msra.mxu0 0.0
      %1487 = vmatprep.subr.mxu0 0.0
      %1488 = vmatpush1.msra.mxu0 0.0
      %1489 = vmatprep.subr.mxu0 0.0
      %1490 = vmatpush1.msra.mxu0 0.0
      %1491 = vmatprep.subr.mxu0 0.0
      %1492 = vmatpush1.msra.mxu0 0.0
      %1493 = vmatprep.subr.mxu0 0.0
      %1494 = vmatpush1.msra.mxu0 0.0
      %1495 = vmatprep.subr.mxu0 0.0
      %1496 = vmatpush1.msra.mxu0 0.0
      %1497 = vmatprep.subr.mxu0 0.0
      %1498 = vmatpush1.msra.mxu0 0.0
      %1499 = vmatprep.mubr.f32.mxu0 0.0
      %1500 = vmatmul.mubr.f32.gmra.mrb[0].mxu0 %v1078
      %v1501 = vpop.f32.mrb[0].mxu0
      %v1502 = vadd.f32 %v1074, %v1501
      %v1503 = vpop.f32.mrb[0].mxu0
      %v1504 = vadd.f32 %v1074, %v1503
      %1505 = vdwg.mxu0
      %v1506 = vmax.f32 %v1147, 0.0
      %v1507 = vmax.f32 %v1149, 0.0
      %v1508 = vmax.f32 %v1218, 0.0
      %v1509 = vmax.f32 %v1220, 0.0
      %v1510 = vmax.f32 %v1289, 0.0
      %v1511 = vmax.f32 %v1291, 0.0
      %v1512 = vmax.f32 %v1360, 0.0
      %v1513 = vmax.f32 %v1362, 0.0
      %v1514 = vmax.f32 %v1431, 0.0
      %v1515 = vmax.f32 %v1433, 0.0
      %v1516 = vmax.f32 %v1502, 0.0
      %v1517 = vmax.f32 %v1504, 0.0
      %v1520 = vlaneseq
      %v1521 = vshrl.u32 %v1520, 7
      %v1522 = vsub.s32 0, %v1521
      %v1523 = vrot.slane %v223, %v1522
      %v1524 = vlaneseq
      %v1525 = vshrl.u32 %v1524, 7
      %v1526 = vsub.s32 1, %v1525
      %v1527 = vrot.slane %v223, %v1526
      %v1528 = vlaneseq
      %v1529 = vshrl.u32 %v1528, 7
      %v1530 = vsub.s32 2, %v1529
      %v1531 = vrot.slane %v223, %v1530
      %v1532 = vlaneseq
      %v1533 = vshrl.u32 %v1532, 7
      %v1534 = vsub.s32 3, %v1533
      %v1535 = vrot.slane %v223, %v1534
      %v1536 = vlaneseq
      %v1537 = vshrl.u32 %v1536, 7
      %v1538 = vsub.s32 4, %v1537
      %v1539 = vrot.slane %v223, %v1538
      %v1540 = vlaneseq
      %v1541 = vshrl.u32 %v1540, 7
      %v1542 = vsub.s32 5, %v1541
      %v1543 = vrot.slane %v223, %v1542
      %v1544 = vlaneseq
      %v1545 = vshrl.u32 %v1544, 7
      %v1546 = vsub.s32 6, %v1545
      %v1547 = vrot.slane %v223, %v1546
      %v1548 = vlaneseq
      %v1549 = vshrl.u32 %v1548, 7
      %v1550 = vsub.s32 7, %v1549
      %v1551 = vrot.slane %v223, %v1550
      %v1552 = vlaneseq
      %v1553 = vshrl.u32 %v1552, 7
      %v1554 = vsub.s32 0, %v1553
      %v1555 = vrot.slane %v224, %v1554
      %v1556 = vlaneseq
      %v1557 = vshrl.u32 %v1556, 7
      %v1558 = vsub.s32 1, %v1557
      %v1559 = vrot.slane %v224, %v1558
      %v1560 = vlaneseq
      %v1561 = vshrl.u32 %v1560, 7
      %v1562 = vsub.s32 2, %v1561
      %v1563 = vrot.slane %v224, %v1562
      %v1564 = vlaneseq
      %v1565 = vshrl.u32 %v1564, 7
      %v1566 = vsub.s32 3, %v1565
      %v1567 = vrot.slane %v224, %v1566
      %v1580 = vmul.f32 %v1506, %v1523
      %v1581 = vmul.f32 %v1507, %v1527
      %v1582 = vmul.f32 %v1508, %v1531
      %v1583 = vmul.f32 %v1509, %v1535
      %v1584 = vmul.f32 %v1510, %v1539
      %v1585 = vmul.f32 %v1511, %v1543
      %v1586 = vmul.f32 %v1512, %v1547
      %v1587 = vmul.f32 %v1513, %v1551
      %v1588 = vmul.f32 %v1514, %v1555
      %v1589 = vmul.f32 %v1515, %v1559
      %v1590 = vmul.f32 %v1516, %v1563
      %v1591 = vmul.f32 %v1517, %v1567
      %1604 = vrot.lane.b32.xlu0 %v1580, 19
      %v1605 = vpop.permute.xlu0 %1604
      %1606 = vrot.lane.b32.xlu0 %v1581, 19
      %v1607 = vpop.permute.xlu0 %1606
      %1608 = vrot.lane.b32.xlu0 %v1582, 19
      %v1609 = vpop.permute.xlu0 %1608
      %1610 = vrot.lane.b32.xlu0 %v1583, 19
      %v1611 = vpop.permute.xlu0 %1610
      %1612 = vrot.lane.b32.xlu0 %v1584, 19
      %v1613 = vpop.permute.xlu0 %1612
      %1614 = vrot.lane.b32.xlu0 %v1585, 19
      %v1615 = vpop.permute.xlu0 %1614
      %1616 = vrot.lane.b32.xlu0 %v1586, 19
      %v1617 = vpop.permute.xlu0 %1616
      %1618 = vrot.lane.b32.xlu0 %v1587, 19
      %v1619 = vpop.permute.xlu0 %1618
      %1620 = vrot.lane.b32.xlu0 %v1588, 19
      %v1621 = vpop.permute.xlu0 %1620
      %1622 = vrot.lane.b32.xlu0 %v1589, 19
      %v1623 = vpop.permute.xlu0 %1622
      %1624 = vrot.lane.b32.xlu0 %v1590, 19
      %v1625 = vpop.permute.xlu0 %1624
      %1626 = vrot.lane.b32.xlu0 %v1591, 19
      %v1627 = vpop.permute.xlu0 %1626
      %vm1628 = vcmask 154624
      %v1629 = vsel %vm1628, %v1605, %v1607
      %v1630 = vsel %vm1628, %v1607, %v1609
      %v1631 = vsel %vm1628, %v1609, %v1611
      %v1632 = vsel %vm1628, %v1611, %v1613
      %v1633 = vsel %vm1628, %v1613, %v1615
      %v1634 = vsel %vm1628, %v1615, %v1617
      %v1635 = vsel %vm1628, %v1617, %v1619
      %v1636 = vsel %vm1628, %v1619, %v1621
      %v1637 = vsel %vm1628, %v1621, %v1623
      %v1638 = vsel %vm1628, %v1623, %v1625
      %v1639 = vsel %vm1628, %v1625, %v1627
      %vm1653 = vcmask 1047704
      %1654 = vst.msk [vmem:[#allocation2] sm:$0xff] %vm1653, %v1605
      %1655 = vst [vmem:[#allocation2 + $0x8] sm:$0xff] %v1629
      %1656 = vst [vmem:[#allocation2 + $0x10] sm:$0xff] %v1630
      %1657 = vst [vmem:[#allocation2 + $0x18] sm:$0xff] %v1631
      %1658 = vst [vmem:[#allocation2 + $0x20] sm:$0xff] %v1632
      %1659 = vst [vmem:[#allocation2 + $0x28] sm:$0xff] %v1633
      %1660 = vst [vmem:[#allocation2 + $0x30] sm:$0xff] %v1634
      %1661 = vst [vmem:[#allocation2 + $0x38] sm:$0xff] %v1635
      %1662 = vst [vmem:[#allocation2 + $0x40] sm:$0xff] %v1636
      %1663 = vst [vmem:[#allocation2 + $0x48] sm:$0xff] %v1637
      %1664 = vst [vmem:[#allocation2 + $0x50] sm:$0xff] %v1638
      %1665 = vst [vmem:[#allocation2 + $0x58] sm:$0xff] %v1639
      %1666 = vst.msk [vmem:[#allocation2 + $0x60] sm:$0xff] %vm1628, %v1627
      %v1667 = vld [vmem:[#allocation2] sm:$0xff]
      %v1668 = vld [vmem:[#allocation2 + $0x8] sm:$0xff]
      %v1669 = vld [vmem:[#allocation2 + $0x10] sm:$0xff]
      %v1670 = vld [vmem:[#allocation2 + $0x18] sm:$0xff]
      %v1671 = vld [vmem:[#allocation2 + $0x20] sm:$0xff]
      %v1672 = vld [vmem:[#allocation2 + $0x28] sm:$0xff]
      %v1673 = vld [vmem:[#allocation2 + $0x30] sm:$0xff]
      %v1674 = vld [vmem:[#allocation2 + $0x38] sm:$0xff]
      %v1675 = vld [vmem:[#allocation2 + $0x40] sm:$0xff]
      %v1676 = vld [vmem:[#allocation2 + $0x48] sm:$0xff]
      %v1677 = vld [vmem:[#allocation2 + $0x50] sm:$0xff]
      %v1678 = vld [vmem:[#allocation2 + $0x58] sm:$0xff]
      %1679 = vst [vmem:[#allocation3] sm:$0xff] %v1667
      %1680 = vst [vmem:[#allocation3 + $0x8] sm:$0xff] %v1668
      %1681 = vst [vmem:[#allocation3 + $0x10] sm:$0xff] %v1669
      %1682 = vst [vmem:[#allocation3 + $0x18] sm:$0xff] %v1670
      %1683 = vst [vmem:[#allocation3 + $0x20] sm:$0xff] %v1671
      %1684 = vst [vmem:[#allocation3 + $0x28] sm:$0xff] %v1672
      %1685 = vst [vmem:[#allocation3 + $0x30] sm:$0xff] %v1673
      %1686 = vst [vmem:[#allocation3 + $0x38] sm:$0xff] %v1674
      %1687 = vst [vmem:[#allocation3 + $0x40] sm:$0xff] %v1675
      %1688 = vst [vmem:[#allocation3 + $0x48] sm:$0xff] %v1676
      %1689 = vst [vmem:[#allocation3 + $0x50] sm:$0xff] %v1677
      %1690 = vst [vmem:[#allocation3 + $0x58] sm:$0xff] %v1678
      %v1691 = vld [vmem:[#allocation2] sm:$0xff]
      %v1692 = vld [vmem:[#allocation2 + $0x8] sm:$0xff]
      %v1693 = vld [vmem:[#allocation2 + $0x10] sm:$0xff]
      %v1694 = vld [vmem:[#allocation2 + $0x18] sm:$0xff]
      %v1695 = vld [vmem:[#allocation2 + $0x20] sm:$0xff]
      %v1696 = vld [vmem:[#allocation2 + $0x28] sm:$0xff]
      %v1697 = vld [vmem:[#allocation2 + $0x30] sm:$0xff]
      %v1698 = vld [vmem:[#allocation2 + $0x38] sm:$0xff]
      %v1699 = vld [vmem:[#allocation2 + $0x40] sm:$0xff]
      %v1700 = vld [vmem:[#allocation2 + $0x48] sm:$0xff]
      %v1701 = vld [vmem:[#allocation2 + $0x50] sm:$0xff]
      %v1702 = vld [vmem:[#allocation2 + $0x58] sm:$0xff]
      %v1703 = vld [vmem:[#allocation2 + $0x60] sm:$0xff]
      %1717 = vrot.lane.b32.xlu0 %v1691, 127
      %v1718 = vpop.permute.xlu0 %1717
      %1719 = vrot.lane.b32.xlu0 %v1692, 127
      %v1720 = vpop.permute.xlu0 %1719
      %1721 = vrot.lane.b32.xlu0 %v1693, 127
      %v1722 = vpop.permute.xlu0 %1721
      %1723 = vrot.lane.b32.xlu0 %v1694, 127
      %v1724 = vpop.permute.xlu0 %1723
      %1725 = vrot.lane.b32.xlu0 %v1695, 127
      %v1726 = vpop.permute.xlu0 %1725
      %1727 = vrot.lane.b32.xlu0 %v1696, 127
      %v1728 = vpop.permute.xlu0 %1727
      %1729 = vrot.lane.b32.xlu0 %v1697, 127
      %v1730 = vpop.permute.xlu0 %1729
      %1731 = vrot.lane.b32.xlu0 %v1698, 127
      %v1732 = vpop.permute.xlu0 %1731
      %1733 = vrot.lane.b32.xlu0 %v1699, 127
      %v1734 = vpop.permute.xlu0 %1733
      %1735 = vrot.lane.b32.xlu0 %v1700, 127
      %v1736 = vpop.permute.xlu0 %1735
      %1737 = vrot.lane.b32.xlu0 %v1701, 127
      %v1738 = vpop.permute.xlu0 %1737
      %1739 = vrot.lane.b32.xlu0 %v1702, 127
      %v1740 = vpop.permute.xlu0 %1739
      %1741 = vrot.lane.b32.xlu0 %v1703, 127
      %v1742 = vpop.permute.xlu0 %1741
      %v1743 = vsel %vm301, %v1718, %v1720
      %v1744 = vsel %vm301, %v1720, %v1722
      %v1745 = vsel %vm301, %v1722, %v1724
      %v1746 = vsel %vm301, %v1724, %v1726
      %v1747 = vsel %vm301, %v1726, %v1728
      %v1748 = vsel %vm301, %v1728, %v1730
      %v1749 = vsel %vm301, %v1730, %v1732
      %v1750 = vsel %vm301, %v1732, %v1734
      %v1751 = vsel %vm301, %v1734, %v1736
      %v1752 = vsel %vm301, %v1736, %v1738
      %v1753 = vsel %vm301, %v1738, %v1740
      %v1754 = vsel %vm301, %v1740, %v1742
      %1767 = vst [vmem:[#allocation3 + $0x60] sm:$0xff] %v1743
      %1768 = vst [vmem:[#allocation3 + $0x68] sm:$0xff] %v1744
      %1769 = vst [vmem:[#allocation3 + $0x70] sm:$0xff] %v1745
      %1770 = vst [vmem:[#allocation3 + $0x78] sm:$0xff] %v1746
      %1771 = vst [vmem:[#allocation3 + $0x80] sm:$0xff] %v1747
      %1772 = vst [vmem:[#allocation3 + $0x88] sm:$0xff] %v1748
      %1773 = vst [vmem:[#allocation3 + $0x90] sm:$0xff] %v1749
      %1774 = vst [vmem:[#allocation3 + $0x98] sm:$0xff] %v1750
      %1775 = vst [vmem:[#allocation3 + $0xa0] sm:$0xff] %v1751
      %1776 = vst [vmem:[#allocation3 + $0xa8] sm:$0xff] %v1752
      %1777 = vst [vmem:[#allocation3 + $0xb0] sm:$0xff] %v1753
      %1778 = vst [vmem:[#allocation3 + $0xb8] sm:$0xff] %v1754
      %v1779 = vld [vmem:[#allocation2] sm:$0xff]
      %v1780 = vld [vmem:[#allocation2 + $0x8] sm:$0xff]
      %v1781 = vld [vmem:[#allocation2 + $0x10] sm:$0xff]
      %v1782 = vld [vmem:[#allocation2 + $0x18] sm:$0xff]
      %v1783 = vld [vmem:[#allocation2 + $0x20] sm:$0xff]
      %v1784 = vld [vmem:[#allocation2 + $0x28] sm:$0xff]
      %v1785 = vld [vmem:[#allocation2 + $0x30] sm:$0xff]
      %v1786 = vld [vmem:[#allocation2 + $0x38] sm:$0xff]
      %v1787 = vld [vmem:[#allocation2 + $0x40] sm:$0xff]
      %v1788 = vld [vmem:[#allocation2 + $0x48] sm:$0xff]
      %v1789 = vld [vmem:[#allocation2 + $0x50] sm:$0xff]
      %v1790 = vld [vmem:[#allocation2 + $0x58] sm:$0xff]
      %v1791 = vld [vmem:[#allocation2 + $0x60] sm:$0xff]
      %1805 = vrot.lane.b32.xlu0 %v1779, 126
      %v1806 = vpop.permute.xlu0 %1805
      %1807 = vrot.lane.b32.xlu0 %v1780, 126
      %v1808 = vpop.permute.xlu0 %1807
      %1809 = vrot.lane.b32.xlu0 %v1781, 126
      %v1810 = vpop.permute.xlu0 %1809
      %1811 = vrot.lane.b32.xlu0 %v1782, 126
      %v1812 = vpop.permute.xlu0 %1811
      %1813 = vrot.lane.b32.xlu0 %v1783, 126
      %v1814 = vpop.permute.xlu0 %1813
      %1815 = vrot.lane.b32.xlu0 %v1784, 126
      %v1816 = vpop.permute.xlu0 %1815
      %1817 = vrot.lane.b32.xlu0 %v1785, 126
      %v1818 = vpop.permute.xlu0 %1817
      %1819 = vrot.lane.b32.xlu0 %v1786, 126
      %v1820 = vpop.permute.xlu0 %1819
      %1821 = vrot.lane.b32.xlu0 %v1787, 126
      %v1822 = vpop.permute.xlu0 %1821
      %1823 = vrot.lane.b32.xlu0 %v1788, 126
      %v1824 = vpop.permute.xlu0 %1823
      %1825 = vrot.lane.b32.xlu0 %v1789, 126
      %v1826 = vpop.permute.xlu0 %1825
      %1827 = vrot.lane.b32.xlu0 %v1790, 126
      %v1828 = vpop.permute.xlu0 %1827
      %1829 = vrot.lane.b32.xlu0 %v1791, 126
      %v1830 = vpop.permute.xlu0 %1829
      %v1831 = vsel %vm390, %v1806, %v1808
      %v1832 = vsel %vm390, %v1808, %v1810
      %v1833 = vsel %vm390, %v1810, %v1812
      %v1834 = vsel %vm390, %v1812, %v1814
      %v1835 = vsel %vm390, %v1814, %v1816
      %v1836 = vsel %vm390, %v1816, %v1818
      %v1837 = vsel %vm390, %v1818, %v1820
      %v1838 = vsel %vm390, %v1820, %v1822
      %v1839 = vsel %vm390, %v1822, %v1824
      %v1840 = vsel %vm390, %v1824, %v1826
      %v1841 = vsel %vm390, %v1826, %v1828
      %v1842 = vsel %vm390, %v1828, %v1830
      %1855 = vst [vmem:[#allocation3 + $0xc0] sm:$0xff] %v1831
      %1856 = vst [vmem:[#allocation3 + $0xc8] sm:$0xff] %v1832
      %1857 = vst [vmem:[#allocation3 + $0xd0] sm:$0xff] %v1833
      %1858 = vst [vmem:[#allocation3 + $0xd8] sm:$0xff] %v1834
      %1859 = vst [vmem:[#allocation3 + $0xe0] sm:$0xff] %v1835
      %1860 = vst [vmem:[#allocation3 + $0xe8] sm:$0xff] %v1836
      %1861 = vst [vmem:[#allocation3 + $0xf0] sm:$0xff] %v1837
      %1862 = vst [vmem:[#allocation3 + $0xf8] sm:$0xff] %v1838
      %1863 = vst [vmem:[#allocation3 + $0x100] sm:$0xff] %v1839
      %1864 = vst [vmem:[#allocation3 + $0x108] sm:$0xff] %v1840
      %1865 = vst [vmem:[#allocation3 + $0x110] sm:$0xff] %v1841
      %1866 = vst [vmem:[#allocation3 + $0x118] sm:$0xff] %v1842
      %v1867 = vld [vmem:[#allocation2] sm:$0xff]
      %v1868 = vld [vmem:[#allocation2 + $0x8] sm:$0xff]
      %v1869 = vld [vmem:[#allocation2 + $0x10] sm:$0xff]
      %v1870 = vld [vmem:[#allocation2 + $0x18] sm:$0xff]
      %v1871 = vld [vmem:[#allocation2 + $0x20] sm:$0xff]
      %v1872 = vld [vmem:[#allocation2 + $0x28] sm:$0xff]
      %v1873 = vld [vmem:[#allocation2 + $0x30] sm:$0xff]
      %v1874 = vld [vmem:[#allocation2 + $0x38] sm:$0xff]
      %v1875 = vld [vmem:[#allocation2 + $0x40] sm:$0xff]
      %v1876 = vld [vmem:[#allocation2 + $0x48] sm:$0xff]
      %v1877 = vld [vmem:[#allocation2 + $0x50] sm:$0xff]
      %v1878 = vld [vmem:[#allocation2 + $0x58] sm:$0xff]
      %v1879 = vld [vmem:[#allocation2 + $0x60] sm:$0xff]
      %1893 = vrot.lane.b32.xlu0 %v1867, 110
      %v1894 = vpop.permute.xlu0 %1893
      %1895 = vrot.lane.b32.xlu0 %v1868, 110
      %v1896 = vpop.permute.xlu0 %1895
      %1897 = vrot.lane.b32.xlu0 %v1869, 110
      %v1898 = vpop.permute.xlu0 %1897
      %1899 = vrot.lane.b32.xlu0 %v1870, 110
      %v1900 = vpop.permute.xlu0 %1899
      %1901 = vrot.lane.b32.xlu0 %v1871, 110
      %v1902 = vpop.permute.xlu0 %1901
      %1903 = vrot.lane.b32.xlu0 %v1872, 110
      %v1904 = vpop.permute.xlu0 %1903
      %1905 = vrot.lane.b32.xlu0 %v1873, 110
      %v1906 = vpop.permute.xlu0 %1905
      %1907 = vrot.lane.b32.xlu0 %v1874, 110
      %v1908 = vpop.permute.xlu0 %1907
      %1909 = vrot.lane.b32.xlu0 %v1875, 110
      %v1910 = vpop.permute.xlu0 %1909
      %1911 = vrot.lane.b32.xlu0 %v1876, 110
      %v1912 = vpop.permute.xlu0 %1911
      %1913 = vrot.lane.b32.xlu0 %v1877, 110
      %v1914 = vpop.permute.xlu0 %1913
      %1915 = vrot.lane.b32.xlu0 %v1878, 110
      %v1916 = vpop.permute.xlu0 %1915
      %1917 = vrot.lane.b32.xlu0 %v1879, 110
      %v1918 = vpop.permute.xlu0 %1917
      %v1919 = vsel %vm479, %v1894, %v1896
      %v1920 = vsel %vm479, %v1896, %v1898
      %v1921 = vsel %vm479, %v1898, %v1900
      %v1922 = vsel %vm479, %v1900, %v1902
      %v1923 = vsel %vm479, %v1902, %v1904
      %v1924 = vsel %vm479, %v1904, %v1906
      %v1925 = vsel %vm479, %v1906, %v1908
      %v1926 = vsel %vm479, %v1908, %v1910
      %v1927 = vsel %vm479, %v1910, %v1912
      %v1928 = vsel %vm479, %v1912, %v1914
      %v1929 = vsel %vm479, %v1914, %v1916
      %v1930 = vsel %vm479, %v1916, %v1918
      %1943 = vst [vmem:[#allocation3 + $0x120] sm:$0xff] %v1919
      %1944 = vst [vmem:[#allocation3 + $0x128] sm:$0xff] %v1920
      %1945 = vst [vmem:[#allocation3 + $0x130] sm:$0xff] %v1921
      %1946 = vst [vmem:[#allocation3 + $0x138] sm:$0xff] %v1922
      %1947 = vst [vmem:[#allocation3 + $0x140] sm:$0xff] %v1923
      %1948 = vst [vmem:[#allocation3 + $0x148] sm:$0xff] %v1924
      %1949 = vst [vmem:[#allocation3 + $0x150] sm:$0xff] %v1925
      %1950 = vst [vmem:[#allocation3 + $0x158] sm:$0xff] %v1926
      %1951 = vst [vmem:[#allocation3 + $0x160] sm:$0xff] %v1927
      %1952 = vst [vmem:[#allocation3 + $0x168] sm:$0xff] %v1928
      %1953 = vst [vmem:[#allocation3 + $0x170] sm:$0xff] %v1929
      %1954 = vst [vmem:[#allocation3 + $0x178] sm:$0xff] %v1930
      %v1955 = vld [vmem:[#allocation2] sm:$0xff]
      %v1956 = vld [vmem:[#allocation2 + $0x8] sm:$0xff]
      %v1957 = vld [vmem:[#allocation2 + $0x10] sm:$0xff]
      %v1958 = vld [vmem:[#allocation2 + $0x18] sm:$0xff]
      %v1959 = vld [vmem:[#allocation2 + $0x20] sm:$0xff]
      %v1960 = vld [vmem:[#allocation2 + $0x28] sm:$0xff]
      %v1961 = vld [vmem:[#allocation2 + $0x30] sm:$0xff]
      %v1962 = vld [vmem:[#allocation2 + $0x38] sm:$0xff]
      %v1963 = vld [vmem:[#allocation2 + $0x40] sm:$0xff]
      %v1964 = vld [vmem:[#allocation2 + $0x48] sm:$0xff]
      %v1965 = vld [vmem:[#allocation2 + $0x50] sm:$0xff]
      %v1966 = vld [vmem:[#allocation2 + $0x58] sm:$0xff]
      %v1967 = vld [vmem:[#allocation2 + $0x60] sm:$0xff]
      %1981 = vrot.lane.b32.xlu0 %v1955, 109
      %v1982 = vpop.permute.xlu0 %1981
      %1983 = vrot.lane.b32.xlu0 %v1956, 109
      %v1984 = vpop.permute.xlu0 %1983
      %1985 = vrot.lane.b32.xlu0 %v1957, 109
      %v1986 = vpop.permute.xlu0 %1985
      %1987 = vrot.lane.b32.xlu0 %v1958, 109
      %v1988 = vpop.permute.xlu0 %1987
      %1989 = vrot.lane.b32.xlu0 %v1959, 109
      %v1990 = vpop.permute.xlu0 %1989
      %1991 = vrot.lane.b32.xlu0 %v1960, 109
      %v1992 = vpop.permute.xlu0 %1991
      %1993 = vrot.lane.b32.xlu0 %v1961, 109
      %v1994 = vpop.permute.xlu0 %1993
      %1995 = vrot.lane.b32.xlu0 %v1962, 109
      %v1996 = vpop.permute.xlu0 %1995
      %1997 = vrot.lane.b32.xlu0 %v1963, 109
      %v1998 = vpop.permute.xlu0 %1997
      %1999 = vrot.lane.b32.xlu0 %v1964, 109
      %v2000 = vpop.permute.xlu0 %1999
      %2001 = vrot.lane.b32.xlu0 %v1965, 109
      %v2002 = vpop.permute.xlu0 %2001
      %2003 = vrot.lane.b32.xlu0 %v1966, 109
      %v2004 = vpop.permute.xlu0 %2003
      %2005 = vrot.lane.b32.xlu0 %v1967, 109
      %v2006 = vpop.permute.xlu0 %2005
      %v2007 = vsel %vm568, %v1982, %v1984
      %v2008 = vsel %vm568, %v1984, %v1986
      %v2009 = vsel %vm568, %v1986, %v1988
      %v2010 = vsel %vm568, %v1988, %v1990
      %v2011 = vsel %vm568, %v1990, %v1992
      %v2012 = vsel %vm568, %v1992, %v1994
      %v2013 = vsel %vm568, %v1994, %v1996
      %v2014 = vsel %vm568, %v1996, %v1998
      %v2015 = vsel %vm568, %v1998, %v2000
      %v2016 = vsel %vm568, %v2000, %v2002
      %v2017 = vsel %vm568, %v2002, %v2004
      %v2018 = vsel %vm568, %v2004, %v2006
      %2031 = vst [vmem:[#allocation3 + $0x180] sm:$0xff] %v2007
      %2032 = vst [vmem:[#allocation3 + $0x188] sm:$0xff] %v2008
      %2033 = vst [vmem:[#allocation3 + $0x190] sm:$0xff] %v2009
      %2034 = vst [vmem:[#allocation3 + $0x198] sm:$0xff] %v2010
      %2035 = vst [vmem:[#allocation3 + $0x1a0] sm:$0xff] %v2011
      %2036 = vst [vmem:[#allocation3 + $0x1a8] sm:$0xff] %v2012
      %2037 = vst [vmem:[#allocation3 + $0x1b0] sm:$0xff] %v2013
      %2038 = vst [vmem:[#allocation3 + $0x1b8] sm:$0xff] %v2014
      %2039 = vst [vmem:[#allocation3 + $0x1c0] sm:$0xff] %v2015
      %2040 = vst [vmem:[#allocation3 + $0x1c8] sm:$0xff] %v2016
      %2041 = vst [vmem:[#allocation3 + $0x1d0] sm:$0xff] %v2017
      %2042 = vst [vmem:[#allocation3 + $0x1d8] sm:$0xff] %v2018
      %v2043 = vld [vmem:[#allocation2] sm:$0xff]
      %v2044 = vld [vmem:[#allocation2 + $0x8] sm:$0xff]
      %v2045 = vld [vmem:[#allocation2 + $0x10] sm:$0xff]
      %v2046 = vld [vmem:[#allocation2 + $0x18] sm:$0xff]
      %v2047 = vld [vmem:[#allocation2 + $0x20] sm:$0xff]
      %v2048 = vld [vmem:[#allocation2 + $0x28] sm:$0xff]
      %v2049 = vld [vmem:[#allocation2 + $0x30] sm:$0xff]
      %v2050 = vld [vmem:[#allocation2 + $0x38] sm:$0xff]
      %v2051 = vld [vmem:[#allocation2 + $0x40] sm:$0xff]
      %v2052 = vld [vmem:[#allocation2 + $0x48] sm:$0xff]
      %v2053 = vld [vmem:[#allocation2 + $0x50] sm:$0xff]
      %v2054 = vld [vmem:[#allocation2 + $0x58] sm:$0xff]
      %v2055 = vld [vmem:[#allocation2 + $0x60] sm:$0xff]
      %2069 = vrot.lane.b32.xlu0 %v2043, 108
      %v2070 = vpop.permute.xlu0 %2069
      %2071 = vrot.lane.b32.xlu0 %v2044, 108
      %v2072 = vpop.permute.xlu0 %2071
      %2073 = vrot.lane.b32.xlu0 %v2045, 108
      %v2074 = vpop.permute.xlu0 %2073
      %2075 = vrot.lane.b32.xlu0 %v2046, 108
      %v2076 = vpop.permute.xlu0 %2075
      %2077 = vrot.lane.b32.xlu0 %v2047, 108
      %v2078 = vpop.permute.xlu0 %2077
      %2079 = vrot.lane.b32.xlu0 %v2048, 108
      %v2080 = vpop.permute.xlu0 %2079
      %2081 = vrot.lane.b32.xlu0 %v2049, 108
      %v2082 = vpop.permute.xlu0 %2081
      %2083 = vrot.lane.b32.xlu0 %v2050, 108
      %v2084 = vpop.permute.xlu0 %2083
      %2085 = vrot.lane.b32.xlu0 %v2051, 108
      %v2086 = vpop.permute.xlu0 %2085
      %2087 = vrot.lane.b32.xlu0 %v2052, 108
      %v2088 = vpop.permute.xlu0 %2087
      %2089 = vrot.lane.b32.xlu0 %v2053, 108
      %v2090 = vpop.permute.xlu0 %2089
      %2091 = vrot.lane.b32.xlu0 %v2054, 108
      %v2092 = vpop.permute.xlu0 %2091
      %2093 = vrot.lane.b32.xlu0 %v2055, 108
      %v2094 = vpop.permute.xlu0 %2093
      %v2095 = vsel %vm657, %v2070, %v2072
      %v2096 = vsel %vm657, %v2072, %v2074
      %v2097 = vsel %vm657, %v2074, %v2076
      %v2098 = vsel %vm657, %v2076, %v2078
      %v2099 = vsel %vm657, %v2078, %v2080
      %v2100 = vsel %vm657, %v2080, %v2082
      %v2101 = vsel %vm657, %v2082, %v2084
      %v2102 = vsel %vm657, %v2084, %v2086
      %v2103 = vsel %vm657, %v2086, %v2088
      %v2104 = vsel %vm657, %v2088, %v2090
      %v2105 = vsel %vm657, %v2090, %v2092
      %v2106 = vsel %vm657, %v2092, %v2094
      %2119 = vst [vmem:[#allocation3 + $0x1e0] sm:$0xff] %v2095
      %2120 = vst [vmem:[#allocation3 + $0x1e8] sm:$0xff] %v2096
      %2121 = vst [vmem:[#allocation3 + $0x1f0] sm:$0xff] %v2097
      %2122 = vst [vmem:[#allocation3 + $0x1f8] sm:$0xff] %v2098
      %2123 = vst [vmem:[#allocation3 + $0x200] sm:$0xff] %v2099
      %2124 = vst [vmem:[#allocation3 + $0x208] sm:$0xff] %v2100
      %2125 = vst [vmem:[#allocation3 + $0x210] sm:$0xff] %v2101
      %2126 = vst [vmem:[#allocation3 + $0x218] sm:$0xff] %v2102
      %2127 = vst [vmem:[#allocation3 + $0x220] sm:$0xff] %v2103
      %2128 = vst [vmem:[#allocation3 + $0x228] sm:$0xff] %v2104
      %2129 = vst [vmem:[#allocation3 + $0x230] sm:$0xff] %v2105
      %2130 = vst [vmem:[#allocation3 + $0x238] sm:$0xff] %v2106
      %v2131 = vld [vmem:[#allocation2] sm:$0xff]
      %v2132 = vld [vmem:[#allocation2 + $0x8] sm:$0xff]
      %v2133 = vld [vmem:[#allocation2 + $0x10] sm:$0xff]
      %v2134 = vld [vmem:[#allocation2 + $0x18] sm:$0xff]
      %v2135 = vld [vmem:[#allocation2 + $0x20] sm:$0xff]
      %v2136 = vld [vmem:[#allocation2 + $0x28] sm:$0xff]
      %v2137 = vld [vmem:[#allocation2 + $0x30] sm:$0xff]
      %v2138 = vld [vmem:[#allocation2 + $0x38] sm:$0xff]
      %v2139 = vld [vmem:[#allocation2 + $0x40] sm:$0xff]
      %v2140 = vld [vmem:[#allocation2 + $0x48] sm:$0xff]
      %v2141 = vld [vmem:[#allocation2 + $0x50] sm:$0xff]
      %v2142 = vld [vmem:[#allocation2 + $0x58] sm:$0xff]
      %v2143 = vld [vmem:[#allocation2 + $0x60] sm:$0xff]
      %2157 = vrot.lane.b32.xlu0 %v2131, 92
      %v2158 = vpop.permute.xlu0 %2157
      %2159 = vrot.lane.b32.xlu0 %v2132, 92
      %v2160 = vpop.permute.xlu0 %2159
      %2161 = vrot.lane.b32.xlu0 %v2133, 92
      %v2162 = vpop.permute.xlu0 %2161
      %2163 = vrot.lane.b32.xlu0 %v2134, 92
      %v2164 = vpop.permute.xlu0 %2163
      %2165 = vrot.lane.b32.xlu0 %v2135, 92
      %v2166 = vpop.permute.xlu0 %2165
      %2167 = vrot.lane.b32.xlu0 %v2136, 92
      %v2168 = vpop.permute.xlu0 %2167
      %2169 = vrot.lane.b32.xlu0 %v2137, 92
      %v2170 = vpop.permute.xlu0 %2169
      %2171 = vrot.lane.b32.xlu0 %v2138, 92
      %v2172 = vpop.permute.xlu0 %2171
      %2173 = vrot.lane.b32.xlu0 %v2139, 92
      %v2174 = vpop.permute.xlu0 %2173
      %2175 = vrot.lane.b32.xlu0 %v2140, 92
      %v2176 = vpop.permute.xlu0 %2175
      %2177 = vrot.lane.b32.xlu0 %v2141, 92
      %v2178 = vpop.permute.xlu0 %2177
      %2179 = vrot.lane.b32.xlu0 %v2142, 92
      %v2180 = vpop.permute.xlu0 %2179
      %2181 = vrot.lane.b32.xlu0 %v2143, 92
      %v2182 = vpop.permute.xlu0 %2181
      %v2183 = vsel %vm746, %v2158, %v2160
      %v2184 = vsel %vm746, %v2160, %v2162
      %v2185 = vsel %vm746, %v2162, %v2164
      %v2186 = vsel %vm746, %v2164, %v2166
      %v2187 = vsel %vm746, %v2166, %v2168
      %v2188 = vsel %vm746, %v2168, %v2170
      %v2189 = vsel %vm746, %v2170, %v2172
      %v2190 = vsel %vm746, %v2172, %v2174
      %v2191 = vsel %vm746, %v2174, %v2176
      %v2192 = vsel %vm746, %v2176, %v2178
      %v2193 = vsel %vm746, %v2178, %v2180
      %v2194 = vsel %vm746, %v2180, %v2182
      %2207 = vst [vmem:[#allocation3 + $0x240] sm:$0xff] %v2183
      %2208 = vst [vmem:[#allocation3 + $0x248] sm:$0xff] %v2184
      %2209 = vst [vmem:[#allocation3 + $0x250] sm:$0xff] %v2185
      %2210 = vst [vmem:[#allocation3 + $0x258] sm:$0xff] %v2186
      %2211 = vst [vmem:[#allocation3 + $0x260] sm:$0xff] %v2187
      %2212 = vst [vmem:[#allocation3 + $0x268] sm:$0xff] %v2188
      %2213 = vst [vmem:[#allocation3 + $0x270] sm:$0xff] %v2189
      %2214 = vst [vmem:[#allocation3 + $0x278] sm:$0xff] %v2190
      %2215 = vst [vmem:[#allocation3 + $0x280] sm:$0xff] %v2191
      %2216 = vst [vmem:[#allocation3 + $0x288] sm:$0xff] %v2192
      %2217 = vst [vmem:[#allocation3 + $0x290] sm:$0xff] %v2193
      %2218 = vst [vmem:[#allocation3 + $0x298] sm:$0xff] %v2194
      %v2219 = vld [vmem:[#allocation2] sm:$0xff]
      %v2220 = vld [vmem:[#allocation2 + $0x8] sm:$0xff]
      %v2221 = vld [vmem:[#allocation2 + $0x10] sm:$0xff]
      %v2222 = vld [vmem:[#allocation2 + $0x18] sm:$0xff]
      %v2223 = vld [vmem:[#allocation2 + $0x20] sm:$0xff]
      %v2224 = vld [vmem:[#allocation2 + $0x28] sm:$0xff]
      %v2225 = vld [vmem:[#allocation2 + $0x30] sm:$0xff]
      %v2226 = vld [vmem:[#allocation2 + $0x38] sm:$0xff]
      %v2227 = vld [vmem:[#allocation2 + $0x40] sm:$0xff]
      %v2228 = vld [vmem:[#allocation2 + $0x48] sm:$0xff]
      %v2229 = vld [vmem:[#allocation2 + $0x50] sm:$0xff]
      %v2230 = vld [vmem:[#allocation2 + $0x58] sm:$0xff]
      %v2231 = vld [vmem:[#allocation2 + $0x60] sm:$0xff]
      %2245 = vrot.lane.b32.xlu0 %v2219, 91
      %v2246 = vpop.permute.xlu0 %2245
      %2247 = vrot.lane.b32.xlu0 %v2220, 91
      %v2248 = vpop.permute.xlu0 %2247
      %2249 = vrot.lane.b32.xlu0 %v2221, 91
      %v2250 = vpop.permute.xlu0 %2249
      %2251 = vrot.lane.b32.xlu0 %v2222, 91
      %v2252 = vpop.permute.xlu0 %2251
      %2253 = vrot.lane.b32.xlu0 %v2223, 91
      %v2254 = vpop.permute.xlu0 %2253
      %2255 = vrot.lane.b32.xlu0 %v2224, 91
      %v2256 = vpop.permute.xlu0 %2255
      %2257 = vrot.lane.b32.xlu0 %v2225, 91
      %v2258 = vpop.permute.xlu0 %2257
      %2259 = vrot.lane.b32.xlu0 %v2226, 91
      %v2260 = vpop.permute.xlu0 %2259
      %2261 = vrot.lane.b32.xlu0 %v2227, 91
      %v2262 = vpop.permute.xlu0 %2261
      %2263 = vrot.lane.b32.xlu0 %v2228, 91
      %v2264 = vpop.permute.xlu0 %2263
      %2265 = vrot.lane.b32.xlu0 %v2229, 91
      %v2266 = vpop.permute.xlu0 %2265
      %2267 = vrot.lane.b32.xlu0 %v2230, 91
      %v2268 = vpop.permute.xlu0 %2267
      %2269 = vrot.lane.b32.xlu0 %v2231, 91
      %v2270 = vpop.permute.xlu0 %2269
      %v2271 = vsel %vm835, %v2246, %v2248
      %v2272 = vsel %vm835, %v2248, %v2250
      %v2273 = vsel %vm835, %v2250, %v2252
      %v2274 = vsel %vm835, %v2252, %v2254
      %v2275 = vsel %vm835, %v2254, %v2256
      %v2276 = vsel %vm835, %v2256, %v2258
      %v2277 = vsel %vm835, %v2258, %v2260
      %v2278 = vsel %vm835, %v2260, %v2262
      %v2279 = vsel %vm835, %v2262, %v2264
      %v2280 = vsel %vm835, %v2264, %v2266
      %v2281 = vsel %vm835, %v2266, %v2268
      %v2282 = vsel %vm835, %v2268, %v2270
      %2295 = vst [vmem:[#allocation3 + $0x2a0] sm:$0xff] %v2271
      %2296 = vst [vmem:[#allocation3 + $0x2a8] sm:$0xff] %v2272
      %2297 = vst [vmem:[#allocation3 + $0x2b0] sm:$0xff] %v2273
      %2298 = vst [vmem:[#allocation3 + $0x2b8] sm:$0xff] %v2274
      %2299 = vst [vmem:[#allocation3 + $0x2c0] sm:$0xff] %v2275
      %2300 = vst [vmem:[#allocation3 + $0x2c8] sm:$0xff] %v2276
      %2301 = vst [vmem:[#allocation3 + $0x2d0] sm:$0xff] %v2277
      %2302 = vst [vmem:[#allocation3 + $0x2d8] sm:$0xff] %v2278
      %2303 = vst [vmem:[#allocation3 + $0x2e0] sm:$0xff] %v2279
      %2304 = vst [vmem:[#allocation3 + $0x2e8] sm:$0xff] %v2280
      %2305 = vst [vmem:[#allocation3 + $0x2f0] sm:$0xff] %v2281
      %2306 = vst [vmem:[#allocation3 + $0x2f8] sm:$0xff] %v2282
      %v2307 = vld [vmem:[#allocation2] sm:$0xff]
      %v2308 = vld [vmem:[#allocation2 + $0x8] sm:$0xff]
      %v2309 = vld [vmem:[#allocation2 + $0x10] sm:$0xff]
      %v2310 = vld [vmem:[#allocation2 + $0x18] sm:$0xff]
      %v2311 = vld [vmem:[#allocation2 + $0x20] sm:$0xff]
      %v2312 = vld [vmem:[#allocation2 + $0x28] sm:$0xff]
      %v2313 = vld [vmem:[#allocation2 + $0x30] sm:$0xff]
      %v2314 = vld [vmem:[#allocation2 + $0x38] sm:$0xff]
      %v2315 = vld [vmem:[#allocation2 + $0x40] sm:$0xff]
      %v2316 = vld [vmem:[#allocation2 + $0x48] sm:$0xff]
      %v2317 = vld [vmem:[#allocation2 + $0x50] sm:$0xff]
      %v2318 = vld [vmem:[#allocation2 + $0x58] sm:$0xff]
      %v2319 = vld [vmem:[#allocation2 + $0x60] sm:$0xff]
      %2333 = vrot.lane.b32.xlu0 %v2307, 90
      %v2334 = vpop.permute.xlu0 %2333
      %2335 = vrot.lane.b32.xlu0 %v2308, 90
      %v2336 = vpop.permute.xlu0 %2335
      %2337 = vrot.lane.b32.xlu0 %v2309, 90
      %v2338 = vpop.permute.xlu0 %2337
      %2339 = vrot.lane.b32.xlu0 %v2310, 90
      %v2340 = vpop.permute.xlu0 %2339
      %2341 = vrot.lane.b32.xlu0 %v2311, 90
      %v2342 = vpop.permute.xlu0 %2341
      %2343 = vrot.lane.b32.xlu0 %v2312, 90
      %v2344 = vpop.permute.xlu0 %2343
      %2345 = vrot.lane.b32.xlu0 %v2313, 90
      %v2346 = vpop.permute.xlu0 %2345
      %2347 = vrot.lane.b32.xlu0 %v2314, 90
      %v2348 = vpop.permute.xlu0 %2347
      %2349 = vrot.lane.b32.xlu0 %v2315, 90
      %v2350 = vpop.permute.xlu0 %2349
      %2351 = vrot.lane.b32.xlu0 %v2316, 90
      %v2352 = vpop.permute.xlu0 %2351
      %2353 = vrot.lane.b32.xlu0 %v2317, 90
      %v2354 = vpop.permute.xlu0 %2353
      %2355 = vrot.lane.b32.xlu0 %v2318, 90
      %v2356 = vpop.permute.xlu0 %2355
      %2357 = vrot.lane.b32.xlu0 %v2319, 90
      %v2358 = vpop.permute.xlu0 %2357
      %v2359 = vsel %vm924, %v2334, %v2336
      %v2360 = vsel %vm924, %v2336, %v2338
      %v2361 = vsel %vm924, %v2338, %v2340
      %v2362 = vsel %vm924, %v2340, %v2342
      %v2363 = vsel %vm924, %v2342, %v2344
      %v2364 = vsel %vm924, %v2344, %v2346
      %v2365 = vsel %vm924, %v2346, %v2348
      %v2366 = vsel %vm924, %v2348, %v2350
      %v2367 = vsel %vm924, %v2350, %v2352
      %v2368 = vsel %vm924, %v2352, %v2354
      %v2369 = vsel %vm924, %v2354, %v2356
      %v2370 = vsel %vm924, %v2356, %v2358
      %2383 = vst [vmem:[#allocation3 + $0x300] sm:$0xff] %v2359
      %2384 = vst [vmem:[#allocation3 + $0x308] sm:$0xff] %v2360
      %2385 = vst [vmem:[#allocation3 + $0x310] sm:$0xff] %v2361
      %2386 = vst [vmem:[#allocation3 + $0x318] sm:$0xff] %v2362
      %2387 = vst [vmem:[#allocation3 + $0x320] sm:$0xff] %v2363
      %2388 = vst [vmem:[#allocation3 + $0x328] sm:$0xff] %v2364
      %2389 = vst [vmem:[#allocation3 + $0x330] sm:$0xff] %v2365
      %2390 = vst [vmem:[#allocation3 + $0x338] sm:$0xff] %v2366
      %2391 = vst [vmem:[#allocation3 + $0x340] sm:$0xff] %v2367
      %2392 = vst [vmem:[#allocation3 + $0x348] sm:$0xff] %v2368
      %2393 = vst [vmem:[#allocation3 + $0x350] sm:$0xff] %v2369
      %2394 = vst [vmem:[#allocation3 + $0x358] sm:$0xff] %v2370
      %s2395 = scalar_lea.vmem %s1, 8
      %v2396 = vld [vmem:[%s2395] sm:$0xff]
      %v2397 = vld [vmem:[#allocation3] sm:$0xff]
      %v2398 = vld [vmem:[#allocation3 + $0x8] sm:$0xff]
      %v2399 = vld [vmem:[#allocation3 + $0x10] sm:$0xff]
      %v2400 = vld [vmem:[#allocation3 + $0x18] sm:$0xff]
      %v2401 = vld [vmem:[#allocation3 + $0x20] sm:$0xff]
      %v2402 = vld [vmem:[#allocation3 + $0x28] sm:$0xff]
      %v2403 = vld [vmem:[#allocation3 + $0x30] sm:$0xff]
      %v2404 = vld [vmem:[#allocation3 + $0x38] sm:$0xff]
      %v2405 = vld [vmem:[#allocation3 + $0x40] sm:$0xff]
      %v2406 = vld [vmem:[#allocation3 + $0x48] sm:$0xff]
      %v2407 = vld [vmem:[#allocation3 + $0x50] sm:$0xff]
      %v2408 = vld [vmem:[#allocation3 + $0x58] sm:$0xff]
      %v2409 = vld [vmem:[#allocation3 + $0x60] sm:$0xff]
      %v2410 = vld [vmem:[#allocation3 + $0x68] sm:$0xff]
      %v2411 = vld [vmem:[#allocation3 + $0x70] sm:$0xff]
      %v2412 = vld [vmem:[#allocation3 + $0x78] sm:$0xff]
      %v2413 = vld [vmem:[#allocation3 + $0x80] sm:$0xff]
      %v2414 = vld [vmem:[#allocation3 + $0x88] sm:$0xff]
      %v2415 = vld [vmem:[#allocation3 + $0x90] sm:$0xff]
      %v2416 = vld [vmem:[#allocation3 + $0x98] sm:$0xff]
      %v2417 = vld [vmem:[#allocation3 + $0xa0] sm:$0xff]
      %v2418 = vld [vmem:[#allocation3 + $0xa8] sm:$0xff]
      %v2419 = vld [vmem:[#allocation3 + $0xb0] sm:$0xff]
      %v2420 = vld [vmem:[#allocation3 + $0xb8] sm:$0xff]
      %v2421 = vld [vmem:[#allocation3 + $0xc0] sm:$0xff]
      %v2422 = vld [vmem:[#allocation3 + $0xc8] sm:$0xff]
      %v2423 = vld [vmem:[#allocation3 + $0xd0] sm:$0xff]
      %v2424 = vld [vmem:[#allocation3 + $0xd8] sm:$0xff]
      %v2425 = vld [vmem:[#allocation3 + $0xe0] sm:$0xff]
      %v2426 = vld [vmem:[#allocation3 + $0xe8] sm:$0xff]
      %v2427 = vld [vmem:[#allocation3 + $0xf0] sm:$0xff]
      %v2428 = vld [vmem:[#allocation3 + $0xf8] sm:$0xff]
      %v2429 = vld [vmem:[#allocation3 + $0x100] sm:$0xff]
      %v2430 = vld [vmem:[#allocation3 + $0x108] sm:$0xff]
      %v2431 = vld [vmem:[#allocation3 + $0x110] sm:$0xff]
      %v2432 = vld [vmem:[#allocation3 + $0x118] sm:$0xff]
      %v2433 = vld [vmem:[#allocation3 + $0x120] sm:$0xff]
      %v2434 = vld [vmem:[#allocation3 + $0x128] sm:$0xff]
      %v2435 = vld [vmem:[#allocation3 + $0x130] sm:$0xff]
      %v2436 = vld [vmem:[#allocation3 + $0x138] sm:$0xff]
      %v2437 = vld [vmem:[#allocation3 + $0x140] sm:$0xff]
      %v2438 = vld [vmem:[#allocation3 + $0x148] sm:$0xff]
      %v2439 = vld [vmem:[#allocation3 + $0x150] sm:$0xff]
      %v2440 = vld [vmem:[#allocation3 + $0x158] sm:$0xff]
      %v2441 = vld [vmem:[#allocation3 + $0x160] sm:$0xff]
      %v2442 = vld [vmem:[#allocation3 + $0x168] sm:$0xff]
      %v2443 = vld [vmem:[#allocation3 + $0x170] sm:$0xff]
      %v2444 = vld [vmem:[#allocation3 + $0x178] sm:$0xff]
      %v2445 = vld [vmem:[#allocation3 + $0x180] sm:$0xff]
      %v2446 = vld [vmem:[#allocation3 + $0x188] sm:$0xff]
      %v2447 = vld [vmem:[#allocation3 + $0x190] sm:$0xff]
      %v2448 = vld [vmem:[#allocation3 + $0x198] sm:$0xff]
      %v2449 = vld [vmem:[#allocation3 + $0x1a0] sm:$0xff]
      %v2450 = vld [vmem:[#allocation3 + $0x1a8] sm:$0xff]
      %v2451 = vld [vmem:[#allocation3 + $0x1b0] sm:$0xff]
      %v2452 = vld [vmem:[#allocation3 + $0x1b8] sm:$0xff]
      %v2453 = vld [vmem:[#allocation3 + $0x1c0] sm:$0xff]
      %v2454 = vld [vmem:[#allocation3 + $0x1c8] sm:$0xff]
      %v2455 = vld [vmem:[#allocation3 + $0x1d0] sm:$0xff]
      %v2456 = vld [vmem:[#allocation3 + $0x1d8] sm:$0xff]
      %v2457 = vld [vmem:[#allocation3 + $0x1e0] sm:$0xff]
      %v2458 = vld [vmem:[#allocation3 + $0x1e8] sm:$0xff]
      %v2459 = vld [vmem:[#allocation3 + $0x1f0] sm:$0xff]
      %v2460 = vld [vmem:[#allocation3 + $0x1f8] sm:$0xff]
      %v2461 = vld [vmem:[#allocation3 + $0x200] sm:$0xff]
      %v2462 = vld [vmem:[#allocation3 + $0x208] sm:$0xff]
      %v2463 = vld [vmem:[#allocation3 + $0x210] sm:$0xff]
      %v2464 = vld [vmem:[#allocation3 + $0x218] sm:$0xff]
      %v2465 = vld [vmem:[#allocation3 + $0x220] sm:$0xff]
      %v2466 = vld [vmem:[#allocation3 + $0x228] sm:$0xff]
      %v2467 = vld [vmem:[#allocation3 + $0x230] sm:$0xff]
      %v2468 = vld [vmem:[#allocation3 + $0x238] sm:$0xff]
      %v2469 = vld [vmem:[#allocation3 + $0x240] sm:$0xff]
      %v2470 = vld [vmem:[#allocation3 + $0x248] sm:$0xff]
      %v2471 = vld [vmem:[#allocation3 + $0x250] sm:$0xff]
      %v2472 = vld [vmem:[#allocation3 + $0x258] sm:$0xff]
      %v2473 = vld [vmem:[#allocation3 + $0x260] sm:$0xff]
      %v2474 = vld [vmem:[#allocation3 + $0x268] sm:$0xff]
      %v2475 = vld [vmem:[#allocation3 + $0x270] sm:$0xff]
      %v2476 = vld [vmem:[#allocation3 + $0x278] sm:$0xff]
      %v2477 = vld [vmem:[#allocation3 + $0x280] sm:$0xff]
      %v2478 = vld [vmem:[#allocation3 + $0x288] sm:$0xff]
      %v2479 = vld [vmem:[#allocation3 + $0x290] sm:$0xff]
      %v2480 = vld [vmem:[#allocation3 + $0x298] sm:$0xff]
      %v2481 = vld [vmem:[#allocation3 + $0x2a0] sm:$0xff]
      %v2482 = vld [vmem:[#allocation3 + $0x2a8] sm:$0xff]
      %v2483 = vld [vmem:[#allocation3 + $0x2b0] sm:$0xff]
      %v2484 = vld [vmem:[#allocation3 + $0x2b8] sm:$0xff]
      %v2485 = vld [vmem:[#allocation3 + $0x2c0] sm:$0xff]
      %v2486 = vld [vmem:[#allocation3 + $0x2c8] sm:$0xff]
      %v2487 = vld [vmem:[#allocation3 + $0x2d0] sm:$0xff]
      %v2488 = vld [vmem:[#allocation3 + $0x2d8] sm:$0xff]
      %v2489 = vld [vmem:[#allocation3 + $0x2e0] sm:$0xff]
      %v2490 = vld [vmem:[#allocation3 + $0x2e8] sm:$0xff]
      %v2491 = vld [vmem:[#allocation3 + $0x2f0] sm:$0xff]
      %v2492 = vld [vmem:[#allocation3 + $0x2f8] sm:$0xff]
      %v2493 = vld [vmem:[#allocation3 + $0x300] sm:$0xff]
      %v2494 = vld [vmem:[#allocation3 + $0x308] sm:$0xff]
      %v2495 = vld [vmem:[#allocation3 + $0x310] sm:$0xff]
      %v2496 = vld [vmem:[#allocation3 + $0x318] sm:$0xff]
      %v2497 = vld [vmem:[#allocation3 + $0x320] sm:$0xff]
      %v2498 = vld [vmem:[#allocation3 + $0x328] sm:$0xff]
      %v2499 = vld [vmem:[#allocation3 + $0x330] sm:$0xff]
      %v2500 = vld [vmem:[#allocation3 + $0x338] sm:$0xff]
      %v2501 = vld [vmem:[#allocation3 + $0x340] sm:$0xff]
      %v2502 = vld [vmem:[#allocation3 + $0x348] sm:$0xff]
      %v2503 = vld [vmem:[#allocation3 + $0x350] sm:$0xff]
      %v2504 = vld [vmem:[#allocation3 + $0x358] sm:$0xff]
      %s2505 = scalar_lea.vmem %s2, 8
      %v2506 = vld [vmem:[%s2505] sm:$0xff]
      %2508 = vset.pattern.permute.xlu0 0
      %2509 = vperm.xlu0 %2508, %v2506
      %v2510 = vpop.permute.xlu0 %2509
      %v2513 = vsel %vm1076, %v2396, 0
      %2515 = vmatprep.subr.mxu0 %v2398
      %2516 = vmatpush1.msra.mxu0 %v2397
      %2517 = vmatprep.subr.mxu0 %v2410
      %2518 = vmatpush1.msra.mxu0 %v2409
      %2519 = vmatprep.subr.mxu0 %v2422
      %2520 = vmatpush1.msra.mxu0 %v2421
      %2521 = vmatprep.subr.mxu0 %v2434
      %2522 = vmatpush1.msra.mxu0 %v2433
      %2523 = vmatprep.subr.mxu0 %v2446
      %2524 = vmatpush1.msra.mxu0 %v2445
      %2525 = vmatprep.subr.mxu0 %v2458
      %2526 = vmatpush1.msra.mxu0 %v2457
      %2527 = vmatprep.subr.mxu0 %v2470
      %2528 = vmatpush1.msra.mxu0 %v2469
      %2529 = vmatprep.subr.mxu0 %v2482
      %2530 = vmatpush1.msra.mxu0 %v2481
      %2531 = vmatprep.subr.mxu0 %v2494
      %2532 = vmatpush1.msra.mxu0 %v2493
      %2533 = vmatprep.subr.mxu0 0.0
      %2534 = vmatpush1.msra.mxu0 0.0
      %2535 = vmatprep.subr.mxu0 0.0
      %2536 = vmatpush1.msra.mxu0 0.0
      %2537 = vmatprep.subr.mxu0 0.0
      %2538 = vmatpush1.msra.mxu0 0.0
      %2539 = vmatprep.subr.mxu0 0.0
      %2540 = vmatpush1.msra.mxu0 0.0
      %2541 = vmatprep.subr.mxu0 0.0
      %2542 = vmatpush1.msra.mxu0 0.0
      %2543 = vmatprep.subr.mxu0 0.0
      %2544 = vmatpush1.msra.mxu0 0.0
      %2545 = vmatprep.subr.mxu0 0.0
      %2546 = vmatpush1.msra.mxu0 0.0
      %2547 = vmatprep.subr.mxu0 0.0
      %2548 = vmatpush1.msra.mxu0 0.0
      %2549 = vmatprep.subr.mxu0 0.0
      %2550 = vmatpush1.msra.mxu0 0.0
      %2551 = vmatprep.subr.mxu0 0.0
      %2552 = vmatpush1.msra.mxu0 0.0
      %2553 = vmatprep.subr.mxu0 0.0
      %2554 = vmatpush1.msra.mxu0 0.0
      %2555 = vmatprep.subr.mxu0 0.0
      %2556 = vmatpush1.msra.mxu0 0.0
      %2557 = vmatprep.subr.mxu0 0.0
      %2558 = vmatpush1.msra.mxu0 0.0
      %2559 = vmatprep.subr.mxu0 0.0
      %2560 = vmatpush1.msra.mxu0 0.0
      %2561 = vmatprep.subr.mxu0 0.0
      %2562 = vmatpush1.msra.mxu0 0.0
      %2563 = vmatprep.subr.mxu0 0.0
      %2564 = vmatpush1.msra.mxu0 0.0
      %2565 = vmatprep.subr.mxu0 0.0
      %2566 = vmatpush1.msra.mxu0 0.0
      %2567 = vmatprep.subr.mxu0 0.0
      %2568 = vmatpush1.msra.mxu0 0.0
      %2569 = vmatprep.subr.mxu0 0.0
      %2570 = vmatpush1.msra.mxu0 0.0
      %2571 = vmatprep.subr.mxu0 0.0
      %2572 = vmatpush1.msra.mxu0 0.0
      %2573 = vmatprep.subr.mxu0 0.0
      %2574 = vmatpush1.msra.mxu0 0.0
      %2575 = vmatprep.subr.mxu0 0.0
      %2576 = vmatpush1.msra.mxu0 0.0
      %2577 = vmatprep.subr.mxu0 0.0
      %2578 = vmatpush1.msra.mxu0 0.0
      %2579 = vmatprep.mubr.f32.mxu0 0.0
      %2580 = vmatmul.mubr.f32.gmra.mrb[0].mxu0 %v2513
      %v2581 = vpop.f32.mrb[0].mxu0
      %v2582 = vadd.f32 %v2510, %v2581
      %v2583 = vpop.f32.mrb[0].mxu0
      %v2584 = vadd.f32 %v2510, %v2583
      %2585 = vdwg.mxu0
      %2586 = vmatprep.subr.mxu0 %v2400
      %2587 = vmatpush1.msra.mxu0 %v2399
      %2588 = vmatprep.subr.mxu0 %v2412
      %2589 = vmatpush1.msra.mxu0 %v2411
      %2590 = vmatprep.subr.mxu0 %v2424
      %2591 = vmatpush1.msra.mxu0 %v2423
      %2592 = vmatprep.subr.mxu0 %v2436
      %2593 = vmatpush1.msra.mxu0 %v2435
      %2594 = vmatprep.subr.mxu0 %v2448
      %2595 = vmatpush1.msra.mxu0 %v2447
      %2596 = vmatprep.subr.mxu0 %v2460
      %2597 = vmatpush1.msra.mxu0 %v2459
      %2598 = vmatprep.subr.mxu0 %v2472
      %2599 = vmatpush1.msra.mxu0 %v2471
      %2600 = vmatprep.subr.mxu0 %v2484
      %2601 = vmatpush1.msra.mxu0 %v2483
      %2602 = vmatprep.subr.mxu0 %v2496
      %2603 = vmatpush1.msra.mxu0 %v2495
      %2604 = vmatprep.subr.mxu0 0.0
      %2605 = vmatpush1.msra.mxu0 0.0
      %2606 = vmatprep.subr.mxu0 0.0
      %2607 = vmatpush1.msra.mxu0 0.0
      %2608 = vmatprep.subr.mxu0 0.0
      %2609 = vmatpush1.msra.mxu0 0.0
      %2610 = vmatprep.subr.mxu0 0.0
      %2611 = vmatpush1.msra.mxu0 0.0
      %2612 = vmatprep.subr.mxu0 0.0
      %2613 = vmatpush1.msra.mxu0 0.0
      %2614 = vmatprep.subr.mxu0 0.0
      %2615 = vmatpush1.msra.mxu0 0.0
      %2616 = vmatprep.subr.mxu0 0.0
      %2617 = vmatpush1.msra.mxu0 0.0
      %2618 = vmatprep.subr.mxu0 0.0
      %2619 = vmatpush1.msra.mxu0 0.0
      %2620 = vmatprep.subr.mxu0 0.0
      %2621 = vmatpush1.msra.mxu0 0.0
      %2622 = vmatprep.subr.mxu0 0.0
      %2623 = vmatpush1.msra.mxu0 0.0
      %2624 = vmatprep.subr.mxu0 0.0
      %2625 = vmatpush1.msra.mxu0 0.0
      %2626 = vmatprep.subr.mxu0 0.0
      %2627 = vmatpush1.msra.mxu0 0.0
      %2628 = vmatprep.subr.mxu0 0.0
      %2629 = vmatpush1.msra.mxu0 0.0
      %2630 = vmatprep.subr.mxu0 0.0
      %2631 = vmatpush1.msra.mxu0 0.0
      %2632 = vmatprep.subr.mxu0 0.0
      %2633 = vmatpush1.msra.mxu0 0.0
      %2634 = vmatprep.subr.mxu0 0.0
      %2635 = vmatpush1.msra.mxu0 0.0
      %2636 = vmatprep.subr.mxu0 0.0
      %2637 = vmatpush1.msra.mxu0 0.0
      %2638 = vmatprep.subr.mxu0 0.0
      %2639 = vmatpush1.msra.mxu0 0.0
      %2640 = vmatprep.subr.mxu0 0.0
      %2641 = vmatpush1.msra.mxu0 0.0
      %2642 = vmatprep.subr.mxu0 0.0
      %2643 = vmatpush1.msra.mxu0 0.0
      %2644 = vmatprep.subr.mxu0 0.0
      %2645 = vmatpush1.msra.mxu0 0.0
      %2646 = vmatprep.subr.mxu0 0.0
      %2647 = vmatpush1.msra.mxu0 0.0
      %2648 = vmatprep.subr.mxu0 0.0
      %2649 = vmatpush1.msra.mxu0 0.0
      %2650 = vmatprep.mubr.f32.mxu0 0.0
      %2651 = vmatmul.mubr.f32.gmra.mrb[0].mxu0 %v2513
      %v2652 = vpop.f32.mrb[0].mxu0
      %v2653 = vadd.f32 %v2510, %v2652
      %v2654 = vpop.f32.mrb[0].mxu0
      %v2655 = vadd.f32 %v2510, %v2654
      %2656 = vdwg.mxu0
      %2657 = vmatprep.subr.mxu0 %v2402
      %2658 = vmatpush1.msra.mxu0 %v2401
      %2659 = vmatprep.subr.mxu0 %v2414
      %2660 = vmatpush1.msra.mxu0 %v2413
      %2661 = vmatprep.subr.mxu0 %v2426
      %2662 = vmatpush1.msra.mxu0 %v2425
      %2663 = vmatprep.subr.mxu0 %v2438
      %2664 = vmatpush1.msra.mxu0 %v2437
      %2665 = vmatprep.subr.mxu0 %v2450
      %2666 = vmatpush1.msra.mxu0 %v2449
      %2667 = vmatprep.subr.mxu0 %v2462
      %2668 = vmatpush1.msra.mxu0 %v2461
      %2669 = vmatprep.subr.mxu0 %v2474
      %2670 = vmatpush1.msra.mxu0 %v2473
      %2671 = vmatprep.subr.mxu0 %v2486
      %2672 = vmatpush1.msra.mxu0 %v2485
      %2673 = vmatprep.subr.mxu0 %v2498
      %2674 = vmatpush1.msra.mxu0 %v2497
      %2675 = vmatprep.subr.mxu0 0.0
      %2676 = vmatpush1.msra.mxu0 0.0
      %2677 = vmatprep.subr.mxu0 0.0
      %2678 = vmatpush1.msra.mxu0 0.0
      %2679 = vmatprep.subr.mxu0 0.0
      %2680 = vmatpush1.msra.mxu0 0.0
      %2681 = vmatprep.subr.mxu0 0.0
      %2682 = vmatpush1.msra.mxu0 0.0
      %2683 = vmatprep.subr.mxu0 0.0
      %2684 = vmatpush1.msra.mxu0 0.0
      %2685 = vmatprep.subr.mxu0 0.0
      %2686 = vmatpush1.msra.mxu0 0.0
      %2687 = vmatprep.subr.mxu0 0.0
      %2688 = vmatpush1.msra.mxu0 0.0
      %2689 = vmatprep.subr.mxu0 0.0
      %2690 = vmatpush1.msra.mxu0 0.0
      %2691 = vmatprep.subr.mxu0 0.0
      %2692 = vmatpush1.msra.mxu0 0.0
      %2693 = vmatprep.subr.mxu0 0.0
      %2694 = vmatpush1.msra.mxu0 0.0
      %2695 = vmatprep.subr.mxu0 0.0
      %2696 = vmatpush1.msra.mxu0 0.0
      %2697 = vmatprep.subr.mxu0 0.0
      %2698 = vmatpush1.msra.mxu0 0.0
      %2699 = vmatprep.subr.mxu0 0.0
      %2700 = vmatpush1.msra.mxu0 0.0
      %2701 = vmatprep.subr.mxu0 0.0
      %2702 = vmatpush1.msra.mxu0 0.0
      %2703 = vmatprep.subr.mxu0 0.0
      %2704 = vmatpush1.msra.mxu0 0.0
      %2705 = vmatprep.subr.mxu0 0.0
      %2706 = vmatpush1.msra.mxu0 0.0
      %2707 = vmatprep.subr.mxu0 0.0
      %2708 = vmatpush1.msra.mxu0 0.0
      %2709 = vmatprep.subr.mxu0 0.0
      %2710 = vmatpush1.msra.mxu0 0.0
      %2711 = vmatprep.subr.mxu0 0.0
      %2712 = vmatpush1.msra.mxu0 0.0
      %2713 = vmatprep.subr.mxu0 0.0
      %2714 = vmatpush1.msra.mxu0 0.0
      %2715 = vmatprep.subr.mxu0 0.0
      %2716 = vmatpush1.msra.mxu0 0.0
      %2717 = vmatprep.subr.mxu0 0.0
      %2718 = vmatpush1.msra.mxu0 0.0
      %2719 = vmatprep.subr.mxu0 0.0
      %2720 = vmatpush1.msra.mxu0 0.0
      %2721 = vmatprep.mubr.f32.mxu0 0.0
      %2722 = vmatmul.mubr.f32.gmra.mrb[0].mxu0 %v2513
      %v2723 = vpop.f32.mrb[0].mxu0
      %v2724 = vadd.f32 %v2510, %v2723
      %v2725 = vpop.f32.mrb[0].mxu0
      %v2726 = vadd.f32 %v2510, %v2725
      %2727 = vdwg.mxu0
      %2728 = vmatprep.subr.mxu0 %v2404
      %2729 = vmatpush1.msra.mxu0 %v2403
      %2730 = vmatprep.subr.mxu0 %v2416
      %2731 = vmatpush1.msra.mxu0 %v2415
      %2732 = vmatprep.subr.mxu0 %v2428
      %2733 = vmatpush1.msra.mxu0 %v2427
      %2734 = vmatprep.subr.mxu0 %v2440
      %2735 = vmatpush1.msra.mxu0 %v2439
      %2736 = vmatprep.subr.mxu0 %v2452
      %2737 = vmatpush1.msra.mxu0 %v2451
      %2738 = vmatprep.subr.mxu0 %v2464
      %2739 = vmatpush1.msra.mxu0 %v2463
      %2740 = vmatprep.subr.mxu0 %v2476
      %2741 = vmatpush1.msra.mxu0 %v2475
      %2742 = vmatprep.subr.mxu0 %v2488
      %2743 = vmatpush1.msra.mxu0 %v2487
      %2744 = vmatprep.subr.mxu0 %v2500
      %2745 = vmatpush1.msra.mxu0 %v2499
      %2746 = vmatprep.subr.mxu0 0.0
      %2747 = vmatpush1.msra.mxu0 0.0
      %2748 = vmatprep.subr.mxu0 0.0
      %2749 = vmatpush1.msra.mxu0 0.0
      %2750 = vmatprep.subr.mxu0 0.0
      %2751 = vmatpush1.msra.mxu0 0.0
      %2752 = vmatprep.subr.mxu0 0.0
      %2753 = vmatpush1.msra.mxu0 0.0
      %2754 = vmatprep.subr.mxu0 0.0
      %2755 = vmatpush1.msra.mxu0 0.0
      %2756 = vmatprep.subr.mxu0 0.0
      %2757 = vmatpush1.msra.mxu0 0.0
      %2758 = vmatprep.subr.mxu0 0.0
      %2759 = vmatpush1.msra.mxu0 0.0
      %2760 = vmatprep.subr.mxu0 0.0
      %2761 = vmatpush1.msra.mxu0 0.0
      %2762 = vmatprep.subr.mxu0 0.0
      %2763 = vmatpush1.msra.mxu0 0.0
      %2764 = vmatprep.subr.mxu0 0.0
      %2765 = vmatpush1.msra.mxu0 0.0
      %2766 = vmatprep.subr.mxu0 0.0
      %2767 = vmatpush1.msra.mxu0 0.0
      %2768 = vmatprep.subr.mxu0 0.0
      %2769 = vmatpush1.msra.mxu0 0.0
      %2770 = vmatprep.subr.mxu0 0.0
      %2771 = vmatpush1.msra.mxu0 0.0
      %2772 = vmatprep.subr.mxu0 0.0
      %2773 = vmatpush1.msra.mxu0 0.0
      %2774 = vmatprep.subr.mxu0 0.0
      %2775 = vmatpush1.msra.mxu0 0.0
      %2776 = vmatprep.subr.mxu0 0.0
      %2777 = vmatpush1.msra.mxu0 0.0
      %2778 = vmatprep.subr.mxu0 0.0
      %2779 = vmatpush1.msra.mxu0 0.0
      %2780 = vmatprep.subr.mxu0 0.0
      %2781 = vmatpush1.msra.mxu0 0.0
      %2782 = vmatprep.subr.mxu0 0.0
      %2783 = vmatpush1.msra.mxu0 0.0
      %2784 = vmatprep.subr.mxu0 0.0
      %2785 = vmatpush1.msra.mxu0 0.0
      %2786 = vmatprep.subr.mxu0 0.0
      %2787 = vmatpush1.msra.mxu0 0.0
      %2788 = vmatprep.subr.mxu0 0.0
      %2789 = vmatpush1.msra.mxu0 0.0
      %2790 = vmatprep.subr.mxu0 0.0
      %2791 = vmatpush1.msra.mxu0 0.0
      %2792 = vmatprep.mubr.f32.mxu0 0.0
      %2793 = vmatmul.mubr.f32.gmra.mrb[0].mxu0 %v2513
      %v2794 = vpop.f32.mrb[0].mxu0
      %v2795 = vadd.f32 %v2510, %v2794
      %v2796 = vpop.f32.mrb[0].mxu0
      %v2797 = vadd.f32 %v2510, %v2796
      %2798 = vdwg.mxu0
      %2799 = vmatprep.subr.mxu0 %v2406
      %2800 = vmatpush1.msra.mxu0 %v2405
      %2801 = vmatprep.subr.mxu0 %v2418
      %2802 = vmatpush1.msra.mxu0 %v2417
      %2803 = vmatprep.subr.mxu0 %v2430
      %2804 = vmatpush1.msra.mxu0 %v2429
      %2805 = vmatprep.subr.mxu0 %v2442
      %2806 = vmatpush1.msra.mxu0 %v2441
      %2807 = vmatprep.subr.mxu0 %v2454
      %2808 = vmatpush1.msra.mxu0 %v2453
      %2809 = vmatprep.subr.mxu0 %v2466
      %2810 = vmatpush1.msra.mxu0 %v2465
      %2811 = vmatprep.subr.mxu0 %v2478
      %2812 = vmatpush1.msra.mxu0 %v2477
      %2813 = vmatprep.subr.mxu0 %v2490
      %2814 = vmatpush1.msra.mxu0 %v2489
      %2815 = vmatprep.subr.mxu0 %v2502
      %2816 = vmatpush1.msra.mxu0 %v2501
      %2817 = vmatprep.subr.mxu0 0.0
      %2818 = vmatpush1.msra.mxu0 0.0
      %2819 = vmatprep.subr.mxu0 0.0
      %2820 = vmatpush1.msra.mxu0 0.0
      %2821 = vmatprep.subr.mxu0 0.0
      %2822 = vmatpush1.msra.mxu0 0.0
      %2823 = vmatprep.subr.mxu0 0.0
      %2824 = vmatpush1.msra.mxu0 0.0
      %2825 = vmatprep.subr.mxu0 0.0
      %2826 = vmatpush1.msra.mxu0 0.0
      %2827 = vmatprep.subr.mxu0 0.0
      %2828 = vmatpush1.msra.mxu0 0.0
      %2829 = vmatprep.subr.mxu0 0.0
      %2830 = vmatpush1.msra.mxu0 0.0
      %2831 = vmatprep.subr.mxu0 0.0
      %2832 = vmatpush1.msra.mxu0 0.0
      %2833 = vmatprep.subr.mxu0 0.0
      %2834 = vmatpush1.msra.mxu0 0.0
      %2835 = vmatprep.subr.mxu0 0.0
      %2836 = vmatpush1.msra.mxu0 0.0
      %2837 = vmatprep.subr.mxu0 0.0
      %2838 = vmatpush1.msra.mxu0 0.0
      %2839 = vmatprep.subr.mxu0 0.0
      %2840 = vmatpush1.msra.mxu0 0.0
      %2841 = vmatprep.subr.mxu0 0.0
      %2842 = vmatpush1.msra.mxu0 0.0
      %2843 = vmatprep.subr.mxu0 0.0
      %2844 = vmatpush1.msra.mxu0 0.0
      %2845 = vmatprep.subr.mxu0 0.0
      %2846 = vmatpush1.msra.mxu0 0.0
      %2847 = vmatprep.subr.mxu0 0.0
      %2848 = vmatpush1.msra.mxu0 0.0
      %2849 = vmatprep.subr.mxu0 0.0
      %2850 = vmatpush1.msra.mxu0 0.0
      %2851 = vmatprep.subr.mxu0 0.0
      %2852 = vmatpush1.msra.mxu0 0.0
      %2853 = vmatprep.subr.mxu0 0.0
      %2854 = vmatpush1.msra.mxu0 0.0
      %2855 = vmatprep.subr.mxu0 0.0
      %2856 = vmatpush1.msra.mxu0 0.0
      %2857 = vmatprep.subr.mxu0 0.0
      %2858 = vmatpush1.msra.mxu0 0.0
      %2859 = vmatprep.subr.mxu0 0.0
      %2860 = vmatpush1.msra.mxu0 0.0
      %2861 = vmatprep.subr.mxu0 0.0
      %2862 = vmatpush1.msra.mxu0 0.0
      %2863 = vmatprep.mubr.f32.mxu0 0.0
      %2864 = vmatmul.mubr.f32.gmra.mrb[0].mxu0 %v2513
      %v2865 = vpop.f32.mrb[0].mxu0
      %v2866 = vadd.f32 %v2510, %v2865
      %v2867 = vpop.f32.mrb[0].mxu0
      %v2868 = vadd.f32 %v2510, %v2867
      %2869 = vdwg.mxu0
      %2870 = vmatprep.subr.mxu0 %v2408
      %2871 = vmatpush1.msra.mxu0 %v2407
      %2872 = vmatprep.subr.mxu0 %v2420
      %2873 = vmatpush1.msra.mxu0 %v2419
      %2874 = vmatprep.subr.mxu0 %v2432
      %2875 = vmatpush1.msra.mxu0 %v2431
      %2876 = vmatprep.subr.mxu0 %v2444
      %2877 = vmatpush1.msra.mxu0 %v2443
      %2878 = vmatprep.subr.mxu0 %v2456
      %2879 = vmatpush1.msra.mxu0 %v2455
      %2880 = vmatprep.subr.mxu0 %v2468
      %2881 = vmatpush1.msra.mxu0 %v2467
      %2882 = vmatprep.subr.mxu0 %v2480
      %2883 = vmatpush1.msra.mxu0 %v2479
      %2884 = vmatprep.subr.mxu0 %v2492
      %2885 = vmatpush1.msra.mxu0 %v2491
      %2886 = vmatprep.subr.mxu0 %v2504
      %2887 = vmatpush1.msra.mxu0 %v2503
      %2888 = vmatprep.subr.mxu0 0.0
      %2889 = vmatpush1.msra.mxu0 0.0
      %2890 = vmatprep.subr.mxu0 0.0
      %2891 = vmatpush1.msra.mxu0 0.0
      %2892 = vmatprep.subr.mxu0 0.0
      %2893 = vmatpush1.msra.mxu0 0.0
      %2894 = vmatprep.subr.mxu0 0.0
      %2895 = vmatpush1.msra.mxu0 0.0
      %2896 = vmatprep.subr.mxu0 0.0
      %2897 = vmatpush1.msra.mxu0 0.0
      %2898 = vmatprep.subr.mxu0 0.0
      %2899 = vmatpush1.msra.mxu0 0.0
      %2900 = vmatprep.subr.mxu0 0.0
      %2901 = vmatpush1.msra.mxu0 0.0
      %2902 = vmatprep.subr.mxu0 0.0
      %2903 = vmatpush1.msra.mxu0 0.0
      %2904 = vmatprep.subr.mxu0 0.0
      %2905 = vmatpush1.msra.mxu0 0.0
      %2906 = vmatprep.subr.mxu0 0.0
      %2907 = vmatpush1.msra.mxu0 0.0
      %2908 = vmatprep.subr.mxu0 0.0
      %2909 = vmatpush1.msra.mxu0 0.0
      %2910 = vmatprep.subr.mxu0 0.0
      %2911 = vmatpush1.msra.mxu0 0.0
      %2912 = vmatprep.subr.mxu0 0.0
      %2913 = vmatpush1.msra.mxu0 0.0
      %2914 = vmatprep.subr.mxu0 0.0
      %2915 = vmatpush1.msra.mxu0 0.0
      %2916 = vmatprep.subr.mxu0 0.0
      %2917 = vmatpush1.msra.mxu0 0.0
      %2918 = vmatprep.subr.mxu0 0.0
      %2919 = vmatpush1.msra.mxu0 0.0
      %2920 = vmatprep.subr.mxu0 0.0
      %2921 = vmatpush1.msra.mxu0 0.0
      %2922 = vmatprep.subr.mxu0 0.0
      %2923 = vmatpush1.msra.mxu0 0.0
      %2924 = vmatprep.subr.mxu0 0.0
      %2925 = vmatpush1.msra.mxu0 0.0
      %2926 = vmatprep.subr.mxu0 0.0
      %2927 = vmatpush1.msra.mxu0 0.0
      %2928 = vmatprep.subr.mxu0 0.0
      %2929 = vmatpush1.msra.mxu0 0.0
      %2930 = vmatprep.subr.mxu0 0.0
      %2931 = vmatpush1.msra.mxu0 0.0
      %2932 = vmatprep.subr.mxu0 0.0
      %2933 = vmatpush1.msra.mxu0 0.0
      %2934 = vmatprep.mubr.f32.mxu0 0.0
      %2935 = vmatmul.mubr.f32.gmra.mrb[0].mxu0 %v2513
      %v2936 = vpop.f32.mrb[0].mxu0
      %v2937 = vadd.f32 %v2510, %v2936
      %v2938 = vpop.f32.mrb[0].mxu0
      %v2939 = vadd.f32 %v2510, %v2938
      %2940 = vdwg.mxu0
      %v2941 = vround.ne.pseudo %v2582
      %v2942 = vround.ne.pseudo %v2584
      %v2943 = vround.ne.pseudo %v2653
      %v2944 = vround.ne.pseudo %v2655
      %v2945 = vround.ne.pseudo %v2724
      %v2946 = vround.ne.pseudo %v2726
      %v2947 = vround.ne.pseudo %v2795
      %v2948 = vround.ne.pseudo %v2797
      %v2949 = vround.ne.pseudo %v2866
      %v2950 = vround.ne.pseudo %v2868
      %v2951 = vround.ne.pseudo %v2937
      %v2952 = vround.ne.pseudo %v2939
      %v2953 = vmul.f32 %v2941, %v1523
      %v2954 = vmul.f32 %v2942, %v1527
      %v2955 = vmul.f32 %v2943, %v1531
      %v2956 = vmul.f32 %v2944, %v1535
      %v2957 = vmul.f32 %v2945, %v1539
      %v2958 = vmul.f32 %v2946, %v1543
      %v2959 = vmul.f32 %v2947, %v1547
      %v2960 = vmul.f32 %v2948, %v1551
      %v2961 = vmul.f32 %v2949, %v1555
      %v2962 = vmul.f32 %v2950, %v1559
      %v2963 = vmul.f32 %v2951, %v1563
      %v2964 = vmul.f32 %v2952, %v1567
      %2977 = vrot.lane.b32.xlu0 %v2953, 19
      %v2978 = vpop.permute.xlu0 %2977
      %2979 = vrot.lane.b32.xlu0 %v2954, 19
      %v2980 = vpop.permute.xlu0 %2979
      %2981 = vrot.lane.b32.xlu0 %v2955, 19
      %v2982 = vpop.permute.xlu0 %2981
      %2983 = vrot.lane.b32.xlu0 %v2956, 19
      %v2984 = vpop.permute.xlu0 %2983
      %2985 = vrot.lane.b32.xlu0 %v2957, 19
      %v2986 = vpop.permute.xlu0 %2985
      %2987 = vrot.lane.b32.xlu0 %v2958, 19
      %v2988 = vpop.permute.xlu0 %2987
      %2989 = vrot.lane.b32.xlu0 %v2959, 19
      %v2990 = vpop.permute.xlu0 %2989
      %2991 = vrot.lane.b32.xlu0 %v2960, 19
      %v2992 = vpop.permute.xlu0 %2991
      %2993 = vrot.lane.b32.xlu0 %v2961, 19
      %v2994 = vpop.permute.xlu0 %2993
      %2995 = vrot.lane.b32.xlu0 %v2962, 19
      %v2996 = vpop.permute.xlu0 %2995
      %2997 = vrot.lane.b32.xlu0 %v2963, 19
      %v2998 = vpop.permute.xlu0 %2997
      %2999 = vrot.lane.b32.xlu0 %v2964, 19
      %v3000 = vpop.permute.xlu0 %2999
      %v3001 = vsel %vm1628, %v2978, %v2980
      %v3002 = vsel %vm1628, %v2980, %v2982
      %v3003 = vsel %vm1628, %v2982, %v2984
      %v3004 = vsel %vm1628, %v2984, %v2986
      %v3005 = vsel %vm1628, %v2986, %v2988
      %v3006 = vsel %vm1628, %v2988, %v2990
      %v3007 = vsel %vm1628, %v2990, %v2992
      %v3008 = vsel %vm1628, %v2992, %v2994
      %v3009 = vsel %vm1628, %v2994, %v2996
      %v3010 = vsel %vm1628, %v2996, %v2998
      %v3011 = vsel %vm1628, %v2998, %v3000
      %3025 = vst.msk [vmem:[#allocation2] sm:$0xff] %vm1653, %v2978
      %3026 = vst [vmem:[#allocation2 + $0x8] sm:$0xff] %v3001
      %3027 = vst [vmem:[#allocation2 + $0x10] sm:$0xff] %v3002
      %3028 = vst [vmem:[#allocation2 + $0x18] sm:$0xff] %v3003
      %3029 = vst [vmem:[#allocation2 + $0x20] sm:$0xff] %v3004
      %3030 = vst [vmem:[#allocation2 + $0x28] sm:$0xff] %v3005
      %3031 = vst [vmem:[#allocation2 + $0x30] sm:$0xff] %v3006
      %3032 = vst [vmem:[#allocation2 + $0x38] sm:$0xff] %v3007
      %3033 = vst [vmem:[#allocation2 + $0x40] sm:$0xff] %v3008
      %3034 = vst [vmem:[#allocation2 + $0x48] sm:$0xff] %v3009
      %3035 = vst [vmem:[#allocation2 + $0x50] sm:$0xff] %v3010
      %3036 = vst [vmem:[#allocation2 + $0x58] sm:$0xff] %v3011
      %3037 = vst.msk [vmem:[#allocation2 + $0x60] sm:$0xff] %vm1628, %v3000
      %v3038 = vld [vmem:[#allocation2] sm:$0xff]
      %v3039 = vld [vmem:[#allocation2 + $0x8] sm:$0xff]
      %v3040 = vld [vmem:[#allocation2 + $0x10] sm:$0xff]
      %v3041 = vld [vmem:[#allocation2 + $0x18] sm:$0xff]
      %v3042 = vld [vmem:[#allocation2 + $0x20] sm:$0xff]
      %v3043 = vld [vmem:[#allocation2 + $0x28] sm:$0xff]
      %v3044 = vld [vmem:[#allocation2 + $0x30] sm:$0xff]
      %v3045 = vld [vmem:[#allocation2 + $0x38] sm:$0xff]
      %v3046 = vld [vmem:[#allocation2 + $0x40] sm:$0xff]
      %v3047 = vld [vmem:[#allocation2 + $0x48] sm:$0xff]
      %v3048 = vld [vmem:[#allocation2 + $0x50] sm:$0xff]
      %v3049 = vld [vmem:[#allocation2 + $0x58] sm:$0xff]
      %3050 = vst [vmem:[#allocation3] sm:$0xff] %v3038
      %3051 = vst [vmem:[#allocation3 + $0x8] sm:$0xff] %v3039
      %3052 = vst [vmem:[#allocation3 + $0x10] sm:$0xff] %v3040
      %3053 = vst [vmem:[#allocation3 + $0x18] sm:$0xff] %v3041
      %3054 = vst [vmem:[#allocation3 + $0x20] sm:$0xff] %v3042
      %3055 = vst [vmem:[#allocation3 + $0x28] sm:$0xff] %v3043
      %3056 = vst [vmem:[#allocation3 + $0x30] sm:$0xff] %v3044
      %3057 = vst [vmem:[#allocation3 + $0x38] sm:$0xff] %v3045
      %3058 = vst [vmem:[#allocation3 + $0x40] sm:$0xff] %v3046
      %3059 = vst [vmem:[#allocation3 + $0x48] sm:$0xff] %v3047
      %3060 = vst [vmem:[#allocation3 + $0x50] sm:$0xff] %v3048
      %3061 = vst [vmem:[#allocation3 + $0x58] sm:$0xff] %v3049
      %v3062 = vld [vmem:[#allocation2] sm:$0xff]
      %v3063 = vld [vmem:[#allocation2 + $0x8] sm:$0xff]
      %v3064 = vld [vmem:[#allocation2 + $0x10] sm:$0xff]
      %v3065 = vld [vmem:[#allocation2 + $0x18] sm:$0xff]
      %v3066 = vld [vmem:[#allocation2 + $0x20] sm:$0xff]
      %v3067 = vld [vmem:[#allocation2 + $0x28] sm:$0xff]
      %v3068 = vld [vmem:[#allocation2 + $0x30] sm:$0xff]
      %v3069 = vld [vmem:[#allocation2 + $0x38] sm:$0xff]
      %v3070 = vld [vmem:[#allocation2 + $0x40] sm:$0xff]
      %v3071 = vld [vmem:[#allocation2 + $0x48] sm:$0xff]
      %v3072 = vld [vmem:[#allocation2 + $0x50] sm:$0xff]
      %v3073 = vld [vmem:[#allocation2 + $0x58] sm:$0xff]
      %v3074 = vld [vmem:[#allocation2 + $0x60] sm:$0xff]
      %3088 = vrot.lane.b32.xlu0 %v3062, 127
      %v3089 = vpop.permute.xlu0 %3088
      %3090 = vrot.lane.b32.xlu0 %v3063, 127
      %v3091 = vpop.permute.xlu0 %3090
      %3092 = vrot.lane.b32.xlu0 %v3064, 127
      %v3093 = vpop.permute.xlu0 %3092
      %3094 = vrot.lane.b32.xlu0 %v3065, 127
      %v3095 = vpop.permute.xlu0 %3094
      %3096 = vrot.lane.b32.xlu0 %v3066, 127
      %v3097 = vpop.permute.xlu0 %3096
      %3098 = vrot.lane.b32.xlu0 %v3067, 127
      %v3099 = vpop.permute.xlu0 %3098
      %3100 = vrot.lane.b32.xlu0 %v3068, 127
      %v3101 = vpop.permute.xlu0 %3100
      %3102 = vrot.lane.b32.xlu0 %v3069, 127
      %v3103 = vpop.permute.xlu0 %3102
      %3104 = vrot.lane.b32.xlu0 %v3070, 127
      %v3105 = vpop.permute.xlu0 %3104
      %3106 = vrot.lane.b32.xlu0 %v3071, 127
      %v3107 = vpop.permute.xlu0 %3106
      %3108 = vrot.lane.b32.xlu0 %v3072, 127
      %v3109 = vpop.permute.xlu0 %3108
      %3110 = vrot.lane.b32.xlu0 %v3073, 127
      %v3111 = vpop.permute.xlu0 %3110
      %3112 = vrot.lane.b32.xlu0 %v3074, 127
      %v3113 = vpop.permute.xlu0 %3112
      %v3114 = vsel %vm301, %v3089, %v3091
      %v3115 = vsel %vm301, %v3091, %v3093
      %v3116 = vsel %vm301, %v3093, %v3095
      %v3117 = vsel %vm301, %v3095, %v3097
      %v3118 = vsel %vm301, %v3097, %v3099
      %v3119 = vsel %vm301, %v3099, %v3101
      %v3120 = vsel %vm301, %v3101, %v3103
      %v3121 = vsel %vm301, %v3103, %v3105
      %v3122 = vsel %vm301, %v3105, %v3107
      %v3123 = vsel %vm301, %v3107, %v3109
      %v3124 = vsel %vm301, %v3109, %v3111
      %v3125 = vsel %vm301, %v3111, %v3113
      %3138 = vst [vmem:[#allocation3 + $0x60] sm:$0xff] %v3114
      %3139 = vst [vmem:[#allocation3 + $0x68] sm:$0xff] %v3115
      %3140 = vst [vmem:[#allocation3 + $0x70] sm:$0xff] %v3116
      %3141 = vst [vmem:[#allocation3 + $0x78] sm:$0xff] %v3117
      %3142 = vst [vmem:[#allocation3 + $0x80] sm:$0xff] %v3118
      %3143 = vst [vmem:[#allocation3 + $0x88] sm:$0xff] %v3119
      %3144 = vst [vmem:[#allocation3 + $0x90] sm:$0xff] %v3120
      %3145 = vst [vmem:[#allocation3 + $0x98] sm:$0xff] %v3121
      %3146 = vst [vmem:[#allocation3 + $0xa0] sm:$0xff] %v3122
      %3147 = vst [vmem:[#allocation3 + $0xa8] sm:$0xff] %v3123
      %3148 = vst [vmem:[#allocation3 + $0xb0] sm:$0xff] %v3124
      %3149 = vst [vmem:[#allocation3 + $0xb8] sm:$0xff] %v3125
      %v3150 = vld [vmem:[#allocation2] sm:$0xff]
      %v3151 = vld [vmem:[#allocation2 + $0x8] sm:$0xff]
      %v3152 = vld [vmem:[#allocation2 + $0x10] sm:$0xff]
      %v3153 = vld [vmem:[#allocation2 + $0x18] sm:$0xff]
      %v3154 = vld [vmem:[#allocation2 + $0x20] sm:$0xff]
      %v3155 = vld [vmem:[#allocation2 + $0x28] sm:$0xff]
      %v3156 = vld [vmem:[#allocation2 + $0x30] sm:$0xff]
      %v3157 = vld [vmem:[#allocation2 + $0x38] sm:$0xff]
      %v3158 = vld [vmem:[#allocation2 + $0x40] sm:$0xff]
      %v3159 = vld [vmem:[#allocation2 + $0x48] sm:$0xff]
      %v3160 = vld [vmem:[#allocation2 + $0x50] sm:$0xff]
      %v3161 = vld [vmem:[#allocation2 + $0x58] sm:$0xff]
      %v3162 = vld [vmem:[#allocation2 + $0x60] sm:$0xff]
      %3176 = vrot.lane.b32.xlu0 %v3150, 126
      %v3177 = vpop.permute.xlu0 %3176
      %3178 = vrot.lane.b32.xlu0 %v3151, 126
      %v3179 = vpop.permute.xlu0 %3178
      %3180 = vrot.lane.b32.xlu0 %v3152, 126
      %v3181 = vpop.permute.xlu0 %3180
      %3182 = vrot.lane.b32.xlu0 %v3153, 126
      %v3183 = vpop.permute.xlu0 %3182
      %3184 = vrot.lane.b32.xlu0 %v3154, 126
      %v3185 = vpop.permute.xlu0 %3184
      %3186 = vrot.lane.b32.xlu0 %v3155, 126
      %v3187 = vpop.permute.xlu0 %3186
      %3188 = vrot.lane.b32.xlu0 %v3156, 126
      %v3189 = vpop.permute.xlu0 %3188
      %3190 = vrot.lane.b32.xlu0 %v3157, 126
      %v3191 = vpop.permute.xlu0 %3190
      %3192 = vrot.lane.b32.xlu0 %v3158, 126
      %v3193 = vpop.permute.xlu0 %3192
      %3194 = vrot.lane.b32.xlu0 %v3159, 126
      %v3195 = vpop.permute.xlu0 %3194
      %3196 = vrot.lane.b32.xlu0 %v3160, 126
      %v3197 = vpop.permute.xlu0 %3196
      %3198 = vrot.lane.b32.xlu0 %v3161, 126
      %v3199 = vpop.permute.xlu0 %3198
      %3200 = vrot.lane.b32.xlu0 %v3162, 126
      %v3201 = vpop.permute.xlu0 %3200
      %v3202 = vsel %vm390, %v3177, %v3179
      %v3203 = vsel %vm390, %v3179, %v3181
      %v3204 = vsel %vm390, %v3181, %v3183
      %v3205 = vsel %vm390, %v3183, %v3185
      %v3206 = vsel %vm390, %v3185, %v3187
      %v3207 = vsel %vm390, %v3187, %v3189
      %v3208 = vsel %vm390, %v3189, %v3191
      %v3209 = vsel %vm390, %v3191, %v3193
      %v3210 = vsel %vm390, %v3193, %v3195
      %v3211 = vsel %vm390, %v3195, %v3197
      %v3212 = vsel %vm390, %v3197, %v3199
      %v3213 = vsel %vm390, %v3199, %v3201
      %3226 = vst [vmem:[#allocation3 + $0xc0] sm:$0xff] %v3202
      %3227 = vst [vmem:[#allocation3 + $0xc8] sm:$0xff] %v3203
      %3228 = vst [vmem:[#allocation3 + $0xd0] sm:$0xff] %v3204
      %3229 = vst [vmem:[#allocation3 + $0xd8] sm:$0xff] %v3205
      %3230 = vst [vmem:[#allocation3 + $0xe0] sm:$0xff] %v3206
      %3231 = vst [vmem:[#allocation3 + $0xe8] sm:$0xff] %v3207
      %3232 = vst [vmem:[#allocation3 + $0xf0] sm:$0xff] %v3208
      %3233 = vst [vmem:[#allocation3 + $0xf8] sm:$0xff] %v3209
      %3234 = vst [vmem:[#allocation3 + $0x100] sm:$0xff] %v3210
      %3235 = vst [vmem:[#allocation3 + $0x108] sm:$0xff] %v3211
      %3236 = vst [vmem:[#allocation3 + $0x110] sm:$0xff] %v3212
      %3237 = vst [vmem:[#allocation3 + $0x118] sm:$0xff] %v3213
      %v3238 = vld [vmem:[#allocation2] sm:$0xff]
      %v3239 = vld [vmem:[#allocation2 + $0x8] sm:$0xff]
      %v3240 = vld [vmem:[#allocation2 + $0x10] sm:$0xff]
      %v3241 = vld [vmem:[#allocation2 + $0x18] sm:$0xff]
      %v3242 = vld [vmem:[#allocation2 + $0x20] sm:$0xff]
      %v3243 = vld [vmem:[#allocation2 + $0x28] sm:$0xff]
      %v3244 = vld [vmem:[#allocation2 + $0x30] sm:$0xff]
      %v3245 = vld [vmem:[#allocation2 + $0x38] sm:$0xff]
      %v3246 = vld [vmem:[#allocation2 + $0x40] sm:$0xff]
      %v3247 = vld [vmem:[#allocation2 + $0x48] sm:$0xff]
      %v3248 = vld [vmem:[#allocation2 + $0x50] sm:$0xff]
      %v3249 = vld [vmem:[#allocation2 + $0x58] sm:$0xff]
      %v3250 = vld [vmem:[#allocation2 + $0x60] sm:$0xff]
      %3264 = vrot.lane.b32.xlu0 %v3238, 110
      %v3265 = vpop.permute.xlu0 %3264
      %3266 = vrot.lane.b32.xlu0 %v3239, 110
      %v3267 = vpop.permute.xlu0 %3266
      %3268 = vrot.lane.b32.xlu0 %v3240, 110
      %v3269 = vpop.permute.xlu0 %3268
      %3270 = vrot.lane.b32.xlu0 %v3241, 110
      %v3271 = vpop.permute.xlu0 %3270
      %3272 = vrot.lane.b32.xlu0 %v3242, 110
      %v3273 = vpop.permute.xlu0 %3272
      %3274 = vrot.lane.b32.xlu0 %v3243, 110
      %v3275 = vpop.permute.xlu0 %3274
      %3276 = vrot.lane.b32.xlu0 %v3244, 110
      %v3277 = vpop.permute.xlu0 %3276
      %3278 = vrot.lane.b32.xlu0 %v3245, 110
      %v3279 = vpop.permute.xlu0 %3278
      %3280 = vrot.lane.b32.xlu0 %v3246, 110
      %v3281 = vpop.permute.xlu0 %3280
      %3282 = vrot.lane.b32.xlu0 %v3247, 110
      %v3283 = vpop.permute.xlu0 %3282
      %3284 = vrot.lane.b32.xlu0 %v3248, 110
      %v3285 = vpop.permute.xlu0 %3284
      %3286 = vrot.lane.b32.xlu0 %v3249, 110
      %v3287 = vpop.permute.xlu0 %3286
      %3288 = vrot.lane.b32.xlu0 %v3250, 110
      %v3289 = vpop.permute.xlu0 %3288
      %v3290 = vsel %vm479, %v3265, %v3267
      %v3291 = vsel %vm479, %v3267, %v3269
      %v3292 = vsel %vm479, %v3269, %v3271
      %v3293 = vsel %vm479, %v3271, %v3273
      %v3294 = vsel %vm479, %v3273, %v3275
      %v3295 = vsel %vm479, %v3275, %v3277
      %v3296 = vsel %vm479, %v3277, %v3279
      %v3297 = vsel %vm479, %v3279, %v3281
      %v3298 = vsel %vm479, %v3281, %v3283
      %v3299 = vsel %vm479, %v3283, %v3285
      %v3300 = vsel %vm479, %v3285, %v3287
      %v3301 = vsel %vm479, %v3287, %v3289
      %3314 = vst [vmem:[#allocation3 + $0x120] sm:$0xff] %v3290
      %3315 = vst [vmem:[#allocation3 + $0x128] sm:$0xff] %v3291
      %3316 = vst [vmem:[#allocation3 + $0x130] sm:$0xff] %v3292
      %3317 = vst [vmem:[#allocation3 + $0x138] sm:$0xff] %v3293
      %3318 = vst [vmem:[#allocation3 + $0x140] sm:$0xff] %v3294
      %3319 = vst [vmem:[#allocation3 + $0x148] sm:$0xff] %v3295
      %3320 = vst [vmem:[#allocation3 + $0x150] sm:$0xff] %v3296
      %3321 = vst [vmem:[#allocation3 + $0x158] sm:$0xff] %v3297
      %3322 = vst [vmem:[#allocation3 + $0x160] sm:$0xff] %v3298
      %3323 = vst [vmem:[#allocation3 + $0x168] sm:$0xff] %v3299
      %3324 = vst [vmem:[#allocation3 + $0x170] sm:$0xff] %v3300
      %3325 = vst [vmem:[#allocation3 + $0x178] sm:$0xff] %v3301
      %v3326 = vld [vmem:[#allocation2] sm:$0xff]
      %v3327 = vld [vmem:[#allocation2 + $0x8] sm:$0xff]
      %v3328 = vld [vmem:[#allocation2 + $0x10] sm:$0xff]
      %v3329 = vld [vmem:[#allocation2 + $0x18] sm:$0xff]
      %v3330 = vld [vmem:[#allocation2 + $0x20] sm:$0xff]
      %v3331 = vld [vmem:[#allocation2 + $0x28] sm:$0xff]
      %v3332 = vld [vmem:[#allocation2 + $0x30] sm:$0xff]
      %v3333 = vld [vmem:[#allocation2 + $0x38] sm:$0xff]
      %v3334 = vld [vmem:[#allocation2 + $0x40] sm:$0xff]
      %v3335 = vld [vmem:[#allocation2 + $0x48] sm:$0xff]
      %v3336 = vld [vmem:[#allocation2 + $0x50] sm:$0xff]
      %v3337 = vld [vmem:[#allocation2 + $0x58] sm:$0xff]
      %v3338 = vld [vmem:[#allocation2 + $0x60] sm:$0xff]
      %3352 = vrot.lane.b32.xlu0 %v3326, 109
      %v3353 = vpop.permute.xlu0 %3352
      %3354 = vrot.lane.b32.xlu0 %v3327, 109
      %v3355 = vpop.permute.xlu0 %3354
      %3356 = vrot.lane.b32.xlu0 %v3328, 109
      %v3357 = vpop.permute.xlu0 %3356
      %3358 = vrot.lane.b32.xlu0 %v3329, 109
      %v3359 = vpop.permute.xlu0 %3358
      %3360 = vrot.lane.b32.xlu0 %v3330, 109
      %v3361 = vpop.permute.xlu0 %3360
      %3362 = vrot.lane.b32.xlu0 %v3331, 109
      %v3363 = vpop.permute.xlu0 %3362
      %3364 = vrot.lane.b32.xlu0 %v3332, 109
      %v3365 = vpop.permute.xlu0 %3364
      %3366 = vrot.lane.b32.xlu0 %v3333, 109
      %v3367 = vpop.permute.xlu0 %3366
      %3368 = vrot.lane.b32.xlu0 %v3334, 109
      %v3369 = vpop.permute.xlu0 %3368
      %3370 = vrot.lane.b32.xlu0 %v3335, 109
      %v3371 = vpop.permute.xlu0 %3370
      %3372 = vrot.lane.b32.xlu0 %v3336, 109
      %v3373 = vpop.permute.xlu0 %3372
      %3374 = vrot.lane.b32.xlu0 %v3337, 109
      %v3375 = vpop.permute.xlu0 %3374
      %3376 = vrot.lane.b32.xlu0 %v3338, 109
      %v3377 = vpop.permute.xlu0 %3376
      %v3378 = vsel %vm568, %v3353, %v3355
      %v3379 = vsel %vm568, %v3355, %v3357
      %v3380 = vsel %vm568, %v3357, %v3359
      %v3381 = vsel %vm568, %v3359, %v3361
      %v3382 = vsel %vm568, %v3361, %v3363
      %v3383 = vsel %vm568, %v3363, %v3365
      %v3384 = vsel %vm568, %v3365, %v3367
      %v3385 = vsel %vm568, %v3367, %v3369
      %v3386 = vsel %vm568, %v3369, %v3371
      %v3387 = vsel %vm568, %v3371, %v3373
      %v3388 = vsel %vm568, %v3373, %v3375
      %v3389 = vsel %vm568, %v3375, %v3377
      %3402 = vst [vmem:[#allocation3 + $0x180] sm:$0xff] %v3378
      %3403 = vst [vmem:[#allocation3 + $0x188] sm:$0xff] %v3379
      %3404 = vst [vmem:[#allocation3 + $0x190] sm:$0xff] %v3380
      %3405 = vst [vmem:[#allocation3 + $0x198] sm:$0xff] %v3381
      %3406 = vst [vmem:[#allocation3 + $0x1a0] sm:$0xff] %v3382
      %3407 = vst [vmem:[#allocation3 + $0x1a8] sm:$0xff] %v3383
      %3408 = vst [vmem:[#allocation3 + $0x1b0] sm:$0xff] %v3384
      %3409 = vst [vmem:[#allocation3 + $0x1b8] sm:$0xff] %v3385
      %3410 = vst [vmem:[#allocation3 + $0x1c0] sm:$0xff] %v3386
      %3411 = vst [vmem:[#allocation3 + $0x1c8] sm:$0xff] %v3387
      %3412 = vst [vmem:[#allocation3 + $0x1d0] sm:$0xff] %v3388
      %3413 = vst [vmem:[#allocation3 + $0x1d8] sm:$0xff] %v3389
      %v3414 = vld [vmem:[#allocation2] sm:$0xff]
      %v3415 = vld [vmem:[#allocation2 + $0x8] sm:$0xff]
      %v3416 = vld [vmem:[#allocation2 + $0x10] sm:$0xff]
      %v3417 = vld [vmem:[#allocation2 + $0x18] sm:$0xff]
      %v3418 = vld [vmem:[#allocation2 + $0x20] sm:$0xff]
      %v3419 = vld [vmem:[#allocation2 + $0x28] sm:$0xff]
      %v3420 = vld [vmem:[#allocation2 + $0x30] sm:$0xff]
      %v3421 = vld [vmem:[#allocation2 + $0x38] sm:$0xff]
      %v3422 = vld [vmem:[#allocation2 + $0x40] sm:$0xff]
      %v3423 = vld [vmem:[#allocation2 + $0x48] sm:$0xff]
      %v3424 = vld [vmem:[#allocation2 + $0x50] sm:$0xff]
      %v3425 = vld [vmem:[#allocation2 + $0x58] sm:$0xff]
      %v3426 = vld [vmem:[#allocation2 + $0x60] sm:$0xff]
      %3440 = vrot.lane.b32.xlu0 %v3414, 108
      %v3441 = vpop.permute.xlu0 %3440
      %3442 = vrot.lane.b32.xlu0 %v3415, 108
      %v3443 = vpop.permute.xlu0 %3442
      %3444 = vrot.lane.b32.xlu0 %v3416, 108
      %v3445 = vpop.permute.xlu0 %3444
      %3446 = vrot.lane.b32.xlu0 %v3417, 108
      %v3447 = vpop.permute.xlu0 %3446
      %3448 = vrot.lane.b32.xlu0 %v3418, 108
      %v3449 = vpop.permute.xlu0 %3448
      %3450 = vrot.lane.b32.xlu0 %v3419, 108
      %v3451 = vpop.permute.xlu0 %3450
      %3452 = vrot.lane.b32.xlu0 %v3420, 108
      %v3453 = vpop.permute.xlu0 %3452
      %3454 = vrot.lane.b32.xlu0 %v3421, 108
      %v3455 = vpop.permute.xlu0 %3454
      %3456 = vrot.lane.b32.xlu0 %v3422, 108
      %v3457 = vpop.permute.xlu0 %3456
      %3458 = vrot.lane.b32.xlu0 %v3423, 108
      %v3459 = vpop.permute.xlu0 %3458
      %3460 = vrot.lane.b32.xlu0 %v3424, 108
      %v3461 = vpop.permute.xlu0 %3460
      %3462 = vrot.lane.b32.xlu0 %v3425, 108
      %v3463 = vpop.permute.xlu0 %3462
      %3464 = vrot.lane.b32.xlu0 %v3426, 108
      %v3465 = vpop.permute.xlu0 %3464
      %v3466 = vsel %vm657, %v3441, %v3443
      %v3467 = vsel %vm657, %v3443, %v3445
      %v3468 = vsel %vm657, %v3445, %v3447
      %v3469 = vsel %vm657, %v3447, %v3449
      %v3470 = vsel %vm657, %v3449, %v3451
      %v3471 = vsel %vm657, %v3451, %v3453
      %v3472 = vsel %vm657, %v3453, %v3455
      %v3473 = vsel %vm657, %v3455, %v3457
      %v3474 = vsel %vm657, %v3457, %v3459
      %v3475 = vsel %vm657, %v3459, %v3461
      %v3476 = vsel %vm657, %v3461, %v3463
      %v3477 = vsel %vm657, %v3463, %v3465
      %3490 = vst [vmem:[#allocation3 + $0x1e0] sm:$0xff] %v3466
      %3491 = vst [vmem:[#allocation3 + $0x1e8] sm:$0xff] %v3467
      %3492 = vst [vmem:[#allocation3 + $0x1f0] sm:$0xff] %v3468
      %3493 = vst [vmem:[#allocation3 + $0x1f8] sm:$0xff] %v3469
      %3494 = vst [vmem:[#allocation3 + $0x200] sm:$0xff] %v3470
      %3495 = vst [vmem:[#allocation3 + $0x208] sm:$0xff] %v3471
      %3496 = vst [vmem:[#allocation3 + $0x210] sm:$0xff] %v3472
      %3497 = vst [vmem:[#allocation3 + $0x218] sm:$0xff] %v3473
      %3498 = vst [vmem:[#allocation3 + $0x220] sm:$0xff] %v3474
      %3499 = vst [vmem:[#allocation3 + $0x228] sm:$0xff] %v3475
      %3500 = vst [vmem:[#allocation3 + $0x230] sm:$0xff] %v3476
      %3501 = vst [vmem:[#allocation3 + $0x238] sm:$0xff] %v3477
      %v3502 = vld [vmem:[#allocation2] sm:$0xff]
      %v3503 = vld [vmem:[#allocation2 + $0x8] sm:$0xff]
      %v3504 = vld [vmem:[#allocation2 + $0x10] sm:$0xff]
      %v3505 = vld [vmem:[#allocation2 + $0x18] sm:$0xff]
      %v3506 = vld [vmem:[#allocation2 + $0x20] sm:$0xff]
      %v3507 = vld [vmem:[#allocation2 + $0x28] sm:$0xff]
      %v3508 = vld [vmem:[#allocation2 + $0x30] sm:$0xff]
      %v3509 = vld [vmem:[#allocation2 + $0x38] sm:$0xff]
      %v3510 = vld [vmem:[#allocation2 + $0x40] sm:$0xff]
      %v3511 = vld [vmem:[#allocation2 + $0x48] sm:$0xff]
      %v3512 = vld [vmem:[#allocation2 + $0x50] sm:$0xff]
      %v3513 = vld [vmem:[#allocation2 + $0x58] sm:$0xff]
      %v3514 = vld [vmem:[#allocation2 + $0x60] sm:$0xff]
      %3528 = vrot.lane.b32.xlu0 %v3502, 92
      %v3529 = vpop.permute.xlu0 %3528
      %3530 = vrot.lane.b32.xlu0 %v3503, 92
      %v3531 = vpop.permute.xlu0 %3530
      %3532 = vrot.lane.b32.xlu0 %v3504, 92
      %v3533 = vpop.permute.xlu0 %3532
      %3534 = vrot.lane.b32.xlu0 %v3505, 92
      %v3535 = vpop.permute.xlu0 %3534
      %3536 = vrot.lane.b32.xlu0 %v3506, 92
      %v3537 = vpop.permute.xlu0 %3536
      %3538 = vrot.lane.b32.xlu0 %v3507, 92
      %v3539 = vpop.permute.xlu0 %3538
      %3540 = vrot.lane.b32.xlu0 %v3508, 92
      %v3541 = vpop.permute.xlu0 %3540
      %3542 = vrot.lane.b32.xlu0 %v3509, 92
      %v3543 = vpop.permute.xlu0 %3542
      %3544 = vrot.lane.b32.xlu0 %v3510, 92
      %v3545 = vpop.permute.xlu0 %3544
      %3546 = vrot.lane.b32.xlu0 %v3511, 92
      %v3547 = vpop.permute.xlu0 %3546
      %3548 = vrot.lane.b32.xlu0 %v3512, 92
      %v3549 = vpop.permute.xlu0 %3548
      %3550 = vrot.lane.b32.xlu0 %v3513, 92
      %v3551 = vpop.permute.xlu0 %3550
      %3552 = vrot.lane.b32.xlu0 %v3514, 92
      %v3553 = vpop.permute.xlu0 %3552
      %v3554 = vsel %vm746, %v3529, %v3531
      %v3555 = vsel %vm746, %v3531, %v3533
      %v3556 = vsel %vm746, %v3533, %v3535
      %v3557 = vsel %vm746, %v3535, %v3537
      %v3558 = vsel %vm746, %v3537, %v3539
      %v3559 = vsel %vm746, %v3539, %v3541
      %v3560 = vsel %vm746, %v3541, %v3543
      %v3561 = vsel %vm746, %v3543, %v3545
      %v3562 = vsel %vm746, %v3545, %v3547
      %v3563 = vsel %vm746, %v3547, %v3549
      %v3564 = vsel %vm746, %v3549, %v3551
      %v3565 = vsel %vm746, %v3551, %v3553
      %3578 = vst [vmem:[#allocation3 + $0x240] sm:$0xff] %v3554
      %3579 = vst [vmem:[#allocation3 + $0x248] sm:$0xff] %v3555
      %3580 = vst [vmem:[#allocation3 + $0x250] sm:$0xff] %v3556
      %3581 = vst [vmem:[#allocation3 + $0x258] sm:$0xff] %v3557
      %3582 = vst [vmem:[#allocation3 + $0x260] sm:$0xff] %v3558
      %3583 = vst [vmem:[#allocation3 + $0x268] sm:$0xff] %v3559
      %3584 = vst [vmem:[#allocation3 + $0x270] sm:$0xff] %v3560
      %3585 = vst [vmem:[#allocation3 + $0x278] sm:$0xff] %v3561
      %3586 = vst [vmem:[#allocation3 + $0x280] sm:$0xff] %v3562
      %3587 = vst [vmem:[#allocation3 + $0x288] sm:$0xff] %v3563
      %3588 = vst [vmem:[#allocation3 + $0x290] sm:$0xff] %v3564
      %3589 = vst [vmem:[#allocation3 + $0x298] sm:$0xff] %v3565
      %v3590 = vld [vmem:[#allocation2] sm:$0xff]
      %v3591 = vld [vmem:[#allocation2 + $0x8] sm:$0xff]
      %v3592 = vld [vmem:[#allocation2 + $0x10] sm:$0xff]
      %v3593 = vld [vmem:[#allocation2 + $0x18] sm:$0xff]
      %v3594 = vld [vmem:[#allocation2 + $0x20] sm:$0xff]
      %v3595 = vld [vmem:[#allocation2 + $0x28] sm:$0xff]
      %v3596 = vld [vmem:[#allocation2 + $0x30] sm:$0xff]
      %v3597 = vld [vmem:[#allocation2 + $0x38] sm:$0xff]
      %v3598 = vld [vmem:[#allocation2 + $0x40] sm:$0xff]
      %v3599 = vld [vmem:[#allocation2 + $0x48] sm:$0xff]
      %v3600 = vld [vmem:[#allocation2 + $0x50] sm:$0xff]
      %v3601 = vld [vmem:[#allocation2 + $0x58] sm:$0xff]
      %v3602 = vld [vmem:[#allocation2 + $0x60] sm:$0xff]
      %3616 = vrot.lane.b32.xlu0 %v3590, 91
      %v3617 = vpop.permute.xlu0 %3616
      %3618 = vrot.lane.b32.xlu0 %v3591, 91
      %v3619 = vpop.permute.xlu0 %3618
      %3620 = vrot.lane.b32.xlu0 %v3592, 91
      %v3621 = vpop.permute.xlu0 %3620
      %3622 = vrot.lane.b32.xlu0 %v3593, 91
      %v3623 = vpop.permute.xlu0 %3622
      %3624 = vrot.lane.b32.xlu0 %v3594, 91
      %v3625 = vpop.permute.xlu0 %3624
      %3626 = vrot.lane.b32.xlu0 %v3595, 91
      %v3627 = vpop.permute.xlu0 %3626
      %3628 = vrot.lane.b32.xlu0 %v3596, 91
      %v3629 = vpop.permute.xlu0 %3628
      %3630 = vrot.lane.b32.xlu0 %v3597, 91
      %v3631 = vpop.permute.xlu0 %3630
      %3632 = vrot.lane.b32.xlu0 %v3598, 91
      %v3633 = vpop.permute.xlu0 %3632
      %3634 = vrot.lane.b32.xlu0 %v3599, 91
      %v3635 = vpop.permute.xlu0 %3634
      %3636 = vrot.lane.b32.xlu0 %v3600, 91
      %v3637 = vpop.permute.xlu0 %3636
      %3638 = vrot.lane.b32.xlu0 %v3601, 91
      %v3639 = vpop.permute.xlu0 %3638
      %3640 = vrot.lane.b32.xlu0 %v3602, 91
      %v3641 = vpop.permute.xlu0 %3640
      %v3642 = vsel %vm835, %v3617, %v3619
      %v3643 = vsel %vm835, %v3619, %v3621
      %v3644 = vsel %vm835, %v3621, %v3623
      %v3645 = vsel %vm835, %v3623, %v3625
      %v3646 = vsel %vm835, %v3625, %v3627
      %v3647 = vsel %vm835, %v3627, %v3629
      %v3648 = vsel %vm835, %v3629, %v3631
      %v3649 = vsel %vm835, %v3631, %v3633
      %v3650 = vsel %vm835, %v3633, %v3635
      %v3651 = vsel %vm835, %v3635, %v3637
      %v3652 = vsel %vm835, %v3637, %v3639
      %v3653 = vsel %vm835, %v3639, %v3641
      %3666 = vst [vmem:[#allocation3 + $0x2a0] sm:$0xff] %v3642
      %3667 = vst [vmem:[#allocation3 + $0x2a8] sm:$0xff] %v3643
      %3668 = vst [vmem:[#allocation3 + $0x2b0] sm:$0xff] %v3644
      %3669 = vst [vmem:[#allocation3 + $0x2b8] sm:$0xff] %v3645
      %3670 = vst [vmem:[#allocation3 + $0x2c0] sm:$0xff] %v3646
      %3671 = vst [vmem:[#allocation3 + $0x2c8] sm:$0xff] %v3647
      %3672 = vst [vmem:[#allocation3 + $0x2d0] sm:$0xff] %v3648
      %3673 = vst [vmem:[#allocation3 + $0x2d8] sm:$0xff] %v3649
      %3674 = vst [vmem:[#allocation3 + $0x2e0] sm:$0xff] %v3650
      %3675 = vst [vmem:[#allocation3 + $0x2e8] sm:$0xff] %v3651
      %3676 = vst [vmem:[#allocation3 + $0x2f0] sm:$0xff] %v3652
      %3677 = vst [vmem:[#allocation3 + $0x2f8] sm:$0xff] %v3653
      %v3678 = vld [vmem:[#allocation2] sm:$0xff]
      %v3679 = vld [vmem:[#allocation2 + $0x8] sm:$0xff]
      %v3680 = vld [vmem:[#allocation2 + $0x10] sm:$0xff]
      %v3681 = vld [vmem:[#allocation2 + $0x18] sm:$0xff]
      %v3682 = vld [vmem:[#allocation2 + $0x20] sm:$0xff]
      %v3683 = vld [vmem:[#allocation2 + $0x28] sm:$0xff]
      %v3684 = vld [vmem:[#allocation2 + $0x30] sm:$0xff]
      %v3685 = vld [vmem:[#allocation2 + $0x38] sm:$0xff]
      %v3686 = vld [vmem:[#allocation2 + $0x40] sm:$0xff]
      %v3687 = vld [vmem:[#allocation2 + $0x48] sm:$0xff]
      %v3688 = vld [vmem:[#allocation2 + $0x50] sm:$0xff]
      %v3689 = vld [vmem:[#allocation2 + $0x58] sm:$0xff]
      %v3690 = vld [vmem:[#allocation2 + $0x60] sm:$0xff]
      %3704 = vrot.lane.b32.xlu0 %v3678, 90
      %v3705 = vpop.permute.xlu0 %3704
      %3706 = vrot.lane.b32.xlu0 %v3679, 90
      %v3707 = vpop.permute.xlu0 %3706
      %3708 = vrot.lane.b32.xlu0 %v3680, 90
      %v3709 = vpop.permute.xlu0 %3708
      %3710 = vrot.lane.b32.xlu0 %v3681, 90
      %v3711 = vpop.permute.xlu0 %3710
      %3712 = vrot.lane.b32.xlu0 %v3682, 90
      %v3713 = vpop.permute.xlu0 %3712
      %3714 = vrot.lane.b32.xlu0 %v3683, 90
      %v3715 = vpop.permute.xlu0 %3714
      %3716 = vrot.lane.b32.xlu0 %v3684, 90
      %v3717 = vpop.permute.xlu0 %3716
      %3718 = vrot.lane.b32.xlu0 %v3685, 90
      %v3719 = vpop.permute.xlu0 %3718
      %3720 = vrot.lane.b32.xlu0 %v3686, 90
      %v3721 = vpop.permute.xlu0 %3720
      %3722 = vrot.lane.b32.xlu0 %v3687, 90
      %v3723 = vpop.permute.xlu0 %3722
      %3724 = vrot.lane.b32.xlu0 %v3688, 90
      %v3725 = vpop.permute.xlu0 %3724
      %3726 = vrot.lane.b32.xlu0 %v3689, 90
      %v3727 = vpop.permute.xlu0 %3726
      %3728 = vrot.lane.b32.xlu0 %v3690, 90
      %v3729 = vpop.permute.xlu0 %3728
      %v3730 = vsel %vm924, %v3705, %v3707
      %v3731 = vsel %vm924, %v3707, %v3709
      %v3732 = vsel %vm924, %v3709, %v3711
      %v3733 = vsel %vm924, %v3711, %v3713
      %v3734 = vsel %vm924, %v3713, %v3715
      %v3735 = vsel %vm924, %v3715, %v3717
      %v3736 = vsel %vm924, %v3717, %v3719
      %v3737 = vsel %vm924, %v3719, %v3721
      %v3738 = vsel %vm924, %v3721, %v3723
      %v3739 = vsel %vm924, %v3723, %v3725
      %v3740 = vsel %vm924, %v3725, %v3727
      %v3741 = vsel %vm924, %v3727, %v3729
      %3754 = vst [vmem:[#allocation3 + $0x300] sm:$0xff] %v3730
      %3755 = vst [vmem:[#allocation3 + $0x308] sm:$0xff] %v3731
      %3756 = vst [vmem:[#allocation3 + $0x310] sm:$0xff] %v3732
      %3757 = vst [vmem:[#allocation3 + $0x318] sm:$0xff] %v3733
      %3758 = vst [vmem:[#allocation3 + $0x320] sm:$0xff] %v3734
      %3759 = vst [vmem:[#allocation3 + $0x328] sm:$0xff] %v3735
      %3760 = vst [vmem:[#allocation3 + $0x330] sm:$0xff] %v3736
      %3761 = vst [vmem:[#allocation3 + $0x338] sm:$0xff] %v3737
      %3762 = vst [vmem:[#allocation3 + $0x340] sm:$0xff] %v3738
      %3763 = vst [vmem:[#allocation3 + $0x348] sm:$0xff] %v3739
      %3764 = vst [vmem:[#allocation3 + $0x350] sm:$0xff] %v3740
      %3765 = vst [vmem:[#allocation3 + $0x358] sm:$0xff] %v3741
      %s3766 = scalar_lea.vmem %s1, 16
      %v3767 = vld [vmem:[%s3766] sm:$0xff]
      %v3768 = vld [vmem:[#allocation3] sm:$0xff]
      %v3769 = vld [vmem:[#allocation3 + $0x8] sm:$0xff]
      %v3770 = vld [vmem:[#allocation3 + $0x10] sm:$0xff]
      %v3771 = vld [vmem:[#allocation3 + $0x18] sm:$0xff]
      %v3772 = vld [vmem:[#allocation3 + $0x20] sm:$0xff]
      %v3773 = vld [vmem:[#allocation3 + $0x28] sm:$0xff]
      %v3774 = vld [vmem:[#allocation3 + $0x30] sm:$0xff]
      %v3775 = vld [vmem:[#allocation3 + $0x38] sm:$0xff]
      %v3776 = vld [vmem:[#allocation3 + $0x40] sm:$0xff]
      %v3777 = vld [vmem:[#allocation3 + $0x48] sm:$0xff]
      %v3778 = vld [vmem:[#allocation3 + $0x50] sm:$0xff]
      %v3779 = vld [vmem:[#allocation3 + $0x58] sm:$0xff]
      %v3780 = vld [vmem:[#allocation3 + $0x60] sm:$0xff]
      %v3781 = vld [vmem:[#allocation3 + $0x68] sm:$0xff]
      %v3782 = vld [vmem:[#allocation3 + $0x70] sm:$0xff]
      %v3783 = vld [vmem:[#allocation3 + $0x78] sm:$0xff]
      %v3784 = vld [vmem:[#allocation3 + $0x80] sm:$0xff]
      %v3785 = vld [vmem:[#allocation3 + $0x88] sm:$0xff]
      %v3786 = vld [vmem:[#allocation3 + $0x90] sm:$0xff]
      %v3787 = vld [vmem:[#allocation3 + $0x98] sm:$0xff]
      %v3788 = vld [vmem:[#allocation3 + $0xa0] sm:$0xff]
      %v3789 = vld [vmem:[#allocation3 + $0xa8] sm:$0xff]
      %v3790 = vld [vmem:[#allocation3 + $0xb0] sm:$0xff]
      %v3791 = vld [vmem:[#allocation3 + $0xb8] sm:$0xff]
      %v3792 = vld [vmem:[#allocation3 + $0xc0] sm:$0xff]
      %v3793 = vld [vmem:[#allocation3 + $0xc8] sm:$0xff]
      %v3794 = vld [vmem:[#allocation3 + $0xd0] sm:$0xff]
      %v3795 = vld [vmem:[#allocation3 + $0xd8] sm:$0xff]
      %v3796 = vld [vmem:[#allocation3 + $0xe0] sm:$0xff]
      %v3797 = vld [vmem:[#allocation3 + $0xe8] sm:$0xff]
      %v3798 = vld [vmem:[#allocation3 + $0xf0] sm:$0xff]
      %v3799 = vld [vmem:[#allocation3 + $0xf8] sm:$0xff]
      %v3800 = vld [vmem:[#allocation3 + $0x100] sm:$0xff]
      %v3801 = vld [vmem:[#allocation3 + $0x108] sm:$0xff]
      %v3802 = vld [vmem:[#allocation3 + $0x110] sm:$0xff]
      %v3803 = vld [vmem:[#allocation3 + $0x118] sm:$0xff]
      %v3804 = vld [vmem:[#allocation3 + $0x120] sm:$0xff]
      %v3805 = vld [vmem:[#allocation3 + $0x128] sm:$0xff]
      %v3806 = vld [vmem:[#allocation3 + $0x130] sm:$0xff]
      %v3807 = vld [vmem:[#allocation3 + $0x138] sm:$0xff]
      %v3808 = vld [vmem:[#allocation3 + $0x140] sm:$0xff]
      %v3809 = vld [vmem:[#allocation3 + $0x148] sm:$0xff]
      %v3810 = vld [vmem:[#allocation3 + $0x150] sm:$0xff]
      %v3811 = vld [vmem:[#allocation3 + $0x158] sm:$0xff]
      %v3812 = vld [vmem:[#allocation3 + $0x160] sm:$0xff]
      %v3813 = vld [vmem:[#allocation3 + $0x168] sm:$0xff]
      %v3814 = vld [vmem:[#allocation3 + $0x170] sm:$0xff]
      %v3815 = vld [vmem:[#allocation3 + $0x178] sm:$0xff]
      %v3816 = vld [vmem:[#allocation3 + $0x180] sm:$0xff]
      %v3817 = vld [vmem:[#allocation3 + $0x188] sm:$0xff]
      %v3818 = vld [vmem:[#allocation3 + $0x190] sm:$0xff]
      %v3819 = vld [vmem:[#allocation3 + $0x198] sm:$0xff]
      %v3820 = vld [vmem:[#allocation3 + $0x1a0] sm:$0xff]
      %v3821 = vld [vmem:[#allocation3 + $0x1a8] sm:$0xff]
      %v3822 = vld [vmem:[#allocation3 + $0x1b0] sm:$0xff]
      %v3823 = vld [vmem:[#allocation3 + $0x1b8] sm:$0xff]
      %v3824 = vld [vmem:[#allocation3 + $0x1c0] sm:$0xff]
      %v3825 = vld [vmem:[#allocation3 + $0x1c8] sm:$0xff]
      %v3826 = vld [vmem:[#allocation3 + $0x1d0] sm:$0xff]
      %v3827 = vld [vmem:[#allocation3 + $0x1d8] sm:$0xff]
      %v3828 = vld [vmem:[#allocation3 + $0x1e0] sm:$0xff]
      %v3829 = vld [vmem:[#allocation3 + $0x1e8] sm:$0xff]
      %v3830 = vld [vmem:[#allocation3 + $0x1f0] sm:$0xff]
      %v3831 = vld [vmem:[#allocation3 + $0x1f8] sm:$0xff]
      %v3832 = vld [vmem:[#allocation3 + $0x200] sm:$0xff]
      %v3833 = vld [vmem:[#allocation3 + $0x208] sm:$0xff]
      %v3834 = vld [vmem:[#allocation3 + $0x210] sm:$0xff]
      %v3835 = vld [vmem:[#allocation3 + $0x218] sm:$0xff]
      %v3836 = vld [vmem:[#allocation3 + $0x220] sm:$0xff]
      %v3837 = vld [vmem:[#allocation3 + $0x228] sm:$0xff]
      %v3838 = vld [vmem:[#allocation3 + $0x230] sm:$0xff]
      %v3839 = vld [vmem:[#allocation3 + $0x238] sm:$0xff]
      %v3840 = vld [vmem:[#allocation3 + $0x240] sm:$0xff]
      %v3841 = vld [vmem:[#allocation3 + $0x248] sm:$0xff]
      %v3842 = vld [vmem:[#allocation3 + $0x250] sm:$0xff]
      %v3843 = vld [vmem:[#allocation3 + $0x258] sm:$0xff]
      %v3844 = vld [vmem:[#allocation3 + $0x260] sm:$0xff]
      %v3845 = vld [vmem:[#allocation3 + $0x268] sm:$0xff]
      %v3846 = vld [vmem:[#allocation3 + $0x270] sm:$0xff]
      %v3847 = vld [vmem:[#allocation3 + $0x278] sm:$0xff]
      %v3848 = vld [vmem:[#allocation3 + $0x280] sm:$0xff]
      %v3849 = vld [vmem:[#allocation3 + $0x288] sm:$0xff]
      %v3850 = vld [vmem:[#allocation3 + $0x290] sm:$0xff]
      %v3851 = vld [vmem:[#allocation3 + $0x298] sm:$0xff]
      %v3852 = vld [vmem:[#allocation3 + $0x2a0] sm:$0xff]
      %v3853 = vld [vmem:[#allocation3 + $0x2a8] sm:$0xff]
      %v3854 = vld [vmem:[#allocation3 + $0x2b0] sm:$0xff]
      %v3855 = vld [vmem:[#allocation3 + $0x2b8] sm:$0xff]
      %v3856 = vld [vmem:[#allocation3 + $0x2c0] sm:$0xff]
      %v3857 = vld [vmem:[#allocation3 + $0x2c8] sm:$0xff]
      %v3858 = vld [vmem:[#allocation3 + $0x2d0] sm:$0xff]
      %v3859 = vld [vmem:[#allocation3 + $0x2d8] sm:$0xff]
      %v3860 = vld [vmem:[#allocation3 + $0x2e0] sm:$0xff]
      %v3861 = vld [vmem:[#allocation3 + $0x2e8] sm:$0xff]
      %v3862 = vld [vmem:[#allocation3 + $0x2f0] sm:$0xff]
      %v3863 = vld [vmem:[#allocation3 + $0x2f8] sm:$0xff]
      %v3864 = vld [vmem:[#allocation3 + $0x300] sm:$0xff]
      %v3865 = vld [vmem:[#allocation3 + $0x308] sm:$0xff]
      %v3866 = vld [vmem:[#allocation3 + $0x310] sm:$0xff]
      %v3867 = vld [vmem:[#allocation3 + $0x318] sm:$0xff]
      %v3868 = vld [vmem:[#allocation3 + $0x320] sm:$0xff]
      %v3869 = vld [vmem:[#allocation3 + $0x328] sm:$0xff]
      %v3870 = vld [vmem:[#allocation3 + $0x330] sm:$0xff]
      %v3871 = vld [vmem:[#allocation3 + $0x338] sm:$0xff]
      %v3872 = vld [vmem:[#allocation3 + $0x340] sm:$0xff]
      %v3873 = vld [vmem:[#allocation3 + $0x348] sm:$0xff]
      %v3874 = vld [vmem:[#allocation3 + $0x350] sm:$0xff]
      %v3875 = vld [vmem:[#allocation3 + $0x358] sm:$0xff]
      %s3876 = scalar_lea.vmem %s2, 16
      %v3877 = vld [vmem:[%s3876] sm:$0xff]
      %3879 = vset.pattern.permute.xlu0 0
      %3880 = vperm.xlu0 %3879, %v3877
      %v3881 = vpop.permute.xlu0 %3880
      %v3884 = vsel %vm1076, %v3767, 0
      %3886 = vmatprep.subr.mxu0 %v3769
      %3887 = vmatpush1.msra.mxu0 %v3768
      %3888 = vmatprep.subr.mxu0 %v3781
      %3889 = vmatpush1.msra.mxu0 %v3780
      %3890 = vmatprep.subr.mxu0 %v3793
      %3891 = vmatpush1.msra.mxu0 %v3792
      %3892 = vmatprep.subr.mxu0 %v3805
      %3893 = vmatpush1.msra.mxu0 %v3804
      %3894 = vmatprep.subr.mxu0 %v3817
      %3895 = vmatpush1.msra.mxu0 %v3816
      %3896 = vmatprep.subr.mxu0 %v3829
      %3897 = vmatpush1.msra.mxu0 %v3828
      %3898 = vmatprep.subr.mxu0 %v3841
      %3899 = vmatpush1.msra.mxu0 %v3840
      %3900 = vmatprep.subr.mxu0 %v3853
      %3901 = vmatpush1.msra.mxu0 %v3852
      %3902 = vmatprep.subr.mxu0 %v3865
      %3903 = vmatpush1.msra.mxu0 %v3864
      %3904 = vmatprep.subr.mxu0 0.0
      %3905 = vmatpush1.msra.mxu0 0.0
      %3906 = vmatprep.subr.mxu0 0.0
      %3907 = vmatpush1.msra.mxu0 0.0
      %3908 = vmatprep.subr.mxu0 0.0
      %3909 = vmatpush1.msra.mxu0 0.0
      %3910 = vmatprep.subr.mxu0 0.0
      %3911 = vmatpush1.msra.mxu0 0.0
      %3912 = vmatprep.subr.mxu0 0.0
      %3913 = vmatpush1.msra.mxu0 0.0
      %3914 = vmatprep.subr.mxu0 0.0
      %3915 = vmatpush1.msra.mxu0 0.0
      %3916 = vmatprep.subr.mxu0 0.0
      %3917 = vmatpush1.msra.mxu0 0.0
      %3918 = vmatprep.subr.mxu0 0.0
      %3919 = vmatpush1.msra.mxu0 0.0
      %3920 = vmatprep.subr.mxu0 0.0
      %3921 = vmatpush1.msra.mxu0 0.0
      %3922 = vmatprep.subr.mxu0 0.0
      %3923 = vmatpush1.msra.mxu0 0.0
      %3924 = vmatprep.subr.mxu0 0.0
      %3925 = vmatpush1.msra.mxu0 0.0
      %3926 = vmatprep.subr.mxu0 0.0
      %3927 = vmatpush1.msra.mxu0 0.0
      %3928 = vmatprep.subr.mxu0 0.0
      %3929 = vmatpush1.msra.mxu0 0.0
      %3930 = vmatprep.subr.mxu0 0.0
      %3931 = vmatpush1.msra.mxu0 0.0
      %3932 = vmatprep.subr.mxu0 0.0
      %3933 = vmatpush1.msra.mxu0 0.0
      %3934 = vmatprep.subr.mxu0 0.0
      %3935 = vmatpush1.msra.mxu0 0.0
      %3936 = vmatprep.subr.mxu0 0.0
      %3937 = vmatpush1.msra.mxu0 0.0
      %3938 = vmatprep.subr.mxu0 0.0
      %3939 = vmatpush1.msra.mxu0 0.0
      %3940 = vmatprep.subr.mxu0 0.0
      %3941 = vmatpush1.msra.mxu0 0.0
      %3942 = vmatprep.subr.mxu0 0.0
      %3943 = vmatpush1.msra.mxu0 0.0
      %3944 = vmatprep.subr.mxu0 0.0
      %3945 = vmatpush1.msra.mxu0 0.0
      %3946 = vmatprep.subr.mxu0 0.0
      %3947 = vmatpush1.msra.mxu0 0.0
      %3948 = vmatprep.subr.mxu0 0.0
      %3949 = vmatpush1.msra.mxu0 0.0
      %3950 = vmatprep.mubr.f32.mxu0 0.0
      %3951 = vmatmul.mubr.f32.gmra.mrb[0].mxu0 %v3884
      %v3952 = vpop.f32.mrb[0].mxu0
      %v3953 = vadd.f32 %v3881, %v3952
      %v3954 = vpop.f32.mrb[0].mxu0
      %v3955 = vadd.f32 %v3881, %v3954
      %3956 = vdwg.mxu0
      %3957 = vmatprep.subr.mxu0 %v3771
      %3958 = vmatpush1.msra.mxu0 %v3770
      %3959 = vmatprep.subr.mxu0 %v3783
      %3960 = vmatpush1.msra.mxu0 %v3782
      %3961 = vmatprep.subr.mxu0 %v3795
      %3962 = vmatpush1.msra.mxu0 %v3794
      %3963 = vmatprep.subr.mxu0 %v3807
      %3964 = vmatpush1.msra.mxu0 %v3806
      %3965 = vmatprep.subr.mxu0 %v3819
      %3966 = vmatpush1.msra.mxu0 %v3818
      %3967 = vmatprep.subr.mxu0 %v3831
      %3968 = vmatpush1.msra.mxu0 %v3830
      %3969 = vmatprep.subr.mxu0 %v3843
      %3970 = vmatpush1.msra.mxu0 %v3842
      %3971 = vmatprep.subr.mxu0 %v3855
      %3972 = vmatpush1.msra.mxu0 %v3854
      %3973 = vmatprep.subr.mxu0 %v3867
      %3974 = vmatpush1.msra.mxu0 %v3866
      %3975 = vmatprep.subr.mxu0 0.0
      %3976 = vmatpush1.msra.mxu0 0.0
      %3977 = vmatprep.subr.mxu0 0.0
      %3978 = vmatpush1.msra.mxu0 0.0
      %3979 = vmatprep.subr.mxu0 0.0
      %3980 = vmatpush1.msra.mxu0 0.0
      %3981 = vmatprep.subr.mxu0 0.0
      %3982 = vmatpush1.msra.mxu0 0.0
      %3983 = vmatprep.subr.mxu0 0.0
      %3984 = vmatpush1.msra.mxu0 0.0
      %3985 = vmatprep.subr.mxu0 0.0
      %3986 = vmatpush1.msra.mxu0 0.0
      %3987 = vmatprep.subr.mxu0 0.0
      %3988 = vmatpush1.msra.mxu0 0.0
      %3989 = vmatprep.subr.mxu0 0.0
      %3990 = vmatpush1.msra.mxu0 0.0
      %3991 = vmatprep.subr.mxu0 0.0
      %3992 = vmatpush1.msra.mxu0 0.0
      %3993 = vmatprep.subr.mxu0 0.0
      %3994 = vmatpush1.msra.mxu0 0.0
      %3995 = vmatprep.subr.mxu0 0.0
      %3996 = vmatpush1.msra.mxu0 0.0
      %3997 = vmatprep.subr.mxu0 0.0
      %3998 = vmatpush1.msra.mxu0 0.0
      %3999 = vmatprep.subr.mxu0 0.0
      %4000 = vmatpush1.msra.mxu0 0.0
      %4001 = vmatprep.subr.mxu0 0.0
      %4002 = vmatpush1.msra.mxu0 0.0
      %4003 = vmatprep.subr.mxu0 0.0
      %4004 = vmatpush1.msra.mxu0 0.0
      %4005 = vmatprep.subr.mxu0 0.0
      %4006 = vmatpush1.msra.mxu0 0.0
      %4007 = vmatprep.subr.mxu0 0.0
      %4008 = vmatpush1.msra.mxu0 0.0
      %4009 = vmatprep.subr.mxu0 0.0
      %4010 = vmatpush1.msra.mxu0 0.0
      %4011 = vmatprep.subr.mxu0 0.0
      %4012 = vmatpush1.msra.mxu0 0.0
      %4013 = vmatprep.subr.mxu0 0.0
      %4014 = vmatpush1.msra.mxu0 0.0
      %4015 = vmatprep.subr.mxu0 0.0
      %4016 = vmatpush1.msra.mxu0 0.0
      %4017 = vmatprep.subr.mxu0 0.0
      %4018 = vmatpush1.msra.mxu0 0.0
      %4019 = vmatprep.subr.mxu0 0.0
      %4020 = vmatpush1.msra.mxu0 0.0
      %4021 = vmatprep.mubr.f32.mxu0 0.0
      %4022 = vmatmul.mubr.f32.gmra.mrb[0].mxu0 %v3884
      %v4023 = vpop.f32.mrb[0].mxu0
      %v4024 = vadd.f32 %v3881, %v4023
      %v4025 = vpop.f32.mrb[0].mxu0
      %v4026 = vadd.f32 %v3881, %v4025
      %4027 = vdwg.mxu0
      %4028 = vmatprep.subr.mxu0 %v3773
      %4029 = vmatpush1.msra.mxu0 %v3772
      %4030 = vmatprep.subr.mxu0 %v3785
      %4031 = vmatpush1.msra.mxu0 %v3784
      %4032 = vmatprep.subr.mxu0 %v3797
      %4033 = vmatpush1.msra.mxu0 %v3796
      %4034 = vmatprep.subr.mxu0 %v3809
      %4035 = vmatpush1.msra.mxu0 %v3808
      %4036 = vmatprep.subr.mxu0 %v3821
      %4037 = vmatpush1.msra.mxu0 %v3820
      %4038 = vmatprep.subr.mxu0 %v3833
      %4039 = vmatpush1.msra.mxu0 %v3832
      %4040 = vmatprep.subr.mxu0 %v3845
      %4041 = vmatpush1.msra.mxu0 %v3844
      %4042 = vmatprep.subr.mxu0 %v3857
      %4043 = vmatpush1.msra.mxu0 %v3856
      %4044 = vmatprep.subr.mxu0 %v3869
      %4045 = vmatpush1.msra.mxu0 %v3868
      %4046 = vmatprep.subr.mxu0 0.0
      %4047 = vmatpush1.msra.mxu0 0.0
      %4048 = vmatprep.subr.mxu0 0.0
      %4049 = vmatpush1.msra.mxu0 0.0
      %4050 = vmatprep.subr.mxu0 0.0
      %4051 = vmatpush1.msra.mxu0 0.0
      %4052 = vmatprep.subr.mxu0 0.0
      %4053 = vmatpush1.msra.mxu0 0.0
      %4054 = vmatprep.subr.mxu0 0.0
      %4055 = vmatpush1.msra.mxu0 0.0
      %4056 = vmatprep.subr.mxu0 0.0
      %4057 = vmatpush1.msra.mxu0 0.0
      %4058 = vmatprep.subr.mxu0 0.0
      %4059 = vmatpush1.msra.mxu0 0.0
      %4060 = vmatprep.subr.mxu0 0.0
      %4061 = vmatpush1.msra.mxu0 0.0
      %4062 = vmatprep.subr.mxu0 0.0
      %4063 = vmatpush1.msra.mxu0 0.0
      %4064 = vmatprep.subr.mxu0 0.0
      %4065 = vmatpush1.msra.mxu0 0.0
      %4066 = vmatprep.subr.mxu0 0.0
      %4067 = vmatpush1.msra.mxu0 0.0
      %4068 = vmatprep.subr.mxu0 0.0
      %4069 = vmatpush1.msra.mxu0 0.0
      %4070 = vmatprep.subr.mxu0 0.0
      %4071 = vmatpush1.msra.mxu0 0.0
      %4072 = vmatprep.subr.mxu0 0.0
      %4073 = vmatpush1.msra.mxu0 0.0
      %4074 = vmatprep.subr.mxu0 0.0
      %4075 = vmatpush1.msra.mxu0 0.0
      %4076 = vmatprep.subr.mxu0 0.0
      %4077 = vmatpush1.msra.mxu0 0.0
      %4078 = vmatprep.subr.mxu0 0.0
      %4079 = vmatpush1.msra.mxu0 0.0
      %4080 = vmatprep.subr.mxu0 0.0
      %4081 = vmatpush1.msra.mxu0 0.0
      %4082 = vmatprep.subr.mxu0 0.0
      %4083 = vmatpush1.msra.mxu0 0.0
      %4084 = vmatprep.subr.mxu0 0.0
      %4085 = vmatpush1.msra.mxu0 0.0
      %4086 = vmatprep.subr.mxu0 0.0
      %4087 = vmatpush1.msra.mxu0 0.0
      %4088 = vmatprep.subr.mxu0 0.0
      %4089 = vmatpush1.msra.mxu0 0.0
      %4090 = vmatprep.subr.mxu0 0.0
      %4091 = vmatpush1.msra.mxu0 0.0
      %4092 = vmatprep.mubr.f32.mxu0 0.0
      %4093 = vmatmul.mubr.f32.gmra.mrb[0].mxu0 %v3884
      %v4094 = vpop.f32.mrb[0].mxu0
      %v4095 = vadd.f32 %v3881, %v4094
      %v4096 = vpop.f32.mrb[0].mxu0
      %v4097 = vadd.f32 %v3881, %v4096
      %4098 = vdwg.mxu0
      %4099 = vmatprep.subr.mxu0 %v3775
      %4100 = vmatpush1.msra.mxu0 %v3774
      %4101 = vmatprep.subr.mxu0 %v3787
      %4102 = vmatpush1.msra.mxu0 %v3786
      %4103 = vmatprep.subr.mxu0 %v3799
      %4104 = vmatpush1.msra.mxu0 %v3798
      %4105 = vmatprep.subr.mxu0 %v3811
      %4106 = vmatpush1.msra.mxu0 %v3810
      %4107 = vmatprep.subr.mxu0 %v3823
      %4108 = vmatpush1.msra.mxu0 %v3822
      %4109 = vmatprep.subr.mxu0 %v3835
      %4110 = vmatpush1.msra.mxu0 %v3834
      %4111 = vmatprep.subr.mxu0 %v3847
      %4112 = vmatpush1.msra.mxu0 %v3846
      %4113 = vmatprep.subr.mxu0 %v3859
      %4114 = vmatpush1.msra.mxu0 %v3858
      %4115 = vmatprep.subr.mxu0 %v3871
      %4116 = vmatpush1.msra.mxu0 %v3870
      %4117 = vmatprep.subr.mxu0 0.0
      %4118 = vmatpush1.msra.mxu0 0.0
      %4119 = vmatprep.subr.mxu0 0.0
      %4120 = vmatpush1.msra.mxu0 0.0
      %4121 = vmatprep.subr.mxu0 0.0
      %4122 = vmatpush1.msra.mxu0 0.0
      %4123 = vmatprep.subr.mxu0 0.0
      %4124 = vmatpush1.msra.mxu0 0.0
      %4125 = vmatprep.subr.mxu0 0.0
      %4126 = vmatpush1.msra.mxu0 0.0
      %4127 = vmatprep.subr.mxu0 0.0
      %4128 = vmatpush1.msra.mxu0 0.0
      %4129 = vmatprep.subr.mxu0 0.0
      %4130 = vmatpush1.msra.mxu0 0.0
      %4131 = vmatprep.subr.mxu0 0.0
      %4132 = vmatpush1.msra.mxu0 0.0
      %4133 = vmatprep.subr.mxu0 0.0
      %4134 = vmatpush1.msra.mxu0 0.0
      %4135 = vmatprep.subr.mxu0 0.0
      %4136 = vmatpush1.msra.mxu0 0.0
      %4137 = vmatprep.subr.mxu0 0.0
      %4138 = vmatpush1.msra.mxu0 0.0
      %4139 = vmatprep.subr.mxu0 0.0
      %4140 = vmatpush1.msra.mxu0 0.0
      %4141 = vmatprep.subr.mxu0 0.0
      %4142 = vmatpush1.msra.mxu0 0.0
      %4143 = vmatprep.subr.mxu0 0.0
      %4144 = vmatpush1.msra.mxu0 0.0
      %4145 = vmatprep.subr.mxu0 0.0
      %4146 = vmatpush1.msra.mxu0 0.0
      %4147 = vmatprep.subr.mxu0 0.0
      %4148 = vmatpush1.msra.mxu0 0.0
      %4149 = vmatprep.subr.mxu0 0.0
      %4150 = vmatpush1.msra.mxu0 0.0
      %4151 = vmatprep.subr.mxu0 0.0
      %4152 = vmatpush1.msra.mxu0 0.0
      %4153 = vmatprep.subr.mxu0 0.0
      %4154 = vmatpush1.msra.mxu0 0.0
      %4155 = vmatprep.subr.mxu0 0.0
      %4156 = vmatpush1.msra.mxu0 0.0
      %4157 = vmatprep.subr.mxu0 0.0
      %4158 = vmatpush1.msra.mxu0 0.0
      %4159 = vmatprep.subr.mxu0 0.0
      %4160 = vmatpush1.msra.mxu0 0.0
      %4161 = vmatprep.subr.mxu0 0.0
      %4162 = vmatpush1.msra.mxu0 0.0
      %4163 = vmatprep.mubr.f32.mxu0 0.0
      %4164 = vmatmul.mubr.f32.gmra.mrb[0].mxu0 %v3884
      %v4165 = vpop.f32.mrb[0].mxu0
      %v4166 = vadd.f32 %v3881, %v4165
      %v4167 = vpop.f32.mrb[0].mxu0
      %v4168 = vadd.f32 %v3881, %v4167
      %4169 = vdwg.mxu0
      %4170 = vmatprep.subr.mxu0 %v3777
      %4171 = vmatpush1.msra.mxu0 %v3776
      %4172 = vmatprep.subr.mxu0 %v3789
      %4173 = vmatpush1.msra.mxu0 %v3788
      %4174 = vmatprep.subr.mxu0 %v3801
      %4175 = vmatpush1.msra.mxu0 %v3800
      %4176 = vmatprep.subr.mxu0 %v3813
      %4177 = vmatpush1.msra.mxu0 %v3812
      %4178 = vmatprep.subr.mxu0 %v3825
      %4179 = vmatpush1.msra.mxu0 %v3824
      %4180 = vmatprep.subr.mxu0 %v3837
      %4181 = vmatpush1.msra.mxu0 %v3836
      %4182 = vmatprep.subr.mxu0 %v3849
      %4183 = vmatpush1.msra.mxu0 %v3848
      %4184 = vmatprep.subr.mxu0 %v3861
      %4185 = vmatpush1.msra.mxu0 %v3860
      %4186 = vmatprep.subr.mxu0 %v3873
      %4187 = vmatpush1.msra.mxu0 %v3872
      %4188 = vmatprep.subr.mxu0 0.0
      %4189 = vmatpush1.msra.mxu0 0.0
      %4190 = vmatprep.subr.mxu0 0.0
      %4191 = vmatpush1.msra.mxu0 0.0
      %4192 = vmatprep.subr.mxu0 0.0
      %4193 = vmatpush1.msra.mxu0 0.0
      %4194 = vmatprep.subr.mxu0 0.0
      %4195 = vmatpush1.msra.mxu0 0.0
      %4196 = vmatprep.subr.mxu0 0.0
      %4197 = vmatpush1.msra.mxu0 0.0
      %4198 = vmatprep.subr.mxu0 0.0
      %4199 = vmatpush1.msra.mxu0 0.0
      %4200 = vmatprep.subr.mxu0 0.0
      %4201 = vmatpush1.msra.mxu0 0.0
      %4202 = vmatprep.subr.mxu0 0.0
      %4203 = vmatpush1.msra.mxu0 0.0
      %4204 = vmatprep.subr.mxu0 0.0
      %4205 = vmatpush1.msra.mxu0 0.0
      %4206 = vmatprep.subr.mxu0 0.0
      %4207 = vmatpush1.msra.mxu0 0.0
      %4208 = vmatprep.subr.mxu0 0.0
      %4209 = vmatpush1.msra.mxu0 0.0
      %4210 = vmatprep.subr.mxu0 0.0
      %4211 = vmatpush1.msra.mxu0 0.0
      %4212 = vmatprep.subr.mxu0 0.0
      %4213 = vmatpush1.msra.mxu0 0.0
      %4214 = vmatprep.subr.mxu0 0.0
      %4215 = vmatpush1.msra.mxu0 0.0
      %4216 = vmatprep.subr.mxu0 0.0
      %4217 = vmatpush1.msra.mxu0 0.0
      %4218 = vmatprep.subr.mxu0 0.0
      %4219 = vmatpush1.msra.mxu0 0.0
      %4220 = vmatprep.subr.mxu0 0.0
      %4221 = vmatpush1.msra.mxu0 0.0
      %4222 = vmatprep.subr.mxu0 0.0
      %4223 = vmatpush1.msra.mxu0 0.0
      %4224 = vmatprep.subr.mxu0 0.0
      %4225 = vmatpush1.msra.mxu0 0.0
      %4226 = vmatprep.subr.mxu0 0.0
      %4227 = vmatpush1.msra.mxu0 0.0
      %4228 = vmatprep.subr.mxu0 0.0
      %4229 = vmatpush1.msra.mxu0 0.0
      %4230 = vmatprep.subr.mxu0 0.0
      %4231 = vmatpush1.msra.mxu0 0.0
      %4232 = vmatprep.subr.mxu0 0.0
      %4233 = vmatpush1.msra.mxu0 0.0
      %4234 = vmatprep.mubr.f32.mxu0 0.0
      %4235 = vmatmul.mubr.f32.gmra.mrb[0].mxu0 %v3884
      %v4236 = vpop.f32.mrb[0].mxu0
      %v4237 = vadd.f32 %v3881, %v4236
      %v4238 = vpop.f32.mrb[0].mxu0
      %v4239 = vadd.f32 %v3881, %v4238
      %4240 = vdwg.mxu0
      %4241 = vmatprep.subr.mxu0 %v3779
      %4242 = vmatpush1.msra.mxu0 %v3778
      %4243 = vmatprep.subr.mxu0 %v3791
      %4244 = vmatpush1.msra.mxu0 %v3790
      %4245 = vmatprep.subr.mxu0 %v3803
      %4246 = vmatpush1.msra.mxu0 %v3802
      %4247 = vmatprep.subr.mxu0 %v3815
      %4248 = vmatpush1.msra.mxu0 %v3814
      %4249 = vmatprep.subr.mxu0 %v3827
      %4250 = vmatpush1.msra.mxu0 %v3826
      %4251 = vmatprep.subr.mxu0 %v3839
      %4252 = vmatpush1.msra.mxu0 %v3838
      %4253 = vmatprep.subr.mxu0 %v3851
      %4254 = vmatpush1.msra.mxu0 %v3850
      %4255 = vmatprep.subr.mxu0 %v3863
      %4256 = vmatpush1.msra.mxu0 %v3862
      %4257 = vmatprep.subr.mxu0 %v3875
      %4258 = vmatpush1.msra.mxu0 %v3874
      %4259 = vmatprep.subr.mxu0 0.0
      %4260 = vmatpush1.msra.mxu0 0.0
      %4261 = vmatprep.subr.mxu0 0.0
      %4262 = vmatpush1.msra.mxu0 0.0
      %4263 = vmatprep.subr.mxu0 0.0
      %4264 = vmatpush1.msra.mxu0 0.0
      %4265 = vmatprep.subr.mxu0 0.0
      %4266 = vmatpush1.msra.mxu0 0.0
      %4267 = vmatprep.subr.mxu0 0.0
      %4268 = vmatpush1.msra.mxu0 0.0
      %4269 = vmatprep.subr.mxu0 0.0
      %4270 = vmatpush1.msra.mxu0 0.0
      %4271 = vmatprep.subr.mxu0 0.0
      %4272 = vmatpush1.msra.mxu0 0.0
      %4273 = vmatprep.subr.mxu0 0.0
      %4274 = vmatpush1.msra.mxu0 0.0
      %4275 = vmatprep.subr.mxu0 0.0
      %4276 = vmatpush1.msra.mxu0 0.0
      %4277 = vmatprep.subr.mxu0 0.0
      %4278 = vmatpush1.msra.mxu0 0.0
      %4279 = vmatprep.subr.mxu0 0.0
      %4280 = vmatpush1.msra.mxu0 0.0
      %4281 = vmatprep.subr.mxu0 0.0
      %4282 = vmatpush1.msra.mxu0 0.0
      %4283 = vmatprep.subr.mxu0 0.0
      %4284 = vmatpush1.msra.mxu0 0.0
      %4285 = vmatprep.subr.mxu0 0.0
      %4286 = vmatpush1.msra.mxu0 0.0
      %4287 = vmatprep.subr.mxu0 0.0
      %4288 = vmatpush1.msra.mxu0 0.0
      %4289 = vmatprep.subr.mxu0 0.0
      %4290 = vmatpush1.msra.mxu0 0.0
      %4291 = vmatprep.subr.mxu0 0.0
      %4292 = vmatpush1.msra.mxu0 0.0
      %4293 = vmatprep.subr.mxu0 0.0
      %4294 = vmatpush1.msra.mxu0 0.0
      %4295 = vmatprep.subr.mxu0 0.0
      %4296 = vmatpush1.msra.mxu0 0.0
      %4297 = vmatprep.subr.mxu0 0.0
      %4298 = vmatpush1.msra.mxu0 0.0
      %4299 = vmatprep.subr.mxu0 0.0
      %4300 = vmatpush1.msra.mxu0 0.0
      %4301 = vmatprep.subr.mxu0 0.0
      %4302 = vmatpush1.msra.mxu0 0.0
      %4303 = vmatprep.subr.mxu0 0.0
      %4304 = vmatpush1.msra.mxu0 0.0
      %4305 = vmatprep.mubr.f32.mxu0 0.0
      %4306 = vmatmul.mubr.f32.gmra.mrb[0].mxu0 %v3884
      %v4307 = vpop.f32.mrb[0].mxu0
      %v4308 = vadd.f32 %v3881, %v4307
      %v4309 = vpop.f32.mrb[0].mxu0
      %v4310 = vadd.f32 %v3881, %v4309
      %4311 = vdwg.mxu0
      %v4312 = vmax.f32 %v3953, 0.0
      %v4313 = vmax.f32 %v3955, 0.0
      %v4314 = vmax.f32 %v4024, 0.0
      %v4315 = vmax.f32 %v4026, 0.0
      %v4316 = vmax.f32 %v4095, 0.0
      %v4317 = vmax.f32 %v4097, 0.0
      %v4318 = vmax.f32 %v4166, 0.0
      %v4319 = vmax.f32 %v4168, 0.0
      %v4320 = vmax.f32 %v4237, 0.0
      %v4321 = vmax.f32 %v4239, 0.0
      %v4322 = vmax.f32 %v4308, 0.0
      %v4323 = vmax.f32 %v4310, 0.0
      %v4324 = vmul.f32 %v4312, %v1523
      %v4325 = vmul.f32 %v4313, %v1527
      %v4326 = vmul.f32 %v4314, %v1531
      %v4327 = vmul.f32 %v4315, %v1535
      %v4328 = vmul.f32 %v4316, %v1539
      %v4329 = vmul.f32 %v4317, %v1543
      %v4330 = vmul.f32 %v4318, %v1547
      %v4331 = vmul.f32 %v4319, %v1551
      %v4332 = vmul.f32 %v4320, %v1555
      %v4333 = vmul.f32 %v4321, %v1559
      %v4334 = vmul.f32 %v4322, %v1563
      %v4335 = vmul.f32 %v4323, %v1567
      %4348 = vrot.lane.b32.xlu0 %v4324, 19
      %v4349 = vpop.permute.xlu0 %4348
      %4350 = vrot.lane.b32.xlu0 %v4325, 19
      %v4351 = vpop.permute.xlu0 %4350
      %4352 = vrot.lane.b32.xlu0 %v4326, 19
      %v4353 = vpop.permute.xlu0 %4352
      %4354 = vrot.lane.b32.xlu0 %v4327, 19
      %v4355 = vpop.permute.xlu0 %4354
      %4356 = vrot.lane.b32.xlu0 %v4328, 19
      %v4357 = vpop.permute.xlu0 %4356
      %4358 = vrot.lane.b32.xlu0 %v4329, 19
      %v4359 = vpop.permute.xlu0 %4358
      %4360 = vrot.lane.b32.xlu0 %v4330, 19
      %v4361 = vpop.permute.xlu0 %4360
      %4362 = vrot.lane.b32.xlu0 %v4331, 19
      %v4363 = vpop.permute.xlu0 %4362
      %4364 = vrot.lane.b32.xlu0 %v4332, 19
      %v4365 = vpop.permute.xlu0 %4364
      %4366 = vrot.lane.b32.xlu0 %v4333, 19
      %v4367 = vpop.permute.xlu0 %4366
      %4368 = vrot.lane.b32.xlu0 %v4334, 19
      %v4369 = vpop.permute.xlu0 %4368
      %4370 = vrot.lane.b32.xlu0 %v4335, 19
      %v4371 = vpop.permute.xlu0 %4370
      %v4372 = vsel %vm1628, %v4349, %v4351
      %v4373 = vsel %vm1628, %v4351, %v4353
      %v4374 = vsel %vm1628, %v4353, %v4355
      %v4375 = vsel %vm1628, %v4355, %v4357
      %v4376 = vsel %vm1628, %v4357, %v4359
      %v4377 = vsel %vm1628, %v4359, %v4361
      %v4378 = vsel %vm1628, %v4361, %v4363
      %v4379 = vsel %vm1628, %v4363, %v4365
      %v4380 = vsel %vm1628, %v4365, %v4367
      %v4381 = vsel %vm1628, %v4367, %v4369
      %v4382 = vsel %vm1628, %v4369, %v4371
      %4396 = vst.msk [vmem:[#allocation2] sm:$0xff] %vm1653, %v4349
      %4397 = vst [vmem:[#allocation2 + $0x8] sm:$0xff] %v4372
      %4398 = vst [vmem:[#allocation2 + $0x10] sm:$0xff] %v4373
      %4399 = vst [vmem:[#allocation2 + $0x18] sm:$0xff] %v4374
      %4400 = vst [vmem:[#allocation2 + $0x20] sm:$0xff] %v4375
      %4401 = vst [vmem:[#allocation2 + $0x28] sm:$0xff] %v4376
      %4402 = vst [vmem:[#allocation2 + $0x30] sm:$0xff] %v4377
      %4403 = vst [vmem:[#allocation2 + $0x38] sm:$0xff] %v4378
      %4404 = vst [vmem:[#allocation2 + $0x40] sm:$0xff] %v4379
      %4405 = vst [vmem:[#allocation2 + $0x48] sm:$0xff] %v4380
      %4406 = vst [vmem:[#allocation2 + $0x50] sm:$0xff] %v4381
      %4407 = vst [vmem:[#allocation2 + $0x58] sm:$0xff] %v4382
      %4408 = vst.msk [vmem:[#allocation2 + $0x60] sm:$0xff] %vm1628, %v4371
      %v4409 = vld [vmem:[#allocation2] sm:$0xff]
      %v4410 = vld [vmem:[#allocation2 + $0x8] sm:$0xff]
      %v4411 = vld [vmem:[#allocation2 + $0x10] sm:$0xff]
      %v4412 = vld [vmem:[#allocation2 + $0x18] sm:$0xff]
      %v4413 = vld [vmem:[#allocation2 + $0x20] sm:$0xff]
      %v4414 = vld [vmem:[#allocation2 + $0x28] sm:$0xff]
      %v4415 = vld [vmem:[#allocation2 + $0x30] sm:$0xff]
      %v4416 = vld [vmem:[#allocation2 + $0x38] sm:$0xff]
      %v4417 = vld [vmem:[#allocation2 + $0x40] sm:$0xff]
      %v4418 = vld [vmem:[#allocation2 + $0x48] sm:$0xff]
      %v4419 = vld [vmem:[#allocation2 + $0x50] sm:$0xff]
      %v4420 = vld [vmem:[#allocation2 + $0x58] sm:$0xff]
      %4421 = vst [vmem:[#allocation3] sm:$0xff] %v4409
      %4422 = vst [vmem:[#allocation3 + $0x8] sm:$0xff] %v4410
      %4423 = vst [vmem:[#allocation3 + $0x10] sm:$0xff] %v4411
      %4424 = vst [vmem:[#allocation3 + $0x18] sm:$0xff] %v4412
      %4425 = vst [vmem:[#allocation3 + $0x20] sm:$0xff] %v4413
      %4426 = vst [vmem:[#allocation3 + $0x28] sm:$0xff] %v4414
      %4427 = vst [vmem:[#allocation3 + $0x30] sm:$0xff] %v4415
      %4428 = vst [vmem:[#allocation3 + $0x38] sm:$0xff] %v4416
      %4429 = vst [vmem:[#allocation3 + $0x40] sm:$0xff] %v4417
      %4430 = vst [vmem:[#allocation3 + $0x48] sm:$0xff] %v4418
      %4431 = vst [vmem:[#allocation3 + $0x50] sm:$0xff] %v4419
      %4432 = vst [vmem:[#allocation3 + $0x58] sm:$0xff] %v4420
      %v4433 = vld [vmem:[#allocation2] sm:$0xff]
      %v4434 = vld [vmem:[#allocation2 + $0x8] sm:$0xff]
      %v4435 = vld [vmem:[#allocation2 + $0x10] sm:$0xff]
      %v4436 = vld [vmem:[#allocation2 + $0x18] sm:$0xff]
      %v4437 = vld [vmem:[#allocation2 + $0x20] sm:$0xff]
      %v4438 = vld [vmem:[#allocation2 + $0x28] sm:$0xff]
      %v4439 = vld [vmem:[#allocation2 + $0x30] sm:$0xff]
      %v4440 = vld [vmem:[#allocation2 + $0x38] sm:$0xff]
      %v4441 = vld [vmem:[#allocation2 + $0x40] sm:$0xff]
      %v4442 = vld [vmem:[#allocation2 + $0x48] sm:$0xff]
      %v4443 = vld [vmem:[#allocation2 + $0x50] sm:$0xff]
      %v4444 = vld [vmem:[#allocation2 + $0x58] sm:$0xff]
      %v4445 = vld [vmem:[#allocation2 + $0x60] sm:$0xff]
      %4459 = vrot.lane.b32.xlu0 %v4433, 127
      %v4460 = vpop.permute.xlu0 %4459
      %4461 = vrot.lane.b32.xlu0 %v4434, 127
      %v4462 = vpop.permute.xlu0 %4461
      %4463 = vrot.lane.b32.xlu0 %v4435, 127
      %v4464 = vpop.permute.xlu0 %4463
      %4465 = vrot.lane.b32.xlu0 %v4436, 127
      %v4466 = vpop.permute.xlu0 %4465
      %4467 = vrot.lane.b32.xlu0 %v4437, 127
      %v4468 = vpop.permute.xlu0 %4467
      %4469 = vrot.lane.b32.xlu0 %v4438, 127
      %v4470 = vpop.permute.xlu0 %4469
      %4471 = vrot.lane.b32.xlu0 %v4439, 127
      %v4472 = vpop.permute.xlu0 %4471
      %4473 = vrot.lane.b32.xlu0 %v4440, 127
      %v4474 = vpop.permute.xlu0 %4473
      %4475 = vrot.lane.b32.xlu0 %v4441, 127
      %v4476 = vpop.permute.xlu0 %4475
      %4477 = vrot.lane.b32.xlu0 %v4442, 127
      %v4478 = vpop.permute.xlu0 %4477
      %4479 = vrot.lane.b32.xlu0 %v4443, 127
      %v4480 = vpop.permute.xlu0 %4479
      %4481 = vrot.lane.b32.xlu0 %v4444, 127
      %v4482 = vpop.permute.xlu0 %4481
      %4483 = vrot.lane.b32.xlu0 %v4445, 127
      %v4484 = vpop.permute.xlu0 %4483
      %v4485 = vsel %vm301, %v4460, %v4462
      %v4486 = vsel %vm301, %v4462, %v4464
      %v4487 = vsel %vm301, %v4464, %v4466
      %v4488 = vsel %vm301, %v4466, %v4468
      %v4489 = vsel %vm301, %v4468, %v4470
      %v4490 = vsel %vm301, %v4470, %v4472
      %v4491 = vsel %vm301, %v4472, %v4474
      %v4492 = vsel %vm301, %v4474, %v4476
      %v4493 = vsel %vm301, %v4476, %v4478
      %v4494 = vsel %vm301, %v4478, %v4480
      %v4495 = vsel %vm301, %v4480, %v4482
      %v4496 = vsel %vm301, %v4482, %v4484
      %4509 = vst [vmem:[#allocation3 + $0x60] sm:$0xff] %v4485
      %4510 = vst [vmem:[#allocation3 + $0x68] sm:$0xff] %v4486
      %4511 = vst [vmem:[#allocation3 + $0x70] sm:$0xff] %v4487
      %4512 = vst [vmem:[#allocation3 + $0x78] sm:$0xff] %v4488
      %4513 = vst [vmem:[#allocation3 + $0x80] sm:$0xff] %v4489
      %4514 = vst [vmem:[#allocation3 + $0x88] sm:$0xff] %v4490
      %4515 = vst [vmem:[#allocation3 + $0x90] sm:$0xff] %v4491
      %4516 = vst [vmem:[#allocation3 + $0x98] sm:$0xff] %v4492
      %4517 = vst [vmem:[#allocation3 + $0xa0] sm:$0xff] %v4493
      %4518 = vst [vmem:[#allocation3 + $0xa8] sm:$0xff] %v4494
      %4519 = vst [vmem:[#allocation3 + $0xb0] sm:$0xff] %v4495
      %4520 = vst [vmem:[#allocation3 + $0xb8] sm:$0xff] %v4496
      %v4521 = vld [vmem:[#allocation2] sm:$0xff]
      %v4522 = vld [vmem:[#allocation2 + $0x8] sm:$0xff]
      %v4523 = vld [vmem:[#allocation2 + $0x10] sm:$0xff]
      %v4524 = vld [vmem:[#allocation2 + $0x18] sm:$0xff]
      %v4525 = vld [vmem:[#allocation2 + $0x20] sm:$0xff]
      %v4526 = vld [vmem:[#allocation2 + $0x28] sm:$0xff]
      %v4527 = vld [vmem:[#allocation2 + $0x30] sm:$0xff]
      %v4528 = vld [vmem:[#allocation2 + $0x38] sm:$0xff]
      %v4529 = vld [vmem:[#allocation2 + $0x40] sm:$0xff]
      %v4530 = vld [vmem:[#allocation2 + $0x48] sm:$0xff]
      %v4531 = vld [vmem:[#allocation2 + $0x50] sm:$0xff]
      %v4532 = vld [vmem:[#allocation2 + $0x58] sm:$0xff]
      %v4533 = vld [vmem:[#allocation2 + $0x60] sm:$0xff]
      %4547 = vrot.lane.b32.xlu0 %v4521, 126
      %v4548 = vpop.permute.xlu0 %4547
      %4549 = vrot.lane.b32.xlu0 %v4522, 126
      %v4550 = vpop.permute.xlu0 %4549
      %4551 = vrot.lane.b32.xlu0 %v4523, 126
      %v4552 = vpop.permute.xlu0 %4551
      %4553 = vrot.lane.b32.xlu0 %v4524, 126
      %v4554 = vpop.permute.xlu0 %4553
      %4555 = vrot.lane.b32.xlu0 %v4525, 126
      %v4556 = vpop.permute.xlu0 %4555
      %4557 = vrot.lane.b32.xlu0 %v4526, 126
      %v4558 = vpop.permute.xlu0 %4557
      %4559 = vrot.lane.b32.xlu0 %v4527, 126
      %v4560 = vpop.permute.xlu0 %4559
      %4561 = vrot.lane.b32.xlu0 %v4528, 126
      %v4562 = vpop.permute.xlu0 %4561
      %4563 = vrot.lane.b32.xlu0 %v4529, 126
      %v4564 = vpop.permute.xlu0 %4563
      %4565 = vrot.lane.b32.xlu0 %v4530, 126
      %v4566 = vpop.permute.xlu0 %4565
      %4567 = vrot.lane.b32.xlu0 %v4531, 126
      %v4568 = vpop.permute.xlu0 %4567
      %4569 = vrot.lane.b32.xlu0 %v4532, 126
      %v4570 = vpop.permute.xlu0 %4569
      %4571 = vrot.lane.b32.xlu0 %v4533, 126
      %v4572 = vpop.permute.xlu0 %4571
      %v4573 = vsel %vm390, %v4548, %v4550
      %v4574 = vsel %vm390, %v4550, %v4552
      %v4575 = vsel %vm390, %v4552, %v4554
      %v4576 = vsel %vm390, %v4554, %v4556
      %v4577 = vsel %vm390, %v4556, %v4558
      %v4578 = vsel %vm390, %v4558, %v4560
      %v4579 = vsel %vm390, %v4560, %v4562
      %v4580 = vsel %vm390, %v4562, %v4564
      %v4581 = vsel %vm390, %v4564, %v4566
      %v4582 = vsel %vm390, %v4566, %v4568
      %v4583 = vsel %vm390, %v4568, %v4570
      %v4584 = vsel %vm390, %v4570, %v4572
      %4597 = vst [vmem:[#allocation3 + $0xc0] sm:$0xff] %v4573
      %4598 = vst [vmem:[#allocation3 + $0xc8] sm:$0xff] %v4574
      %4599 = vst [vmem:[#allocation3 + $0xd0] sm:$0xff] %v4575
      %4600 = vst [vmem:[#allocation3 + $0xd8] sm:$0xff] %v4576
      %4601 = vst [vmem:[#allocation3 + $0xe0] sm:$0xff] %v4577
      %4602 = vst [vmem:[#allocation3 + $0xe8] sm:$0xff] %v4578
      %4603 = vst [vmem:[#allocation3 + $0xf0] sm:$0xff] %v4579
      %4604 = vst [vmem:[#allocation3 + $0xf8] sm:$0xff] %v4580
      %4605 = vst [vmem:[#allocation3 + $0x100] sm:$0xff] %v4581
      %4606 = vst [vmem:[#allocation3 + $0x108] sm:$0xff] %v4582
      %4607 = vst [vmem:[#allocation3 + $0x110] sm:$0xff] %v4583
      %4608 = vst [vmem:[#allocation3 + $0x118] sm:$0xff] %v4584
      %v4609 = vld [vmem:[#allocation2] sm:$0xff]
      %v4610 = vld [vmem:[#allocation2 + $0x8] sm:$0xff]
      %v4611 = vld [vmem:[#allocation2 + $0x10] sm:$0xff]
      %v4612 = vld [vmem:[#allocation2 + $0x18] sm:$0xff]
      %v4613 = vld [vmem:[#allocation2 + $0x20] sm:$0xff]
      %v4614 = vld [vmem:[#allocation2 + $0x28] sm:$0xff]
      %v4615 = vld [vmem:[#allocation2 + $0x30] sm:$0xff]
      %v4616 = vld [vmem:[#allocation2 + $0x38] sm:$0xff]
      %v4617 = vld [vmem:[#allocation2 + $0x40] sm:$0xff]
      %v4618 = vld [vmem:[#allocation2 + $0x48] sm:$0xff]
      %v4619 = vld [vmem:[#allocation2 + $0x50] sm:$0xff]
      %v4620 = vld [vmem:[#allocation2 + $0x58] sm:$0xff]
      %v4621 = vld [vmem:[#allocation2 + $0x60] sm:$0xff]
      %4635 = vrot.lane.b32.xlu0 %v4609, 110
      %v4636 = vpop.permute.xlu0 %4635
      %4637 = vrot.lane.b32.xlu0 %v4610, 110
      %v4638 = vpop.permute.xlu0 %4637
      %4639 = vrot.lane.b32.xlu0 %v4611, 110
      %v4640 = vpop.permute.xlu0 %4639
      %4641 = vrot.lane.b32.xlu0 %v4612, 110
      %v4642 = vpop.permute.xlu0 %4641
      %4643 = vrot.lane.b32.xlu0 %v4613, 110
      %v4644 = vpop.permute.xlu0 %4643
      %4645 = vrot.lane.b32.xlu0 %v4614, 110
      %v4646 = vpop.permute.xlu0 %4645
      %4647 = vrot.lane.b32.xlu0 %v4615, 110
      %v4648 = vpop.permute.xlu0 %4647
      %4649 = vrot.lane.b32.xlu0 %v4616, 110
      %v4650 = vpop.permute.xlu0 %4649
      %4651 = vrot.lane.b32.xlu0 %v4617, 110
      %v4652 = vpop.permute.xlu0 %4651
      %4653 = vrot.lane.b32.xlu0 %v4618, 110
      %v4654 = vpop.permute.xlu0 %4653
      %4655 = vrot.lane.b32.xlu0 %v4619, 110
      %v4656 = vpop.permute.xlu0 %4655
      %4657 = vrot.lane.b32.xlu0 %v4620, 110
      %v4658 = vpop.permute.xlu0 %4657
      %4659 = vrot.lane.b32.xlu0 %v4621, 110
      %v4660 = vpop.permute.xlu0 %4659
      %v4661 = vsel %vm479, %v4636, %v4638
      %v4662 = vsel %vm479, %v4638, %v4640
      %v4663 = vsel %vm479, %v4640, %v4642
      %v4664 = vsel %vm479, %v4642, %v4644
      %v4665 = vsel %vm479, %v4644, %v4646
      %v4666 = vsel %vm479, %v4646, %v4648
      %v4667 = vsel %vm479, %v4648, %v4650
      %v4668 = vsel %vm479, %v4650, %v4652
      %v4669 = vsel %vm479, %v4652, %v4654
      %v4670 = vsel %vm479, %v4654, %v4656
      %v4671 = vsel %vm479, %v4656, %v4658
      %v4672 = vsel %vm479, %v4658, %v4660
      %4685 = vst [vmem:[#allocation3 + $0x120] sm:$0xff] %v4661
      %4686 = vst [vmem:[#allocation3 + $0x128] sm:$0xff] %v4662
      %4687 = vst [vmem:[#allocation3 + $0x130] sm:$0xff] %v4663
      %4688 = vst [vmem:[#allocation3 + $0x138] sm:$0xff] %v4664
      %4689 = vst [vmem:[#allocation3 + $0x140] sm:$0xff] %v4665
      %4690 = vst [vmem:[#allocation3 + $0x148] sm:$0xff] %v4666
      %4691 = vst [vmem:[#allocation3 + $0x150] sm:$0xff] %v4667
      %4692 = vst [vmem:[#allocation3 + $0x158] sm:$0xff] %v4668
      %4693 = vst [vmem:[#allocation3 + $0x160] sm:$0xff] %v4669
      %4694 = vst [vmem:[#allocation3 + $0x168] sm:$0xff] %v4670
      %4695 = vst [vmem:[#allocation3 + $0x170] sm:$0xff] %v4671
      %4696 = vst [vmem:[#allocation3 + $0x178] sm:$0xff] %v4672
      %v4697 = vld [vmem:[#allocation2] sm:$0xff]
      %v4698 = vld [vmem:[#allocation2 + $0x8] sm:$0xff]
      %v4699 = vld [vmem:[#allocation2 + $0x10] sm:$0xff]
      %v4700 = vld [vmem:[#allocation2 + $0x18] sm:$0xff]
      %v4701 = vld [vmem:[#allocation2 + $0x20] sm:$0xff]
      %v4702 = vld [vmem:[#allocation2 + $0x28] sm:$0xff]
      %v4703 = vld [vmem:[#allocation2 + $0x30] sm:$0xff]
      %v4704 = vld [vmem:[#allocation2 + $0x38] sm:$0xff]
      %v4705 = vld [vmem:[#allocation2 + $0x40] sm:$0xff]
      %v4706 = vld [vmem:[#allocation2 + $0x48] sm:$0xff]
      %v4707 = vld [vmem:[#allocation2 + $0x50] sm:$0xff]
      %v4708 = vld [vmem:[#allocation2 + $0x58] sm:$0xff]
      %v4709 = vld [vmem:[#allocation2 + $0x60] sm:$0xff]
      %4723 = vrot.lane.b32.xlu0 %v4697, 109
      %v4724 = vpop.permute.xlu0 %4723
      %4725 = vrot.lane.b32.xlu0 %v4698, 109
      %v4726 = vpop.permute.xlu0 %4725
      %4727 = vrot.lane.b32.xlu0 %v4699, 109
      %v4728 = vpop.permute.xlu0 %4727
      %4729 = vrot.lane.b32.xlu0 %v4700, 109
      %v4730 = vpop.permute.xlu0 %4729
      %4731 = vrot.lane.b32.xlu0 %v4701, 109
      %v4732 = vpop.permute.xlu0 %4731
      %4733 = vrot.lane.b32.xlu0 %v4702, 109
      %v4734 = vpop.permute.xlu0 %4733
      %4735 = vrot.lane.b32.xlu0 %v4703, 109
      %v4736 = vpop.permute.xlu0 %4735
      %4737 = vrot.lane.b32.xlu0 %v4704, 109
      %v4738 = vpop.permute.xlu0 %4737
      %4739 = vrot.lane.b32.xlu0 %v4705, 109
      %v4740 = vpop.permute.xlu0 %4739
      %4741 = vrot.lane.b32.xlu0 %v4706, 109
      %v4742 = vpop.permute.xlu0 %4741
      %4743 = vrot.lane.b32.xlu0 %v4707, 109
      %v4744 = vpop.permute.xlu0 %4743
      %4745 = vrot.lane.b32.xlu0 %v4708, 109
      %v4746 = vpop.permute.xlu0 %4745
      %4747 = vrot.lane.b32.xlu0 %v4709, 109
      %v4748 = vpop.permute.xlu0 %4747
      %v4749 = vsel %vm568, %v4724, %v4726
      %v4750 = vsel %vm568, %v4726, %v4728
      %v4751 = vsel %vm568, %v4728, %v4730
      %v4752 = vsel %vm568, %v4730, %v4732
      %v4753 = vsel %vm568, %v4732, %v4734
      %v4754 = vsel %vm568, %v4734, %v4736
      %v4755 = vsel %vm568, %v4736, %v4738
      %v4756 = vsel %vm568, %v4738, %v4740
      %v4757 = vsel %vm568, %v4740, %v4742
      %v4758 = vsel %vm568, %v4742, %v4744
      %v4759 = vsel %vm568, %v4744, %v4746
      %v4760 = vsel %vm568, %v4746, %v4748
      %4773 = vst [vmem:[#allocation3 + $0x180] sm:$0xff] %v4749
      %4774 = vst [vmem:[#allocation3 + $0x188] sm:$0xff] %v4750
      %4775 = vst [vmem:[#allocation3 + $0x190] sm:$0xff] %v4751
      %4776 = vst [vmem:[#allocation3 + $0x198] sm:$0xff] %v4752
      %4777 = vst [vmem:[#allocation3 + $0x1a0] sm:$0xff] %v4753
      %4778 = vst [vmem:[#allocation3 + $0x1a8] sm:$0xff] %v4754
      %4779 = vst [vmem:[#allocation3 + $0x1b0] sm:$0xff] %v4755
      %4780 = vst [vmem:[#allocation3 + $0x1b8] sm:$0xff] %v4756
      %4781 = vst [vmem:[#allocation3 + $0x1c0] sm:$0xff] %v4757
      %4782 = vst [vmem:[#allocation3 + $0x1c8] sm:$0xff] %v4758
      %4783 = vst [vmem:[#allocation3 + $0x1d0] sm:$0xff] %v4759
      %4784 = vst [vmem:[#allocation3 + $0x1d8] sm:$0xff] %v4760
      %v4785 = vld [vmem:[#allocation2] sm:$0xff]
      %v4786 = vld [vmem:[#allocation2 + $0x8] sm:$0xff]
      %v4787 = vld [vmem:[#allocation2 + $0x10] sm:$0xff]
      %v4788 = vld [vmem:[#allocation2 + $0x18] sm:$0xff]
      %v4789 = vld [vmem:[#allocation2 + $0x20] sm:$0xff]
      %v4790 = vld [vmem:[#allocation2 + $0x28] sm:$0xff]
      %v4791 = vld [vmem:[#allocation2 + $0x30] sm:$0xff]
      %v4792 = vld [vmem:[#allocation2 + $0x38] sm:$0xff]
      %v4793 = vld [vmem:[#allocation2 + $0x40] sm:$0xff]
      %v4794 = vld [vmem:[#allocation2 + $0x48] sm:$0xff]
      %v4795 = vld [vmem:[#allocation2 + $0x50] sm:$0xff]
      %v4796 = vld [vmem:[#allocation2 + $0x58] sm:$0xff]
      %v4797 = vld [vmem:[#allocation2 + $0x60] sm:$0xff]
      %4811 = vrot.lane.b32.xlu0 %v4785, 108
      %v4812 = vpop.permute.xlu0 %4811
      %4813 = vrot.lane.b32.xlu0 %v4786, 108
      %v4814 = vpop.permute.xlu0 %4813
      %4815 = vrot.lane.b32.xlu0 %v4787, 108
      %v4816 = vpop.permute.xlu0 %4815
      %4817 = vrot.lane.b32.xlu0 %v4788, 108
      %v4818 = vpop.permute.xlu0 %4817
      %4819 = vrot.lane.b32.xlu0 %v4789, 108
      %v4820 = vpop.permute.xlu0 %4819
      %4821 = vrot.lane.b32.xlu0 %v4790, 108
      %v4822 = vpop.permute.xlu0 %4821
      %4823 = vrot.lane.b32.xlu0 %v4791, 108
      %v4824 = vpop.permute.xlu0 %4823
      %4825 = vrot.lane.b32.xlu0 %v4792, 108
      %v4826 = vpop.permute.xlu0 %4825
      %4827 = vrot.lane.b32.xlu0 %v4793, 108
      %v4828 = vpop.permute.xlu0 %4827
      %4829 = vrot.lane.b32.xlu0 %v4794, 108
      %v4830 = vpop.permute.xlu0 %4829
      %4831 = vrot.lane.b32.xlu0 %v4795, 108
      %v4832 = vpop.permute.xlu0 %4831
      %4833 = vrot.lane.b32.xlu0 %v4796, 108
      %v4834 = vpop.permute.xlu0 %4833
      %4835 = vrot.lane.b32.xlu0 %v4797, 108
      %v4836 = vpop.permute.xlu0 %4835
      %v4837 = vsel %vm657, %v4812, %v4814
      %v4838 = vsel %vm657, %v4814, %v4816
      %v4839 = vsel %vm657, %v4816, %v4818
      %v4840 = vsel %vm657, %v4818, %v4820
      %v4841 = vsel %vm657, %v4820, %v4822
      %v4842 = vsel %vm657, %v4822, %v4824
      %v4843 = vsel %vm657, %v4824, %v4826
      %v4844 = vsel %vm657, %v4826, %v4828
      %v4845 = vsel %vm657, %v4828, %v4830
      %v4846 = vsel %vm657, %v4830, %v4832
      %v4847 = vsel %vm657, %v4832, %v4834
      %v4848 = vsel %vm657, %v4834, %v4836
      %4861 = vst [vmem:[#allocation3 + $0x1e0] sm:$0xff] %v4837
      %4862 = vst [vmem:[#allocation3 + $0x1e8] sm:$0xff] %v4838
      %4863 = vst [vmem:[#allocation3 + $0x1f0] sm:$0xff] %v4839
      %4864 = vst [vmem:[#allocation3 + $0x1f8] sm:$0xff] %v4840
      %4865 = vst [vmem:[#allocation3 + $0x200] sm:$0xff] %v4841
      %4866 = vst [vmem:[#allocation3 + $0x208] sm:$0xff] %v4842
      %4867 = vst [vmem:[#allocation3 + $0x210] sm:$0xff] %v4843
      %4868 = vst [vmem:[#allocation3 + $0x218] sm:$0xff] %v4844
      %4869 = vst [vmem:[#allocation3 + $0x220] sm:$0xff] %v4845
      %4870 = vst [vmem:[#allocation3 + $0x228] sm:$0xff] %v4846
      %4871 = vst [vmem:[#allocation3 + $0x230] sm:$0xff] %v4847
      %4872 = vst [vmem:[#allocation3 + $0x238] sm:$0xff] %v4848
      %v4873 = vld [vmem:[#allocation2] sm:$0xff]
      %v4874 = vld [vmem:[#allocation2 + $0x8] sm:$0xff]
      %v4875 = vld [vmem:[#allocation2 + $0x10] sm:$0xff]
      %v4876 = vld [vmem:[#allocation2 + $0x18] sm:$0xff]
      %v4877 = vld [vmem:[#allocation2 + $0x20] sm:$0xff]
      %v4878 = vld [vmem:[#allocation2 + $0x28] sm:$0xff]
      %v4879 = vld [vmem:[#allocation2 + $0x30] sm:$0xff]
      %v4880 = vld [vmem:[#allocation2 + $0x38] sm:$0xff]
      %v4881 = vld [vmem:[#allocation2 + $0x40] sm:$0xff]
      %v4882 = vld [vmem:[#allocation2 + $0x48] sm:$0xff]
      %v4883 = vld [vmem:[#allocation2 + $0x50] sm:$0xff]
      %v4884 = vld [vmem:[#allocation2 + $0x58] sm:$0xff]
      %v4885 = vld [vmem:[#allocation2 + $0x60] sm:$0xff]
      %4899 = vrot.lane.b32.xlu0 %v4873, 92
      %v4900 = vpop.permute.xlu0 %4899
      %4901 = vrot.lane.b32.xlu0 %v4874, 92
      %v4902 = vpop.permute.xlu0 %4901
      %4903 = vrot.lane.b32.xlu0 %v4875, 92
      %v4904 = vpop.permute.xlu0 %4903
      %4905 = vrot.lane.b32.xlu0 %v4876, 92
      %v4906 = vpop.permute.xlu0 %4905
      %4907 = vrot.lane.b32.xlu0 %v4877, 92
      %v4908 = vpop.permute.xlu0 %4907
      %4909 = vrot.lane.b32.xlu0 %v4878, 92
      %v4910 = vpop.permute.xlu0 %4909
      %4911 = vrot.lane.b32.xlu0 %v4879, 92
      %v4912 = vpop.permute.xlu0 %4911
      %4913 = vrot.lane.b32.xlu0 %v4880, 92
      %v4914 = vpop.permute.xlu0 %4913
      %4915 = vrot.lane.b32.xlu0 %v4881, 92
      %v4916 = vpop.permute.xlu0 %4915
      %4917 = vrot.lane.b32.xlu0 %v4882, 92
      %v4918 = vpop.permute.xlu0 %4917
      %4919 = vrot.lane.b32.xlu0 %v4883, 92
      %v4920 = vpop.permute.xlu0 %4919
      %4921 = vrot.lane.b32.xlu0 %v4884, 92
      %v4922 = vpop.permute.xlu0 %4921
      %4923 = vrot.lane.b32.xlu0 %v4885, 92
      %v4924 = vpop.permute.xlu0 %4923
      %v4925 = vsel %vm746, %v4900, %v4902
      %v4926 = vsel %vm746, %v4902, %v4904
      %v4927 = vsel %vm746, %v4904, %v4906
      %v4928 = vsel %vm746, %v4906, %v4908
      %v4929 = vsel %vm746, %v4908, %v4910
      %v4930 = vsel %vm746, %v4910, %v4912
      %v4931 = vsel %vm746, %v4912, %v4914
      %v4932 = vsel %vm746, %v4914, %v4916
      %v4933 = vsel %vm746, %v4916, %v4918
      %v4934 = vsel %vm746, %v4918, %v4920
      %v4935 = vsel %vm746, %v4920, %v4922
      %v4936 = vsel %vm746, %v4922, %v4924
      %4949 = vst [vmem:[#allocation3 + $0x240] sm:$0xff] %v4925
      %4950 = vst [vmem:[#allocation3 + $0x248] sm:$0xff] %v4926
      %4951 = vst [vmem:[#allocation3 + $0x250] sm:$0xff] %v4927
      %4952 = vst [vmem:[#allocation3 + $0x258] sm:$0xff] %v4928
      %4953 = vst [vmem:[#allocation3 + $0x260] sm:$0xff] %v4929
      %4954 = vst [vmem:[#allocation3 + $0x268] sm:$0xff] %v4930
      %4955 = vst [vmem:[#allocation3 + $0x270] sm:$0xff] %v4931
      %4956 = vst [vmem:[#allocation3 + $0x278] sm:$0xff] %v4932
      %4957 = vst [vmem:[#allocation3 + $0x280] sm:$0xff] %v4933
      %4958 = vst [vmem:[#allocation3 + $0x288] sm:$0xff] %v4934
      %4959 = vst [vmem:[#allocation3 + $0x290] sm:$0xff] %v4935
      %4960 = vst [vmem:[#allocation3 + $0x298] sm:$0xff] %v4936
      %v4961 = vld [vmem:[#allocation2] sm:$0xff]
      %v4962 = vld [vmem:[#allocation2 + $0x8] sm:$0xff]
      %v4963 = vld [vmem:[#allocation2 + $0x10] sm:$0xff]
      %v4964 = vld [vmem:[#allocation2 + $0x18] sm:$0xff]
      %v4965 = vld [vmem:[#allocation2 + $0x20] sm:$0xff]
      %v4966 = vld [vmem:[#allocation2 + $0x28] sm:$0xff]
      %v4967 = vld [vmem:[#allocation2 + $0x30] sm:$0xff]
      %v4968 = vld [vmem:[#allocation2 + $0x38] sm:$0xff]
      %v4969 = vld [vmem:[#allocation2 + $0x40] sm:$0xff]
      %v4970 = vld [vmem:[#allocation2 + $0x48] sm:$0xff]
      %v4971 = vld [vmem:[#allocation2 + $0x50] sm:$0xff]
      %v4972 = vld [vmem:[#allocation2 + $0x58] sm:$0xff]
      %v4973 = vld [vmem:[#allocation2 + $0x60] sm:$0xff]
      %4987 = vrot.lane.b32.xlu0 %v4961, 91
      %v4988 = vpop.permute.xlu0 %4987
      %4989 = vrot.lane.b32.xlu0 %v4962, 91
      %v4990 = vpop.permute.xlu0 %4989
      %4991 = vrot.lane.b32.xlu0 %v4963, 91
      %v4992 = vpop.permute.xlu0 %4991
      %4993 = vrot.lane.b32.xlu0 %v4964, 91
      %v4994 = vpop.permute.xlu0 %4993
      %4995 = vrot.lane.b32.xlu0 %v4965, 91
      %v4996 = vpop.permute.xlu0 %4995
      %4997 = vrot.lane.b32.xlu0 %v4966, 91
      %v4998 = vpop.permute.xlu0 %4997
      %4999 = vrot.lane.b32.xlu0 %v4967, 91
      %v5000 = vpop.permute.xlu0 %4999
      %5001 = vrot.lane.b32.xlu0 %v4968, 91
      %v5002 = vpop.permute.xlu0 %5001
      %5003 = vrot.lane.b32.xlu0 %v4969, 91
      %v5004 = vpop.permute.xlu0 %5003
      %5005 = vrot.lane.b32.xlu0 %v4970, 91
      %v5006 = vpop.permute.xlu0 %5005
      %5007 = vrot.lane.b32.xlu0 %v4971, 91
      %v5008 = vpop.permute.xlu0 %5007
      %5009 = vrot.lane.b32.xlu0 %v4972, 91
      %v5010 = vpop.permute.xlu0 %5009
      %5011 = vrot.lane.b32.xlu0 %v4973, 91
      %v5012 = vpop.permute.xlu0 %5011
      %v5013 = vsel %vm835, %v4988, %v4990
      %v5014 = vsel %vm835, %v4990, %v4992
      %v5015 = vsel %vm835, %v4992, %v4994
      %v5016 = vsel %vm835, %v4994, %v4996
      %v5017 = vsel %vm835, %v4996, %v4998
      %v5018 = vsel %vm835, %v4998, %v5000
      %v5019 = vsel %vm835, %v5000, %v5002
      %v5020 = vsel %vm835, %v5002, %v5004
      %v5021 = vsel %vm835, %v5004, %v5006
      %v5022 = vsel %vm835, %v5006, %v5008
      %v5023 = vsel %vm835, %v5008, %v5010
      %v5024 = vsel %vm835, %v5010, %v5012
      %5037 = vst [vmem:[#allocation3 + $0x2a0] sm:$0xff] %v5013
      %5038 = vst [vmem:[#allocation3 + $0x2a8] sm:$0xff] %v5014
      %5039 = vst [vmem:[#allocation3 + $0x2b0] sm:$0xff] %v5015
      %5040 = vst [vmem:[#allocation3 + $0x2b8] sm:$0xff] %v5016
      %5041 = vst [vmem:[#allocation3 + $0x2c0] sm:$0xff] %v5017
      %5042 = vst [vmem:[#allocation3 + $0x2c8] sm:$0xff] %v5018
      %5043 = vst [vmem:[#allocation3 + $0x2d0] sm:$0xff] %v5019
      %5044 = vst [vmem:[#allocation3 + $0x2d8] sm:$0xff] %v5020
      %5045 = vst [vmem:[#allocation3 + $0x2e0] sm:$0xff] %v5021
      %5046 = vst [vmem:[#allocation3 + $0x2e8] sm:$0xff] %v5022
      %5047 = vst [vmem:[#allocation3 + $0x2f0] sm:$0xff] %v5023
      %5048 = vst [vmem:[#allocation3 + $0x2f8] sm:$0xff] %v5024
      %v5049 = vld [vmem:[#allocation2] sm:$0xff]
      %v5050 = vld [vmem:[#allocation2 + $0x8] sm:$0xff]
      %v5051 = vld [vmem:[#allocation2 + $0x10] sm:$0xff]
      %v5052 = vld [vmem:[#allocation2 + $0x18] sm:$0xff]
      %v5053 = vld [vmem:[#allocation2 + $0x20] sm:$0xff]
      %v5054 = vld [vmem:[#allocation2 + $0x28] sm:$0xff]
      %v5055 = vld [vmem:[#allocation2 + $0x30] sm:$0xff]
      %v5056 = vld [vmem:[#allocation2 + $0x38] sm:$0xff]
      %v5057 = vld [vmem:[#allocation2 + $0x40] sm:$0xff]
      %v5058 = vld [vmem:[#allocation2 + $0x48] sm:$0xff]
      %v5059 = vld [vmem:[#allocation2 + $0x50] sm:$0xff]
      %v5060 = vld [vmem:[#allocation2 + $0x58] sm:$0xff]
      %v5061 = vld [vmem:[#allocation2 + $0x60] sm:$0xff]
      %5075 = vrot.lane.b32.xlu0 %v5049, 90
      %v5076 = vpop.permute.xlu0 %5075
      %5077 = vrot.lane.b32.xlu0 %v5050, 90
      %v5078 = vpop.permute.xlu0 %5077
      %5079 = vrot.lane.b32.xlu0 %v5051, 90
      %v5080 = vpop.permute.xlu0 %5079
      %5081 = vrot.lane.b32.xlu0 %v5052, 90
      %v5082 = vpop.permute.xlu0 %5081
      %5083 = vrot.lane.b32.xlu0 %v5053, 90
      %v5084 = vpop.permute.xlu0 %5083
      %5085 = vrot.lane.b32.xlu0 %v5054, 90
      %v5086 = vpop.permute.xlu0 %5085
      %5087 = vrot.lane.b32.xlu0 %v5055, 90
      %v5088 = vpop.permute.xlu0 %5087
      %5089 = vrot.lane.b32.xlu0 %v5056, 90
      %v5090 = vpop.permute.xlu0 %5089
      %5091 = vrot.lane.b32.xlu0 %v5057, 90
      %v5092 = vpop.permute.xlu0 %5091
      %5093 = vrot.lane.b32.xlu0 %v5058, 90
      %v5094 = vpop.permute.xlu0 %5093
      %5095 = vrot.lane.b32.xlu0 %v5059, 90
      %v5096 = vpop.permute.xlu0 %5095
      %5097 = vrot.lane.b32.xlu0 %v5060, 90
      %v5098 = vpop.permute.xlu0 %5097
      %5099 = vrot.lane.b32.xlu0 %v5061, 90
      %v5100 = vpop.permute.xlu0 %5099
      %v5101 = vsel %vm924, %v5076, %v5078
      %v5102 = vsel %vm924, %v5078, %v5080
      %v5103 = vsel %vm924, %v5080, %v5082
      %v5104 = vsel %vm924, %v5082, %v5084
      %v5105 = vsel %vm924, %v5084, %v5086
      %v5106 = vsel %vm924, %v5086, %v5088
      %v5107 = vsel %vm924, %v5088, %v5090
      %v5108 = vsel %vm924, %v5090, %v5092
      %v5109 = vsel %vm924, %v5092, %v5094
      %v5110 = vsel %vm924, %v5094, %v5096
      %v5111 = vsel %vm924, %v5096, %v5098
      %v5112 = vsel %vm924, %v5098, %v5100
      %5125 = vst [vmem:[#allocation3 + $0x300] sm:$0xff] %v5101
      %5126 = vst [vmem:[#allocation3 + $0x308] sm:$0xff] %v5102
      %5127 = vst [vmem:[#allocation3 + $0x310] sm:$0xff] %v5103
      %5128 = vst [vmem:[#allocation3 + $0x318] sm:$0xff] %v5104
      %5129 = vst [vmem:[#allocation3 + $0x320] sm:$0xff] %v5105
      %5130 = vst [vmem:[#allocation3 + $0x328] sm:$0xff] %v5106
      %5131 = vst [vmem:[#allocation3 + $0x330] sm:$0xff] %v5107
      %5132 = vst [vmem:[#allocation3 + $0x338] sm:$0xff] %v5108
      %5133 = vst [vmem:[#allocation3 + $0x340] sm:$0xff] %v5109
      %5134 = vst [vmem:[#allocation3 + $0x348] sm:$0xff] %v5110
      %5135 = vst [vmem:[#allocation3 + $0x350] sm:$0xff] %v5111
      %5136 = vst [vmem:[#allocation3 + $0x358] sm:$0xff] %v5112
      %s5137 = scalar_lea.vmem %s1, 24
      %v5138 = vld [vmem:[%s5137] sm:$0xff]
      %v5139 = vld [vmem:[#allocation3] sm:$0xff]
      %v5140 = vld [vmem:[#allocation3 + $0x8] sm:$0xff]
      %v5141 = vld [vmem:[#allocation3 + $0x10] sm:$0xff]
      %v5142 = vld [vmem:[#allocation3 + $0x18] sm:$0xff]
      %v5143 = vld [vmem:[#allocation3 + $0x20] sm:$0xff]
      %v5144 = vld [vmem:[#allocation3 + $0x28] sm:$0xff]
      %v5145 = vld [vmem:[#allocation3 + $0x30] sm:$0xff]
      %v5146 = vld [vmem:[#allocation3 + $0x38] sm:$0xff]
      %v5147 = vld [vmem:[#allocation3 + $0x40] sm:$0xff]
      %v5148 = vld [vmem:[#allocation3 + $0x48] sm:$0xff]
      %v5149 = vld [vmem:[#allocation3 + $0x50] sm:$0xff]
      %v5150 = vld [vmem:[#allocation3 + $0x58] sm:$0xff]
      %v5151 = vld [vmem:[#allocation3 + $0x60] sm:$0xff]
      %v5152 = vld [vmem:[#allocation3 + $0x68] sm:$0xff]
      %v5153 = vld [vmem:[#allocation3 + $0x70] sm:$0xff]
      %v5154 = vld [vmem:[#allocation3 + $0x78] sm:$0xff]
      %v5155 = vld [vmem:[#allocation3 + $0x80] sm:$0xff]
      %v5156 = vld [vmem:[#allocation3 + $0x88] sm:$0xff]
      %v5157 = vld [vmem:[#allocation3 + $0x90] sm:$0xff]
      %v5158 = vld [vmem:[#allocation3 + $0x98] sm:$0xff]
      %v5159 = vld [vmem:[#allocation3 + $0xa0] sm:$0xff]
      %v5160 = vld [vmem:[#allocation3 + $0xa8] sm:$0xff]
      %v5161 = vld [vmem:[#allocation3 + $0xb0] sm:$0xff]
      %v5162 = vld [vmem:[#allocation3 + $0xb8] sm:$0xff]
      %v5163 = vld [vmem:[#allocation3 + $0xc0] sm:$0xff]
      %v5164 = vld [vmem:[#allocation3 + $0xc8] sm:$0xff]
      %v5165 = vld [vmem:[#allocation3 + $0xd0] sm:$0xff]
      %v5166 = vld [vmem:[#allocation3 + $0xd8] sm:$0xff]
      %v5167 = vld [vmem:[#allocation3 + $0xe0] sm:$0xff]
      %v5168 = vld [vmem:[#allocation3 + $0xe8] sm:$0xff]
      %v5169 = vld [vmem:[#allocation3 + $0xf0] sm:$0xff]
      %v5170 = vld [vmem:[#allocation3 + $0xf8] sm:$0xff]
      %v5171 = vld [vmem:[#allocation3 + $0x100] sm:$0xff]
      %v5172 = vld [vmem:[#allocation3 + $0x108] sm:$0xff]
      %v5173 = vld [vmem:[#allocation3 + $0x110] sm:$0xff]
      %v5174 = vld [vmem:[#allocation3 + $0x118] sm:$0xff]
      %v5175 = vld [vmem:[#allocation3 + $0x120] sm:$0xff]
      %v5176 = vld [vmem:[#allocation3 + $0x128] sm:$0xff]
      %v5177 = vld [vmem:[#allocation3 + $0x130] sm:$0xff]
      %v5178 = vld [vmem:[#allocation3 + $0x138] sm:$0xff]
      %v5179 = vld [vmem:[#allocation3 + $0x140] sm:$0xff]
      %v5180 = vld [vmem:[#allocation3 + $0x148] sm:$0xff]
      %v5181 = vld [vmem:[#allocation3 + $0x150] sm:$0xff]
      %v5182 = vld [vmem:[#allocation3 + $0x158] sm:$0xff]
      %v5183 = vld [vmem:[#allocation3 + $0x160] sm:$0xff]
      %v5184 = vld [vmem:[#allocation3 + $0x168] sm:$0xff]
      %v5185 = vld [vmem:[#allocation3 + $0x170] sm:$0xff]
      %v5186 = vld [vmem:[#allocation3 + $0x178] sm:$0xff]
      %v5187 = vld [vmem:[#allocation3 + $0x180] sm:$0xff]
      %v5188 = vld [vmem:[#allocation3 + $0x188] sm:$0xff]
      %v5189 = vld [vmem:[#allocation3 + $0x190] sm:$0xff]
      %v5190 = vld [vmem:[#allocation3 + $0x198] sm:$0xff]
      %v5191 = vld [vmem:[#allocation3 + $0x1a0] sm:$0xff]
      %v5192 = vld [vmem:[#allocation3 + $0x1a8] sm:$0xff]
      %v5193 = vld [vmem:[#allocation3 + $0x1b0] sm:$0xff]
      %v5194 = vld [vmem:[#allocation3 + $0x1b8] sm:$0xff]
      %v5195 = vld [vmem:[#allocation3 + $0x1c0] sm:$0xff]
      %v5196 = vld [vmem:[#allocation3 + $0x1c8] sm:$0xff]
      %v5197 = vld [vmem:[#allocation3 + $0x1d0] sm:$0xff]
      %v5198 = vld [vmem:[#allocation3 + $0x1d8] sm:$0xff]
      %v5199 = vld [vmem:[#allocation3 + $0x1e0] sm:$0xff]
      %v5200 = vld [vmem:[#allocation3 + $0x1e8] sm:$0xff]
      %v5201 = vld [vmem:[#allocation3 + $0x1f0] sm:$0xff]
      %v5202 = vld [vmem:[#allocation3 + $0x1f8] sm:$0xff]
      %v5203 = vld [vmem:[#allocation3 + $0x200] sm:$0xff]
      %v5204 = vld [vmem:[#allocation3 + $0x208] sm:$0xff]
      %v5205 = vld [vmem:[#allocation3 + $0x210] sm:$0xff]
      %v5206 = vld [vmem:[#allocation3 + $0x218] sm:$0xff]
      %v5207 = vld [vmem:[#allocation3 + $0x220] sm:$0xff]
      %v5208 = vld [vmem:[#allocation3 + $0x228] sm:$0xff]
      %v5209 = vld [vmem:[#allocation3 + $0x230] sm:$0xff]
      %v5210 = vld [vmem:[#allocation3 + $0x238] sm:$0xff]
      %v5211 = vld [vmem:[#allocation3 + $0x240] sm:$0xff]
      %v5212 = vld [vmem:[#allocation3 + $0x248] sm:$0xff]
      %v5213 = vld [vmem:[#allocation3 + $0x250] sm:$0xff]
      %v5214 = vld [vmem:[#allocation3 + $0x258] sm:$0xff]
      %v5215 = vld [vmem:[#allocation3 + $0x260] sm:$0xff]
      %v5216 = vld [vmem:[#allocation3 + $0x268] sm:$0xff]
      %v5217 = vld [vmem:[#allocation3 + $0x270] sm:$0xff]
      %v5218 = vld [vmem:[#allocation3 + $0x278] sm:$0xff]
      %v5219 = vld [vmem:[#allocation3 + $0x280] sm:$0xff]
      %v5220 = vld [vmem:[#allocation3 + $0x288] sm:$0xff]
      %v5221 = vld [vmem:[#allocation3 + $0x290] sm:$0xff]
      %v5222 = vld [vmem:[#allocation3 + $0x298] sm:$0xff]
      %v5223 = vld [vmem:[#allocation3 + $0x2a0] sm:$0xff]
      %v5224 = vld [vmem:[#allocation3 + $0x2a8] sm:$0xff]
      %v5225 = vld [vmem:[#allocation3 + $0x2b0] sm:$0xff]
      %v5226 = vld [vmem:[#allocation3 + $0x2b8] sm:$0xff]
      %v5227 = vld [vmem:[#allocation3 + $0x2c0] sm:$0xff]
      %v5228 = vld [vmem:[#allocation3 + $0x2c8] sm:$0xff]
      %v5229 = vld [vmem:[#allocation3 + $0x2d0] sm:$0xff]
      %v5230 = vld [vmem:[#allocation3 + $0x2d8] sm:$0xff]
      %v5231 = vld [vmem:[#allocation3 + $0x2e0] sm:$0xff]
      %v5232 = vld [vmem:[#allocation3 + $0x2e8] sm:$0xff]
      %v5233 = vld [vmem:[#allocation3 + $0x2f0] sm:$0xff]
      %v5234 = vld [vmem:[#allocation3 + $0x2f8] sm:$0xff]
      %v5235 = vld [vmem:[#allocation3 + $0x300] sm:$0xff]
      %v5236 = vld [vmem:[#allocation3 + $0x308] sm:$0xff]
      %v5237 = vld [vmem:[#allocation3 + $0x310] sm:$0xff]
      %v5238 = vld [vmem:[#allocation3 + $0x318] sm:$0xff]
      %v5239 = vld [vmem:[#allocation3 + $0x320] sm:$0xff]
      %v5240 = vld [vmem:[#allocation3 + $0x328] sm:$0xff]
      %v5241 = vld [vmem:[#allocation3 + $0x330] sm:$0xff]
      %v5242 = vld [vmem:[#allocation3 + $0x338] sm:$0xff]
      %v5243 = vld [vmem:[#allocation3 + $0x340] sm:$0xff]
      %v5244 = vld [vmem:[#allocation3 + $0x348] sm:$0xff]
      %v5245 = vld [vmem:[#allocation3 + $0x350] sm:$0xff]
      %v5246 = vld [vmem:[#allocation3 + $0x358] sm:$0xff]
      %s5247 = scalar_lea.vmem %s2, 24
      %v5248 = vld [vmem:[%s5247] sm:$0xff]
      %5250 = vset.pattern.permute.xlu0 0
      %5251 = vperm.xlu0 %5250, %v5248
      %v5252 = vpop.permute.xlu0 %5251
      %v5255 = vsel %vm1076, %v5138, 0
      %5257 = vmatprep.subr.mxu0 %v5140
      %5258 = vmatpush1.msra.mxu0 %v5139
      %5259 = vmatprep.subr.mxu0 %v5152
      %5260 = vmatpush1.msra.mxu0 %v5151
      %5261 = vmatprep.subr.mxu0 %v5164
      %5262 = vmatpush1.msra.mxu0 %v5163
      %5263 = vmatprep.subr.mxu0 %v5176
      %5264 = vmatpush1.msra.mxu0 %v5175
      %5265 = vmatprep.subr.mxu0 %v5188
      %5266 = vmatpush1.msra.mxu0 %v5187
      %5267 = vmatprep.subr.mxu0 %v5200
      %5268 = vmatpush1.msra.mxu0 %v5199
      %5269 = vmatprep.subr.mxu0 %v5212
      %5270 = vmatpush1.msra.mxu0 %v5211
      %5271 = vmatprep.subr.mxu0 %v5224
      %5272 = vmatpush1.msra.mxu0 %v5223
      %5273 = vmatprep.subr.mxu0 %v5236
      %5274 = vmatpush1.msra.mxu0 %v5235
      %5275 = vmatprep.subr.mxu0 0.0
      %5276 = vmatpush1.msra.mxu0 0.0
      %5277 = vmatprep.subr.mxu0 0.0
      %5278 = vmatpush1.msra.mxu0 0.0
      %5279 = vmatprep.subr.mxu0 0.0
      %5280 = vmatpush1.msra.mxu0 0.0
      %5281 = vmatprep.subr.mxu0 0.0
      %5282 = vmatpush1.msra.mxu0 0.0
      %5283 = vmatprep.subr.mxu0 0.0
      %5284 = vmatpush1.msra.mxu0 0.0
      %5285 = vmatprep.subr.mxu0 0.0
      %5286 = vmatpush1.msra.mxu0 0.0
      %5287 = vmatprep.subr.mxu0 0.0
      %5288 = vmatpush1.msra.mxu0 0.0
      %5289 = vmatprep.subr.mxu0 0.0
      %5290 = vmatpush1.msra.mxu0 0.0
      %5291 = vmatprep.subr.mxu0 0.0
      %5292 = vmatpush1.msra.mxu0 0.0
      %5293 = vmatprep.subr.mxu0 0.0
      %5294 = vmatpush1.msra.mxu0 0.0
      %5295 = vmatprep.subr.mxu0 0.0
      %5296 = vmatpush1.msra.mxu0 0.0
      %5297 = vmatprep.subr.mxu0 0.0
      %5298 = vmatpush1.msra.mxu0 0.0
      %5299 = vmatprep.subr.mxu0 0.0
      %5300 = vmatpush1.msra.mxu0 0.0
      %5301 = vmatprep.subr.mxu0 0.0
      %5302 = vmatpush1.msra.mxu0 0.0
      %5303 = vmatprep.subr.mxu0 0.0
      %5304 = vmatpush1.msra.mxu0 0.0
      %5305 = vmatprep.subr.mxu0 0.0
      %5306 = vmatpush1.msra.mxu0 0.0
      %5307 = vmatprep.subr.mxu0 0.0
      %5308 = vmatpush1.msra.mxu0 0.0
      %5309 = vmatprep.subr.mxu0 0.0
      %5310 = vmatpush1.msra.mxu0 0.0
      %5311 = vmatprep.subr.mxu0 0.0
      %5312 = vmatpush1.msra.mxu0 0.0
      %5313 = vmatprep.subr.mxu0 0.0
      %5314 = vmatpush1.msra.mxu0 0.0
      %5315 = vmatprep.subr.mxu0 0.0
      %5316 = vmatpush1.msra.mxu0 0.0
      %5317 = vmatprep.subr.mxu0 0.0
      %5318 = vmatpush1.msra.mxu0 0.0
      %5319 = vmatprep.subr.mxu0 0.0
      %5320 = vmatpush1.msra.mxu0 0.0
      %5321 = vmatprep.mubr.f32.mxu0 0.0
      %5322 = vmatmul.mubr.f32.gmra.mrb[0].mxu0 %v5255
      %v5323 = vpop.f32.mrb[0].mxu0
      %v5324 = vadd.f32 %v5252, %v5323
      %v5325 = vpop.f32.mrb[0].mxu0
      %v5326 = vadd.f32 %v5252, %v5325
      %5327 = vdwg.mxu0
      %5328 = vmatprep.subr.mxu0 %v5142
      %5329 = vmatpush1.msra.mxu0 %v5141
      %5330 = vmatprep.subr.mxu0 %v5154
      %5331 = vmatpush1.msra.mxu0 %v5153
      %5332 = vmatprep.subr.mxu0 %v5166
      %5333 = vmatpush1.msra.mxu0 %v5165
      %5334 = vmatprep.subr.mxu0 %v5178
      %5335 = vmatpush1.msra.mxu0 %v5177
      %5336 = vmatprep.subr.mxu0 %v5190
      %5337 = vmatpush1.msra.mxu0 %v5189
      %5338 = vmatprep.subr.mxu0 %v5202
      %5339 = vmatpush1.msra.mxu0 %v5201
      %5340 = vmatprep.subr.mxu0 %v5214
      %5341 = vmatpush1.msra.mxu0 %v5213
      %5342 = vmatprep.subr.mxu0 %v5226
      %5343 = vmatpush1.msra.mxu0 %v5225
      %5344 = vmatprep.subr.mxu0 %v5238
      %5345 = vmatpush1.msra.mxu0 %v5237
      %5346 = vmatprep.subr.mxu0 0.0
      %5347 = vmatpush1.msra.mxu0 0.0
      %5348 = vmatprep.subr.mxu0 0.0
      %5349 = vmatpush1.msra.mxu0 0.0
      %5350 = vmatprep.subr.mxu0 0.0
      %5351 = vmatpush1.msra.mxu0 0.0
      %5352 = vmatprep.subr.mxu0 0.0
      %5353 = vmatpush1.msra.mxu0 0.0
      %5354 = vmatprep.subr.mxu0 0.0
      %5355 = vmatpush1.msra.mxu0 0.0
      %5356 = vmatprep.subr.mxu0 0.0
      %5357 = vmatpush1.msra.mxu0 0.0
      %5358 = vmatprep.subr.mxu0 0.0
      %5359 = vmatpush1.msra.mxu0 0.0
      %5360 = vmatprep.subr.mxu0 0.0
      %5361 = vmatpush1.msra.mxu0 0.0
      %5362 = vmatprep.subr.mxu0 0.0
      %5363 = vmatpush1.msra.mxu0 0.0
      %5364 = vmatprep.subr.mxu0 0.0
      %5365 = vmatpush1.msra.mxu0 0.0
      %5366 = vmatprep.subr.mxu0 0.0
      %5367 = vmatpush1.msra.mxu0 0.0
      %5368 = vmatprep.subr.mxu0 0.0
      %5369 = vmatpush1.msra.mxu0 0.0
      %5370 = vmatprep.subr.mxu0 0.0
      %5371 = vmatpush1.msra.mxu0 0.0
      %5372 = vmatprep.subr.mxu0 0.0
      %5373 = vmatpush1.msra.mxu0 0.0
      %5374 = vmatprep.subr.mxu0 0.0
      %5375 = vmatpush1.msra.mxu0 0.0
      %5376 = vmatprep.subr.mxu0 0.0
      %5377 = vmatpush1.msra.mxu0 0.0
      %5378 = vmatprep.subr.mxu0 0.0
      %5379 = vmatpush1.msra.mxu0 0.0
      %5380 = vmatprep.subr.mxu0 0.0
      %5381 = vmatpush1.msra.mxu0 0.0
      %5382 = vmatprep.subr.mxu0 0.0
      %5383 = vmatpush1.msra.mxu0 0.0
      %5384 = vmatprep.subr.mxu0 0.0
      %5385 = vmatpush1.msra.mxu0 0.0
      %5386 = vmatprep.subr.mxu0 0.0
      %5387 = vmatpush1.msra.mxu0 0.0
      %5388 = vmatprep.subr.mxu0 0.0
      %5389 = vmatpush1.msra.mxu0 0.0
      %5390 = vmatprep.subr.mxu0 0.0
      %5391 = vmatpush1.msra.mxu0 0.0
      %5392 = vmatprep.mubr.f32.mxu0 0.0
      %5393 = vmatmul.mubr.f32.gmra.mrb[0].mxu0 %v5255
      %v5394 = vpop.f32.mrb[0].mxu0
      %v5395 = vadd.f32 %v5252, %v5394
      %v5396 = vpop.f32.mrb[0].mxu0
      %v5397 = vadd.f32 %v5252, %v5396
      %5398 = vdwg.mxu0
      %5399 = vmatprep.subr.mxu0 %v5144
      %5400 = vmatpush1.msra.mxu0 %v5143
      %5401 = vmatprep.subr.mxu0 %v5156
      %5402 = vmatpush1.msra.mxu0 %v5155
      %5403 = vmatprep.subr.mxu0 %v5168
      %5404 = vmatpush1.msra.mxu0 %v5167
      %5405 = vmatprep.subr.mxu0 %v5180
      %5406 = vmatpush1.msra.mxu0 %v5179
      %5407 = vmatprep.subr.mxu0 %v5192
      %5408 = vmatpush1.msra.mxu0 %v5191
      %5409 = vmatprep.subr.mxu0 %v5204
      %5410 = vmatpush1.msra.mxu0 %v5203
      %5411 = vmatprep.subr.mxu0 %v5216
      %5412 = vmatpush1.msra.mxu0 %v5215
      %5413 = vmatprep.subr.mxu0 %v5228
      %5414 = vmatpush1.msra.mxu0 %v5227
      %5415 = vmatprep.subr.mxu0 %v5240
      %5416 = vmatpush1.msra.mxu0 %v5239
      %5417 = vmatprep.subr.mxu0 0.0
      %5418 = vmatpush1.msra.mxu0 0.0
      %5419 = vmatprep.subr.mxu0 0.0
      %5420 = vmatpush1.msra.mxu0 0.0
      %5421 = vmatprep.subr.mxu0 0.0
      %5422 = vmatpush1.msra.mxu0 0.0
      %5423 = vmatprep.subr.mxu0 0.0
      %5424 = vmatpush1.msra.mxu0 0.0
      %5425 = vmatprep.subr.mxu0 0.0
      %5426 = vmatpush1.msra.mxu0 0.0
      %5427 = vmatprep.subr.mxu0 0.0
      %5428 = vmatpush1.msra.mxu0 0.0
      %5429 = vmatprep.subr.mxu0 0.0
      %5430 = vmatpush1.msra.mxu0 0.0
      %5431 = vmatprep.subr.mxu0 0.0
      %5432 = vmatpush1.msra.mxu0 0.0
      %5433 = vmatprep.subr.mxu0 0.0
      %5434 = vmatpush1.msra.mxu0 0.0
      %5435 = vmatprep.subr.mxu0 0.0
      %5436 = vmatpush1.msra.mxu0 0.0
      %5437 = vmatprep.subr.mxu0 0.0
      %5438 = vmatpush1.msra.mxu0 0.0
      %5439 = vmatprep.subr.mxu0 0.0
      %5440 = vmatpush1.msra.mxu0 0.0
      %5441 = vmatprep.subr.mxu0 0.0
      %5442 = vmatpush1.msra.mxu0 0.0
      %5443 = vmatprep.subr.mxu0 0.0
      %5444 = vmatpush1.msra.mxu0 0.0
      %5445 = vmatprep.subr.mxu0 0.0
      %5446 = vmatpush1.msra.mxu0 0.0
      %5447 = vmatprep.subr.mxu0 0.0
      %5448 = vmatpush1.msra.mxu0 0.0
      %5449 = vmatprep.subr.mxu0 0.0
      %5450 = vmatpush1.msra.mxu0 0.0
      %5451 = vmatprep.subr.mxu0 0.0
      %5452 = vmatpush1.msra.mxu0 0.0
      %5453 = vmatprep.subr.mxu0 0.0
      %5454 = vmatpush1.msra.mxu0 0.0
      %5455 = vmatprep.subr.mxu0 0.0
      %5456 = vmatpush1.msra.mxu0 0.0
      %5457 = vmatprep.subr.mxu0 0.0
      %5458 = vmatpush1.msra.mxu0 0.0
      %5459 = vmatprep.subr.mxu0 0.0
      %5460 = vmatpush1.msra.mxu0 0.0
      %5461 = vmatprep.subr.mxu0 0.0
      %5462 = vmatpush1.msra.mxu0 0.0
      %5463 = vmatprep.mubr.f32.mxu0 0.0
      %5464 = vmatmul.mubr.f32.gmra.mrb[0].mxu0 %v5255
      %v5465 = vpop.f32.mrb[0].mxu0
      %v5466 = vadd.f32 %v5252, %v5465
      %v5467 = vpop.f32.mrb[0].mxu0
      %v5468 = vadd.f32 %v5252, %v5467
      %5469 = vdwg.mxu0
      %5470 = vmatprep.subr.mxu0 %v5146
      %5471 = vmatpush1.msra.mxu0 %v5145
      %5472 = vmatprep.subr.mxu0 %v5158
      %5473 = vmatpush1.msra.mxu0 %v5157
      %5474 = vmatprep.subr.mxu0 %v5170
      %5475 = vmatpush1.msra.mxu0 %v5169
      %5476 = vmatprep.subr.mxu0 %v5182
      %5477 = vmatpush1.msra.mxu0 %v5181
      %5478 = vmatprep.subr.mxu0 %v5194
      %5479 = vmatpush1.msra.mxu0 %v5193
      %5480 = vmatprep.subr.mxu0 %v5206
      %5481 = vmatpush1.msra.mxu0 %v5205
      %5482 = vmatprep.subr.mxu0 %v5218
      %5483 = vmatpush1.msra.mxu0 %v5217
      %5484 = vmatprep.subr.mxu0 %v5230
      %5485 = vmatpush1.msra.mxu0 %v5229
      %5486 = vmatprep.subr.mxu0 %v5242
      %5487 = vmatpush1.msra.mxu0 %v5241
      %5488 = vmatprep.subr.mxu0 0.0
      %5489 = vmatpush1.msra.mxu0 0.0
      %5490 = vmatprep.subr.mxu0 0.0
      %5491 = vmatpush1.msra.mxu0 0.0
      %5492 = vmatprep.subr.mxu0 0.0
      %5493 = vmatpush1.msra.mxu0 0.0
      %5494 = vmatprep.subr.mxu0 0.0
      %5495 = vmatpush1.msra.mxu0 0.0
      %5496 = vmatprep.subr.mxu0 0.0
      %5497 = vmatpush1.msra.mxu0 0.0
      %5498 = vmatprep.subr.mxu0 0.0
      %5499 = vmatpush1.msra.mxu0 0.0
      %5500 = vmatprep.subr.mxu0 0.0
      %5501 = vmatpush1.msra.mxu0 0.0
      %5502 = vmatprep.subr.mxu0 0.0
      %5503 = vmatpush1.msra.mxu0 0.0
      %5504 = vmatprep.subr.mxu0 0.0
      %5505 = vmatpush1.msra.mxu0 0.0
      %5506 = vmatprep.subr.mxu0 0.0
      %5507 = vmatpush1.msra.mxu0 0.0
      %5508 = vmatprep.subr.mxu0 0.0
      %5509 = vmatpush1.msra.mxu0 0.0
      %5510 = vmatprep.subr.mxu0 0.0
      %5511 = vmatpush1.msra.mxu0 0.0
      %5512 = vmatprep.subr.mxu0 0.0
      %5513 = vmatpush1.msra.mxu0 0.0
      %5514 = vmatprep.subr.mxu0 0.0
      %5515 = vmatpush1.msra.mxu0 0.0
      %5516 = vmatprep.subr.mxu0 0.0
      %5517 = vmatpush1.msra.mxu0 0.0
      %5518 = vmatprep.subr.mxu0 0.0
      %5519 = vmatpush1.msra.mxu0 0.0
      %5520 = vmatprep.subr.mxu0 0.0
      %5521 = vmatpush1.msra.mxu0 0.0
      %5522 = vmatprep.subr.mxu0 0.0
      %5523 = vmatpush1.msra.mxu0 0.0
      %5524 = vmatprep.subr.mxu0 0.0
      %5525 = vmatpush1.msra.mxu0 0.0
      %5526 = vmatprep.subr.mxu0 0.0
      %5527 = vmatpush1.msra.mxu0 0.0
      %5528 = vmatprep.subr.mxu0 0.0
      %5529 = vmatpush1.msra.mxu0 0.0
      %5530 = vmatprep.subr.mxu0 0.0
      %5531 = vmatpush1.msra.mxu0 0.0
      %5532 = vmatprep.subr.mxu0 0.0
      %5533 = vmatpush1.msra.mxu0 0.0
      %5534 = vmatprep.mubr.f32.mxu0 0.0
      %5535 = vmatmul.mubr.f32.gmra.mrb[0].mxu0 %v5255
      %v5536 = vpop.f32.mrb[0].mxu0
      %v5537 = vadd.f32 %v5252, %v5536
      %v5538 = vpop.f32.mrb[0].mxu0
      %v5539 = vadd.f32 %v5252, %v5538
      %5540 = vdwg.mxu0
      %5541 = vmatprep.subr.mxu0 %v5148
      %5542 = vmatpush1.msra.mxu0 %v5147
      %5543 = vmatprep.subr.mxu0 %v5160
      %5544 = vmatpush1.msra.mxu0 %v5159
      %5545 = vmatprep.subr.mxu0 %v5172
      %5546 = vmatpush1.msra.mxu0 %v5171
      %5547 = vmatprep.subr.mxu0 %v5184
      %5548 = vmatpush1.msra.mxu0 %v5183
      %5549 = vmatprep.subr.mxu0 %v5196
      %5550 = vmatpush1.msra.mxu0 %v5195
      %5551 = vmatprep.subr.mxu0 %v5208
      %5552 = vmatpush1.msra.mxu0 %v5207
      %5553 = vmatprep.subr.mxu0 %v5220
      %5554 = vmatpush1.msra.mxu0 %v5219
      %5555 = vmatprep.subr.mxu0 %v5232
      %5556 = vmatpush1.msra.mxu0 %v5231
      %5557 = vmatprep.subr.mxu0 %v5244
      %5558 = vmatpush1.msra.mxu0 %v5243
      %5559 = vmatprep.subr.mxu0 0.0
      %5560 = vmatpush1.msra.mxu0 0.0
      %5561 = vmatprep.subr.mxu0 0.0
      %5562 = vmatpush1.msra.mxu0 0.0
      %5563 = vmatprep.subr.mxu0 0.0
      %5564 = vmatpush1.msra.mxu0 0.0
      %5565 = vmatprep.subr.mxu0 0.0
      %5566 = vmatpush1.msra.mxu0 0.0
      %5567 = vmatprep.subr.mxu0 0.0
      %5568 = vmatpush1.msra.mxu0 0.0
      %5569 = vmatprep.subr.mxu0 0.0
      %5570 = vmatpush1.msra.mxu0 0.0
      %5571 = vmatprep.subr.mxu0 0.0
      %5572 = vmatpush1.msra.mxu0 0.0
      %5573 = vmatprep.subr.mxu0 0.0
      %5574 = vmatpush1.msra.mxu0 0.0
      %5575 = vmatprep.subr.mxu0 0.0
      %5576 = vmatpush1.msra.mxu0 0.0
      %5577 = vmatprep.subr.mxu0 0.0
      %5578 = vmatpush1.msra.mxu0 0.0
      %5579 = vmatprep.subr.mxu0 0.0
      %5580 = vmatpush1.msra.mxu0 0.0
      %5581 = vmatprep.subr.mxu0 0.0
      %5582 = vmatpush1.msra.mxu0 0.0
      %5583 = vmatprep.subr.mxu0 0.0
      %5584 = vmatpush1.msra.mxu0 0.0
      %5585 = vmatprep.subr.mxu0 0.0
      %5586 = vmatpush1.msra.mxu0 0.0
      %5587 = vmatprep.subr.mxu0 0.0
      %5588 = vmatpush1.msra.mxu0 0.0
      %5589 = vmatprep.subr.mxu0 0.0
      %5590 = vmatpush1.msra.mxu0 0.0
      %5591 = vmatprep.subr.mxu0 0.0
      %5592 = vmatpush1.msra.mxu0 0.0
      %5593 = vmatprep.subr.mxu0 0.0
      %5594 = vmatpush1.msra.mxu0 0.0
      %5595 = vmatprep.subr.mxu0 0.0
      %5596 = vmatpush1.msra.mxu0 0.0
      %5597 = vmatprep.subr.mxu0 0.0
      %5598 = vmatpush1.msra.mxu0 0.0
      %5599 = vmatprep.subr.mxu0 0.0
      %5600 = vmatpush1.msra.mxu0 0.0
      %5601 = vmatprep.subr.mxu0 0.0
      %5602 = vmatpush1.msra.mxu0 0.0
      %5603 = vmatprep.subr.mxu0 0.0
      %5604 = vmatpush1.msra.mxu0 0.0
      %5605 = vmatprep.mubr.f32.mxu0 0.0
      %5606 = vmatmul.mubr.f32.gmra.mrb[0].mxu0 %v5255
      %v5607 = vpop.f32.mrb[0].mxu0
      %v5608 = vadd.f32 %v5252, %v5607
      %v5609 = vpop.f32.mrb[0].mxu0
      %v5610 = vadd.f32 %v5252, %v5609
      %5611 = vdwg.mxu0
      %5612 = vmatprep.subr.mxu0 %v5150
      %5613 = vmatpush1.msra.mxu0 %v5149
      %5614 = vmatprep.subr.mxu0 %v5162
      %5615 = vmatpush1.msra.mxu0 %v5161
      %5616 = vmatprep.subr.mxu0 %v5174
      %5617 = vmatpush1.msra.mxu0 %v5173
      %5618 = vmatprep.subr.mxu0 %v5186
      %5619 = vmatpush1.msra.mxu0 %v5185
      %5620 = vmatprep.subr.mxu0 %v5198
      %5621 = vmatpush1.msra.mxu0 %v5197
      %5622 = vmatprep.subr.mxu0 %v5210
      %5623 = vmatpush1.msra.mxu0 %v5209
      %5624 = vmatprep.subr.mxu0 %v5222
      %5625 = vmatpush1.msra.mxu0 %v5221
      %5626 = vmatprep.subr.mxu0 %v5234
      %5627 = vmatpush1.msra.mxu0 %v5233
      %5628 = vmatprep.subr.mxu0 %v5246
      %5629 = vmatpush1.msra.mxu0 %v5245
      %5630 = vmatprep.subr.mxu0 0.0
      %5631 = vmatpush1.msra.mxu0 0.0
      %5632 = vmatprep.subr.mxu0 0.0
      %5633 = vmatpush1.msra.mxu0 0.0
      %5634 = vmatprep.subr.mxu0 0.0
      %5635 = vmatpush1.msra.mxu0 0.0
      %5636 = vmatprep.subr.mxu0 0.0
      %5637 = vmatpush1.msra.mxu0 0.0
      %5638 = vmatprep.subr.mxu0 0.0
      %5639 = vmatpush1.msra.mxu0 0.0
      %5640 = vmatprep.subr.mxu0 0.0
      %5641 = vmatpush1.msra.mxu0 0.0
      %5642 = vmatprep.subr.mxu0 0.0
      %5643 = vmatpush1.msra.mxu0 0.0
      %5644 = vmatprep.subr.mxu0 0.0
      %5645 = vmatpush1.msra.mxu0 0.0
      %5646 = vmatprep.subr.mxu0 0.0
      %5647 = vmatpush1.msra.mxu0 0.0
      %5648 = vmatprep.subr.mxu0 0.0
      %5649 = vmatpush1.msra.mxu0 0.0
      %5650 = vmatprep.subr.mxu0 0.0
      %5651 = vmatpush1.msra.mxu0 0.0
      %5652 = vmatprep.subr.mxu0 0.0
      %5653 = vmatpush1.msra.mxu0 0.0
      %5654 = vmatprep.subr.mxu0 0.0
      %5655 = vmatpush1.msra.mxu0 0.0
      %5656 = vmatprep.subr.mxu0 0.0
      %5657 = vmatpush1.msra.mxu0 0.0
      %5658 = vmatprep.subr.mxu0 0.0
      %5659 = vmatpush1.msra.mxu0 0.0
      %5660 = vmatprep.subr.mxu0 0.0
      %5661 = vmatpush1.msra.mxu0 0.0
      %5662 = vmatprep.subr.mxu0 0.0
      %5663 = vmatpush1.msra.mxu0 0.0
      %5664 = vmatprep.subr.mxu0 0.0
      %5665 = vmatpush1.msra.mxu0 0.0
      %5666 = vmatprep.subr.mxu0 0.0
      %5667 = vmatpush1.msra.mxu0 0.0
      %5668 = vmatprep.subr.mxu0 0.0
      %5669 = vmatpush1.msra.mxu0 0.0
      %5670 = vmatprep.subr.mxu0 0.0
      %5671 = vmatpush1.msra.mxu0 0.0
      %5672 = vmatprep.subr.mxu0 0.0
      %5673 = vmatpush1.msra.mxu0 0.0
      %5674 = vmatprep.subr.mxu0 0.0
      %5675 = vmatpush1.msra.mxu0 0.0
      %5676 = vmatprep.mubr.f32.mxu0 0.0
      %5677 = vmatmul.mubr.f32.gmra.mrb[0].mxu0 %v5255
      %v5678 = vpop.f32.mrb[0].mxu0
      %v5679 = vadd.f32 %v5252, %v5678
      %v5680 = vpop.f32.mrb[0].mxu0
      %v5681 = vadd.f32 %v5252, %v5680
      %5682 = vdwg.mxu0
      %5683 = vst [vmem:[%s197] sm:$0xff] %v5324
      %5684 = vst [vmem:[%s197 + $0x8] sm:$0xff] %v5326
      %5685 = vst [vmem:[%s197 + $0x10] sm:$0xff] %v5395
      %5686 = vst [vmem:[%s197 + $0x18] sm:$0xff] %v5397
      %5687 = vst [vmem:[%s197 + $0x20] sm:$0xff] %v5466
      %5688 = vst [vmem:[%s197 + $0x28] sm:$0xff] %v5468
      %5689 = vst [vmem:[%s197 + $0x30] sm:$0xff] %v5537
      %5690 = vst [vmem:[%s197 + $0x38] sm:$0xff] %v5539
      %5691 = vst [vmem:[%s197 + $0x40] sm:$0xff] %v5608
      %5692 = vst [vmem:[%s197 + $0x48] sm:$0xff] %v5610
      %5693 = vst [vmem:[%s197 + $0x50] sm:$0xff] %v5679
      %5694 = vst [vmem:[%s197 + $0x58] sm:$0xff] %v5681
      %p5695 = scmp.lt.s32.totalorder %s15, 1
      %s5696 = scalar_select %p5695, %s15, 1
      %s5697 = smul.addr %s5696, 12
      %s5698 = smul.addr %s5697, 8
      %s5699 = scalar_lea.vmem %s4, %s5698
      // Predicated region
      $region37: #{compressor_predict.1} parent=35 // pred_check
        %p5700 = pneg %p122
      $region38: #{compressor_predict.1} parent=35 // pred_check_branch
        %5702 = sbr.rel (%p5700) target = $region40
      $region39: #{compressor_predict.1} parent=35 // pred_region
        _
      $region40: #{compressor_predict.1} parent=35 // pred_fallthru
        _
    $region36: #{compressor_predict.1} parent=5 // pred_fallthru
      _
    %p5703 = scmp.le.s32.totalorder 2, %s10
    // Predicated region
    $region41: #{compressor_predict.1} parent=5 // pred_check
      %p5704 = pneg %p5703
    $region42: #{compressor_predict.1} parent=5 // pred_check_branch
      %5706 = sbr.rel (%p5704) target = $region44
    $region43: #{compressor_predict.1} parent=5 // pred_region
      %s5707 = ssub.s32 %s10, 2
      // Predicated region
      $region45: #{compressor_predict.1} parent=43 // pred_check
        %p5708 = pneg %p128
      $region46: #{compressor_predict.1} parent=43 // pred_check_branch
        %5710 = sbr.rel (%p5708) target = $region48
      $region47: #{compressor_predict.1} parent=43 // pred_region
        %p5711 = scmp.lt.s32.totalorder %s16, 1
        %s5712 = scalar_select %p5711, %s16, 1
        %s5713 = smul.addr %s5712, 12
        %s5714 = smul.addr %s5713, 8
        %s5715 = scalar_lea.vmem %s4, %s5714
      $region48: #{compressor_predict.1} parent=43 // pred_fallthru
        _
    $region44: #{compressor_predict.1} parent=5 // pred_fallthru
      _
  $region6: #{compressor_predict.1} parent=0 // loop_footer
    %s14 = sadd.s32 1, %s10
  $region7: #{compressor_predict.1} parent=0 // loop_footer_branch
    %9 = sbr.rel target = $region3
  $region8: #{compressor_predict.1} parent=0 // loop_exit
    _

</llo_original>
